<compile_context>
chip_gen: v7x
topology: tpu7x:2x2x1
jax: 0.10.0
libtpu: 0.0.40
codegen_flags: <defaults>
</compile_context>

<pallas_src>
import functools

import jax
import jax.numpy as jnp
from jax.experimental import pallas as pl
from jax.experimental.pallas import tpu as pltpu


def _self_attention_kernel(
    x_ref,       # (block_b, C, S)   f32   (NCHW layout, spatial flattened)
    w_qkv_ref,   # (C, 3C)           bf16  columns = [Wq.T | Wk.T | Wv.T]
    b_qkv_ref,   # (1, 3C)           f32
    w_out_ref,   # (C, C)            bf16  = Wo.T  (in, out)
    b_out_ref,   # (1, C)            f32
    o_ref,       # (block_b, C, S)   f32   (NCHW layout)
    *,
    num_heads: int,
    head_size: int,
):
    block_b, channels, seq = x_ref.shape
    m = block_b * seq
    cdt = w_qkv_ref.dtype  # MXU compute dtype (bf16)

    # NCHW tile -> (block_b, S, C) in VMEM (XLU minor transpose), merge batch rows,
    # cast once to the MXU dtype.
    x2 = jnp.swapaxes(x_ref[...], 1, 2).reshape(m, channels).astype(cdt)

    # Fused Q/K/V projection: ONE (M, C) @ (C, 3C) MXU matmul, f32 accumulation.
    qkv = (jnp.dot(x2, w_qkv_ref[...], preferred_element_type=jnp.float32)
           + b_qkv_ref[...])
    qkv = qkv.astype(cdt)

    # Split heads ONCE into a merged (num_heads * block_b) leading batch axis:
    # (M, C) -> (block_b, S, C) -> (num_heads*block_b, S, hs).
    def split_heads(t2d):
        t = t2d.reshape(block_b, seq, channels)
        return jnp.concatenate(
            [t[:, :, h * head_size:(h + 1) * head_size] for h in range(num_heads)],
            axis=0)

    qh = split_heads(qkv[:, :channels])
    kh = split_heads(qkv[:, channels:2 * channels])
    vh = split_heads(qkv[:, 2 * channels:])

    # Batched scores over all (head, batch) pairs in one einsum; stable f32 softmax.
    inv_sqrt_hs = 1.0 / (head_size ** 0.5)
    s = jnp.einsum("bqd,bkd->bqk", qh, kh,
                   preferred_element_type=jnp.float32) * inv_sqrt_hs
    s = s - jnp.max(s, axis=-1, keepdims=True)
    p = jnp.exp(s)
    p = p * pl.reciprocal(jnp.sum(p, axis=-1, keepdims=True), approx=True)  # EUP

    # Batched context: (num_heads*block_b, S, hs), f32 accumulation.
    ctx = jnp.einsum("bqk,bkd->bqd", p.astype(cdt), vh,
                     preferred_element_type=jnp.float32)

    # Merge heads back to one (M, C) tile, then ONE (M,C)@(C,C) output projection.
    ctx_full = jnp.concatenate(
        [ctx[h * block_b:(h + 1) * block_b] for h in range(num_heads)], axis=-1)
    out = (jnp.dot(ctx_full.reshape(m, channels).astype(cdt), w_out_ref[...],
                   preferred_element_type=jnp.float32) + b_out_ref[...])

    # (M, C) -> (block_b, S, C) -> (block_b, C, S): output already in NCHW layout,
    # so the wrapper only needs a free reshape (no HBM transpose pass).
    o_ref[...] = jnp.swapaxes(out.reshape(block_b, seq, channels), 1, 2
                              ).astype(o_ref.dtype)


def _pick_block_b(batch, seq):
    """Prefer grid >= 2 (both v7x TCs busy), then M = block_b*S a multiple of 256
    (v6e/v7x MXU rows), then 128 (v5e), then the largest divisor."""
    divisors = [d for d in range(1, batch + 1) if batch % d == 0]

    def score(d):
        grid = batch // d
        rows = d * seq
        return (grid >= 2, rows % 256 == 0, rows % 128 == 0, d)

    return max(divisors, key=score)


def self_attention_pallas(x_nchw, params, *, num_heads=4, block_b=None,
                          compute_dtype=jnp.bfloat16):
    """x_nchw: (B, C, H, W) float32 -> (B, C, H, W) float32."""
    B, C, H, W = x_nchw.shape
    S = H * W
    assert C % num_heads == 0
    head_size = C // num_heads
    if block_b is None:
        block_b = _pick_block_b(B, S)
    assert B % block_b == 0 and block_b >= 1

    # Free reshape only (no HBM transpose): NCHW -> (B, C, S).  The (C,S)<->(S,C)
    # transpose happens inside the kernel on the resident VMEM tile.
    x_bcs = x_nchw.reshape(B, C, S)

    # Pre-transpose PyTorch (out, in) weights and fuse Q/K/V -> (C, 3C); done once
    # in the wrapper instead of on every grid step.
    w_qkv = jnp.concatenate(
        [params["wq"].T, params["wk"].T, params["wv"].T], axis=1
    ).astype(compute_dtype)
    b_qkv = jnp.concatenate(
        [params["bq"], params["bk"], params["bv"]]
    ).reshape(1, 3 * C).astype(jnp.float32)
    w_out = params["wo"].T.astype(compute_dtype)            # (in, out)
    b_out = params["bo"].reshape(1, C).astype(jnp.float32)

    kernel = functools.partial(
        _self_attention_kernel, num_heads=num_heads, head_size=head_size)

    out_bcs = pl.pallas_call(
        kernel,
        out_shape=jax.ShapeDtypeStruct((B, C, S), jnp.float32),
        grid_spec=pltpu.PrefetchScalarGridSpec(
            num_scalar_prefetch=0,
            grid=(B // block_b,),
            in_specs=[
                pl.BlockSpec((block_b, C, S), lambda b: (b, 0, 0)),   # x (NCHW tile)
                pl.BlockSpec((C, 3 * C), lambda b: (0, 0)),           # W_qkv (resident)
                pl.BlockSpec((1, 3 * C), lambda b: (0, 0)),           # b_qkv
                pl.BlockSpec((C, C), lambda b: (0, 0)),               # Wo.T  (resident)
                pl.BlockSpec((1, C), lambda b: (0, 0)),               # bo
            ],
            out_specs=pl.BlockSpec((block_b, C, S), lambda b: (b, 0, 0)),
        ),
        compiler_params=pltpu.CompilerParams(
            dimension_semantics=("parallel",),   # batch-block axis -> megacore shardable
        ),
    )(x_bcs, w_qkv, b_qkv, w_out, b_out)

    # Free reshape back to NCHW.
    return out_bcs.reshape(B, C, H, W)


def self_attention_reference(x_nchw, params, *, num_heads=4,
                             compute_dtype=jnp.bfloat16):
    """Pure-JAX reference mirroring SelfAttention.forward, with the same MXU operand
    precision as the kernel (bf16 operands, f32 accumulation)."""
    B, C, H, W = x_nchw.shape
    S = H * W
    hs = C // num_heads
    x = jnp.transpose(x_nchw, (0, 2, 3, 1)).reshape(B, S, C)

    def lin(a, w, b):  # PyTorch Linear: y = a @ W.T + b, W is (out, in)
        return jnp.einsum("bsc,oc->bso", a.astype(compute_dtype),
                          w.astype(compute_dtype),
                          preferred_element_type=jnp.float32) + b

    q = lin(x, params["wq"], params["bq"]).reshape(B, S, num_heads, hs)
    k = lin(x, params["wk"], params["bk"]).reshape(B, S, num_heads, hs)
    v = lin(x, params["wv"], params["bv"]).reshape(B, S, num_heads, hs)

    scores = jnp.einsum("bqhd,bkhd->bhqk",
                        q.astype(compute_dtype), k.astype(compute_dtype),
                        preferred_element_type=jnp.float32) / (hs ** 0.5)
    p = jax.nn.softmax(scores, axis=-1)
    ctx = jnp.einsum("bhqk,bkhd->bqhd",
                     p.astype(compute_dtype), v.astype(compute_dtype),
                     preferred_element_type=jnp.float32).reshape(B, S, C)
    out = lin(ctx, params["wo"], params["bo"])
    return jnp.transpose(out.reshape(B, H, W, C), (0, 3, 1, 2))


def init_params(key, channels):
    """PyTorch-style Linear init: U(-1/sqrt(in), 1/sqrt(in)) for weights and biases."""
    keys = jax.random.split(key, 8)
    bound = 1.0 / (channels ** 0.5)

    def u(k, shape):
        return jax.random.uniform(k, shape, jnp.float32, -bound, bound)

    return {
        "wq": u(keys[0], (channels, channels)), "bq": u(keys[1], (channels,)),
        "wk": u(keys[2], (channels, channels)), "bk": u(keys[3], (channels,)),
        "wv": u(keys[4], (channels, channels)), "bv": u(keys[5], (channels,)),
        "wo": u(keys[6], (channels, channels)), "bo": u(keys[7], (channels,)),
    }


if __name__ == "__main__":
    # Small but lane-friendly shapes: C = 128 keeps the projection matmuls lane-dense;
    # B=4, S=64 -> auto block_b=2 (grid=2, both v7x TCs get work, M=128 MXU rows).
    # NOTE: at this toy shape the kernel is per-step-overhead dominated; tune block_b
    # and the flash-style tiling at the real target shape before micro-optimizing.
    B, C, H, W = 4, 128, 8, 8
    num_heads = 4

    key = jax.random.PRNGKey(0)
    kx, kp = jax.random.split(key)
    x = jax.random.normal(kx, (B, C, H, W), jnp.float32)
    params = init_params(kp, C)

    out = self_attention_pallas(x, params, num_heads=num_heads)
    out = jax.block_until_ready(out)

    ref = self_attention_reference(x, params, num_heads=num_heads)
    assert out.shape == (B, C, H, W)
    max_err = float(jnp.max(jnp.abs(out - ref)))
    assert jnp.allclose(out, ref, rtol=1e-2, atol=1e-2), (
        f"mismatch vs reference (max abs err {max_err})")

    print("KERNEL_OK")
</pallas_src>

<mosaic_0001>
module attributes {stable_mosaic.version = 11 : i64} {
  func.func @_self_attention_kernel(%arg0: i32, %arg1: memref<2x128x64xf32, #tpu.memory_space<vmem>>, %arg2: memref<128x384xbf16, #tpu.memory_space<vmem>>, %arg3: memref<1x384xf32, #tpu.memory_space<vmem>>, %arg4: memref<128x128xbf16, #tpu.memory_space<vmem>>, %arg5: memref<1x128xf32, #tpu.memory_space<vmem>>, %arg6: memref<2x128x64xf32, #tpu.memory_space<vmem>>) attributes {dimension_semantics = [#tpu.dimension_semantics<parallel>], iteration_bounds = array<i64: 2>, scalar_prefetch = 0 : i64, scratch_operands = 0 : i64, tpu.core_type = #tpu.core_type<tc>, window_params = [{transform_indices = @transform_0, window_bounds = array<i64: 2, 128, 64>}, {pipeline_mode = #tpu.pipeline_mode<synchronous>, transform_indices = @transform_1, window_bounds = array<i64: 128, 384>}, {pipeline_mode = #tpu.pipeline_mode<synchronous>, transform_indices = @transform_2, window_bounds = array<i64: 1, 384>}, {pipeline_mode = #tpu.pipeline_mode<synchronous>, transform_indices = @transform_3, window_bounds = array<i64: 128, 128>}, {pipeline_mode = #tpu.pipeline_mode<synchronous>, transform_indices = @transform_4, window_bounds = array<i64: 1, 128>}, {transform_indices = @transform_5, window_bounds = array<i64: 2, 128, 64>}]} {
    %c0 = arith.constant 0 : index
    %c0_0 = arith.constant 0 : index
    %c0_1 = arith.constant 0 : index
    %0 = vector.load %arg1[%c0, %c0_0, %c0_1] : memref<2x128x64xf32, #tpu.memory_space<vmem>>, vector<2x128x64xf32>
    %1 = tpu.transpose %0, [0, 2, 1] : vector<2x128x64xf32> -> vector<2x64x128xf32>
    %2 = vector.shape_cast %1 : vector<2x64x128xf32> to vector<128x128xf32>
    %3 = arith.truncf %2 : vector<128x128xf32> to vector<128x128xbf16>
    %c0_2 = arith.constant 0 : index
    %c0_3 = arith.constant 0 : index
    %4 = vector.load %arg2[%c0_2, %c0_3] : memref<128x384xbf16, #tpu.memory_space<vmem>>, vector<128x384xbf16>
    %cst = arith.constant dense<0.000000e+00> : vector<128x384xf32>
    %5 = tpu.matmul %3, %4, %cst {dimension_numbers = #tpu.dot_dimension_numbers<[1], [0], [0], [1], [0, 0, 1, 1], [], []>} : vector<128x128xbf16>, vector<128x384xbf16>, vector<128x384xf32> -> vector<128x384xf32>
    %c0_4 = arith.constant 0 : index
    %c0_5 = arith.constant 0 : index
    %6 = vector.load %arg3[%c0_4, %c0_5] : memref<1x384xf32, #tpu.memory_space<vmem>>, vector<1x384xf32>
    %7 = vector.broadcast %6 : vector<1x384xf32> to vector<128x384xf32>
    %8 = arith.addf %5, %7 : vector<128x384xf32>
    %9 = arith.truncf %8 : vector<128x384xf32> to vector<128x384xbf16>
    %10 = vector.extract_strided_slice %9 {offsets = [0, 0], sizes = [128, 128], strides = [1, 1]} : vector<128x384xbf16> to vector<128x128xbf16>
    %11 = vector.shape_cast %10 : vector<128x128xbf16> to vector<2x64x128xbf16>
    %12 = vector.extract_strided_slice %11 {offsets = [0, 0, 0], sizes = [2, 64, 32], strides = [1, 1, 1]} : vector<2x64x128xbf16> to vector<2x64x32xbf16>
    %13 = vector.extract_strided_slice %11 {offsets = [0, 0, 32], sizes = [2, 64, 32], strides = [1, 1, 1]} : vector<2x64x128xbf16> to vector<2x64x32xbf16>
    %14 = vector.extract_strided_slice %11 {offsets = [0, 0, 64], sizes = [2, 64, 32], strides = [1, 1, 1]} : vector<2x64x128xbf16> to vector<2x64x32xbf16>
    %15 = vector.extract_strided_slice %11 {offsets = [0, 0, 96], sizes = [2, 64, 32], strides = [1, 1, 1]} : vector<2x64x128xbf16> to vector<2x64x32xbf16>
    %16 = tpu.concatenate %12, %13, %14, %15 in 0 : vector<2x64x32xbf16>, vector<2x64x32xbf16>, vector<2x64x32xbf16>, vector<2x64x32xbf16> -> vector<8x64x32xbf16>
    %17 = vector.extract_strided_slice %9 {offsets = [0, 128], sizes = [128, 128], strides = [1, 1]} : vector<128x384xbf16> to vector<128x128xbf16>
    %18 = vector.shape_cast %17 : vector<128x128xbf16> to vector<2x64x128xbf16>
    %19 = vector.extract_strided_slice %18 {offsets = [0, 0, 0], sizes = [2, 64, 32], strides = [1, 1, 1]} : vector<2x64x128xbf16> to vector<2x64x32xbf16>
    %20 = vector.extract_strided_slice %18 {offsets = [0, 0, 32], sizes = [2, 64, 32], strides = [1, 1, 1]} : vector<2x64x128xbf16> to vector<2x64x32xbf16>
    %21 = vector.extract_strided_slice %18 {offsets = [0, 0, 64], sizes = [2, 64, 32], strides = [1, 1, 1]} : vector<2x64x128xbf16> to vector<2x64x32xbf16>
    %22 = vector.extract_strided_slice %18 {offsets = [0, 0, 96], sizes = [2, 64, 32], strides = [1, 1, 1]} : vector<2x64x128xbf16> to vector<2x64x32xbf16>
    %23 = tpu.concatenate %19, %20, %21, %22 in 0 : vector<2x64x32xbf16>, vector<2x64x32xbf16>, vector<2x64x32xbf16>, vector<2x64x32xbf16> -> vector<8x64x32xbf16>
    %24 = vector.extract_strided_slice %9 {offsets = [0, 256], sizes = [128, 128], strides = [1, 1]} : vector<128x384xbf16> to vector<128x128xbf16>
    %25 = vector.shape_cast %24 : vector<128x128xbf16> to vector<2x64x128xbf16>
    %26 = vector.extract_strided_slice %25 {offsets = [0, 0, 0], sizes = [2, 64, 32], strides = [1, 1, 1]} : vector<2x64x128xbf16> to vector<2x64x32xbf16>
    %27 = vector.extract_strided_slice %25 {offsets = [0, 0, 32], sizes = [2, 64, 32], strides = [1, 1, 1]} : vector<2x64x128xbf16> to vector<2x64x32xbf16>
    %28 = vector.extract_strided_slice %25 {offsets = [0, 0, 64], sizes = [2, 64, 32], strides = [1, 1, 1]} : vector<2x64x128xbf16> to vector<2x64x32xbf16>
    %29 = vector.extract_strided_slice %25 {offsets = [0, 0, 96], sizes = [2, 64, 32], strides = [1, 1, 1]} : vector<2x64x128xbf16> to vector<2x64x32xbf16>
    %30 = tpu.concatenate %26, %27, %28, %29 in 0 : vector<2x64x32xbf16>, vector<2x64x32xbf16>, vector<2x64x32xbf16>, vector<2x64x32xbf16> -> vector<8x64x32xbf16>
    "tpu.trace_start"() <{level = 10 : i32, message = "bqd,bkd->bqk"}> : () -> ()
    %cst_6 = arith.constant dense<0.000000e+00> : vector<8x64x64xf32>
    %31 = tpu.matmul %16, %23, %cst_6 {dimension_numbers = #tpu.dot_dimension_numbers<[2], [2], [1], [1], [0, 0, 0, 1, 1, 1], [0], [0]>} : vector<8x64x32xbf16>, vector<8x64x32xbf16>, vector<8x64x64xf32> -> vector<8x64x64xf32>
    "tpu.trace_stop"() : () -> ()
    %cst_7 = arith.constant 0.176776692 : f32
    %32 = vector.broadcast %cst_7 : f32 to vector<8x64x64xf32>
    %33 = arith.mulf %31, %32 : vector<8x64x64xf32>
    %cst_8 = arith.constant dense<0xFF800000> : vector<8x64xf32>
    %34 = vector.multi_reduction <maximumf>, %33, %cst_8 [2] : vector<8x64x64xf32> to vector<8x64xf32>
    %35 = vector.shape_cast %34 : vector<8x64xf32> to vector<8x64x1xf32>
    %36 = vector.broadcast %35 : vector<8x64x1xf32> to vector<8x64x64xf32>
    %37 = arith.subf %33, %36 : vector<8x64x64xf32>
    %38 = math.exp %37 : vector<8x64x64xf32>
    %cst_9 = arith.constant dense<0.000000e+00> : vector<8x64xf32>
    %39 = vector.multi_reduction <add>, %38, %cst_9 [2] : vector<8x64x64xf32> to vector<8x64xf32>
    %40 = vector.shape_cast %39 : vector<8x64xf32> to vector<8x64x1xf32>
    %41 = tpu.reciprocal %40 {approx = true} : vector<8x64x1xf32> -> vector<8x64x1xf32>
    %42 = vector.broadcast %41 : vector<8x64x1xf32> to vector<8x64x64xf32>
    %43 = arith.mulf %38, %42 : vector<8x64x64xf32>
    %44 = arith.truncf %43 : vector<8x64x64xf32> to vector<8x64x64xbf16>
    "tpu.trace_start"() <{level = 10 : i32, message = "bqk,bkd->bqd"}> : () -> ()
    %cst_10 = arith.constant dense<0.000000e+00> : vector<8x64x32xf32>
    %45 = tpu.matmul %44, %30, %cst_10 {dimension_numbers = #tpu.dot_dimension_numbers<[2], [1], [1], [2], [0, 0, 0, 1, 1, 2], [0], [0]>} : vector<8x64x64xbf16>, vector<8x64x32xbf16>, vector<8x64x32xf32> -> vector<8x64x32xf32>
    "tpu.trace_stop"() : () -> ()
    %46 = vector.extract_strided_slice %45 {offsets = [0, 0, 0], sizes = [2, 64, 32], strides = [1, 1, 1]} : vector<8x64x32xf32> to vector<2x64x32xf32>
    %47 = vector.extract_strided_slice %45 {offsets = [2, 0, 0], sizes = [2, 64, 32], strides = [1, 1, 1]} : vector<8x64x32xf32> to vector<2x64x32xf32>
    %48 = vector.extract_strided_slice %45 {offsets = [4, 0, 0], sizes = [2, 64, 32], strides = [1, 1, 1]} : vector<8x64x32xf32> to vector<2x64x32xf32>
    %49 = vector.extract_strided_slice %45 {offsets = [6, 0, 0], sizes = [2, 64, 32], strides = [1, 1, 1]} : vector<8x64x32xf32> to vector<2x64x32xf32>
    %50 = tpu.concatenate %46, %47, %48, %49 in 2 : vector<2x64x32xf32>, vector<2x64x32xf32>, vector<2x64x32xf32>, vector<2x64x32xf32> -> vector<2x64x128xf32>
    %51 = vector.shape_cast %50 : vector<2x64x128xf32> to vector<128x128xf32>
    %52 = arith.truncf %51 : vector<128x128xf32> to vector<128x128xbf16>
    %c0_11 = arith.constant 0 : index
    %c0_12 = arith.constant 0 : index
    %53 = vector.load %arg4[%c0_11, %c0_12] : memref<128x128xbf16, #tpu.memory_space<vmem>>, vector<128x128xbf16>
    %cst_13 = arith.constant dense<0.000000e+00> : vector<128x128xf32>
    %54 = tpu.matmul %52, %53, %cst_13 {dimension_numbers = #tpu.dot_dimension_numbers<[1], [0], [0], [1], [0, 0, 1, 1], [], []>} : vector<128x128xbf16>, vector<128x128xbf16>, vector<128x128xf32> -> vector<128x128xf32>
    %c0_14 = arith.constant 0 : index
    %c0_15 = arith.constant 0 : index
    %55 = vector.load %arg5[%c0_14, %c0_15] : memref<1x128xf32, #tpu.memory_space<vmem>>, vector<1x128xf32>
    %56 = vector.broadcast %55 : vector<1x128xf32> to vector<128x128xf32>
    %57 = arith.addf %54, %56 : vector<128x128xf32>
    %58 = vector.shape_cast %57 : vector<128x128xf32> to vector<2x64x128xf32>
    %59 = tpu.transpose %58, [0, 2, 1] : vector<2x64x128xf32> -> vector<2x128x64xf32>
    %c0_16 = arith.constant 0 : index
    %c0_17 = arith.constant 0 : index
    %c0_18 = arith.constant 0 : index
    %60 = vector.load %arg6[%c0_16, %c0_17, %c0_18] : memref<2x128x64xf32, #tpu.memory_space<vmem>>, vector<2x128x64xf32>
    tpu.vector_store %arg6[%c0_16, %c0_17, %c0_18], %59 {strides = array<i32>} : memref<2x128x64xf32, #tpu.memory_space<vmem>>, vector<2x128x64xf32>,
    return
  }
  func.func @transform_0(%arg0: i32) -> (i32, i32, i32) {
    %c0_i32 = arith.constant 0 : i32
    %c0_i32_0 = arith.constant 0 : i32
    %c0_i32_1 = arith.constant 0 : i32
    return %arg0, %c0_i32, %c0_i32_0 : i32, i32, i32
  }
  func.func @transform_1(%arg0: i32) -> (i32, i32) {
    %c0_i32 = arith.constant 0 : i32
    %c0_i32_0 = arith.constant 0 : i32
    %c0_i32_1 = arith.constant 0 : i32
    return %c0_i32, %c0_i32_0 : i32, i32
  }
  func.func @transform_2(%arg0: i32) -> (i32, i32) {
    %c0_i32 = arith.constant 0 : i32
    %c0_i32_0 = arith.constant 0 : i32
    %c0_i32_1 = arith.constant 0 : i32
    return %c0_i32, %c0_i32_0 : i32, i32
  }
  func.func @transform_3(%arg0: i32) -> (i32, i32) {
    %c0_i32 = arith.constant 0 : i32
    %c0_i32_0 = arith.constant 0 : i32
    %c0_i32_1 = arith.constant 0 : i32
    return %c0_i32, %c0_i32_0 : i32, i32
  }
  func.func @transform_4(%arg0: i32) -> (i32, i32) {
    %c0_i32 = arith.constant 0 : i32
    %c0_i32_0 = arith.constant 0 : i32
    %c0_i32_1 = arith.constant 0 : i32
    return %c0_i32, %c0_i32_0 : i32, i32
  }
  func.func @transform_5(%arg0: i32) -> (i32, i32, i32) {
    %c0_i32 = arith.constant 0 : i32
    %c0_i32_0 = arith.constant 0 : i32
    %c0_i32_1 = arith.constant 0 : i32
    return %arg0, %c0_i32, %c0_i32_0 : i32, i32, i32
  }
}

</mosaic_0001>

<llo_original>
// kernel: tpu_custom_call.1
$region0: #{tpu_custom_call.1}
  #allocation0 [shape = 'u32[]', space=smem, size = 0x4, offset = 0x4, fixed_abs, tag = 'smem constant byte address 0x4 - core index']
  #allocation1 [shape = 'u32[144,128]{1,0:T(1,128)}', space=vmem, size = 0x12000, scoped, tag = 'internal scratch']
  %s0 = inlined_call_operand.vmem [shape: f32[4,128,64], index: 0, kind: input, shape index: {}]
  %s1 = inlined_call_operand.vmem [shape: bf16[128,384], index: 1, kind: input, shape index: {}]
  %s2 = inlined_call_operand.vmem [shape: f32[1,384], index: 2, kind: input, shape index: {}]
  %s3 = inlined_call_operand.vmem [shape: bf16[128,128], index: 3, kind: input, shape index: {}]
  %s4 = inlined_call_operand.vmem [shape: f32[1,128], index: 4, kind: input, shape index: {}]
  %s5 = inlined_call_operand.vmem [shape: f32[4,128,64], index: 5, kind: output, shape index: {}]
  %s6 = sld [smem:[#allocation0]]
  $region53: #{tpu_custom_call.1} parent=0
    _
  %s8 = ssub.s32 1, %s6
  %s9 = scalar_select 0, %s8, %s6
  loop: start=0, step=1, limit=4
  $region2: #{tpu_custom_call.1} parent=0 // loop_pre_header
    _
  $region3: #{tpu_custom_call.1} parent=0 // loop_header
    %s11 = sphi 0, %s15
    %p12 = scmp.ge.s32.totalorder %s11, 4
    %s21 = sphi 0, %s23
    %s24 = sphi 0, %s21
    %s25 = sphi 0, %s24
    %s41 = sphi 0, %s25
    %s45 = sphi 0, %s45
    %s47 = sphi 0, %s45
    %s48 = sphi 0, %s47
    %s62 = sphi 0, %s48
    %s66 = sphi 0, %s66
    %s68 = sphi 0, %s66
    %s69 = sphi 0, %s68
    %s83 = sphi 0, %s69
    %s87 = sphi 0, %s87
    %s89 = sphi 0, %s87
    %s90 = sphi 0, %s89
    %s104 = sphi 0, %s90
    %s108 = sphi 0, %s108
    %s110 = sphi 0, %s108
    %s111 = sphi 0, %s110
    %s125 = sphi 0, %s111
    %s131 = sphi 0, %s133
    %s134 = sphi 0, %s131
    %s135 = sphi 0, %s134
    %s151 = sphi 0, %s135
  $region4: #{tpu_custom_call.1} parent=0 // loop_header_branch
    %14 = sbr.rel (%p12) target = $region8
  $region5: #{tpu_custom_call.1} parent=0 // loop_body
    %s16 = ssub.s32 %s11, 1
    %s17 = ssub.s32 %s11, 2
    %s18 = sadd.s32 %s11, 1
    %s19 = ssub.s32 %s11, %s18
    %p20 = scmp.eq.s32.totalorder %s19, 0
    %s22 = sadd.s32 %s21, 1
    %s23 = scalar_select %p20, %s21, %s22
    %p26 = pneg %p20
    %p27 = scmp.eq.s32.totalorder %s11, 1
    %p28 = por %p26, %p27
    %p29 = scmp.ne.s32.totalorder %s21, %s24
    %p30 = scmp.eq.s32.totalorder %s11, 0
    %p31 = por %p29, %p30
    %p32 = scmp.ne.s32.totalorder %s21, %s24
    %p33 = scmp.eq.s32.totalorder %s16, 1
    %p34 = por %p32, %p33
    %p35 = scmp.ne.s32.totalorder %s24, %s25
    %p36 = scmp.eq.s32.totalorder %s16, 0
    %p37 = por %p35, %p36
    %p38 = scmp.ne.s32.totalorder %s24, %s25
    %p39 = scmp.eq.s32.totalorder %s17, 1
    %p40 = por %p38, %p39
    %p42 = scmp.ne.s32.totalorder %s25, %s41
    %p43 = scmp.eq.s32.totalorder %s17, 0
    %p44 = por %p42, %p43
    %s46 = sadd.s32 %s45, 1
    %p49 = scmp.eq.s32.totalorder %s11, 1
    %p50 = scmp.ne.s32.totalorder %s45, %s47
    %p51 = scmp.eq.s32.totalorder %s11, 0
    %p52 = por %p50, %p51
    %p53 = scmp.ne.s32.totalorder %s45, %s47
    %p54 = scmp.eq.s32.totalorder %s16, 1
    %p55 = por %p53, %p54
    %p56 = scmp.ne.s32.totalorder %s47, %s48
    %p57 = scmp.eq.s32.totalorder %s16, 0
    %p58 = por %p56, %p57
    %p59 = scmp.ne.s32.totalorder %s47, %s48
    %p60 = scmp.eq.s32.totalorder %s17, 1
    %p61 = por %p59, %p60
    %p63 = scmp.ne.s32.totalorder %s48, %s62
    %p64 = scmp.eq.s32.totalorder %s17, 0
    %p65 = por %p63, %p64
    %s67 = sadd.s32 %s66, 1
    %p70 = scmp.eq.s32.totalorder %s11, 1
    %p71 = scmp.ne.s32.totalorder %s66, %s68
    %p72 = scmp.eq.s32.totalorder %s11, 0
    %p73 = por %p71, %p72
    %p74 = scmp.ne.s32.totalorder %s66, %s68
    %p75 = scmp.eq.s32.totalorder %s16, 1
    %p76 = por %p74, %p75
    %p77 = scmp.ne.s32.totalorder %s68, %s69
    %p78 = scmp.eq.s32.totalorder %s16, 0
    %p79 = por %p77, %p78
    %p80 = scmp.ne.s32.totalorder %s68, %s69
    %p81 = scmp.eq.s32.totalorder %s17, 1
    %p82 = por %p80, %p81
    %p84 = scmp.ne.s32.totalorder %s69, %s83
    %p85 = scmp.eq.s32.totalorder %s17, 0
    %p86 = por %p84, %p85
    %s88 = sadd.s32 %s87, 1
    %p91 = scmp.eq.s32.totalorder %s11, 1
    %p92 = scmp.ne.s32.totalorder %s87, %s89
    %p93 = scmp.eq.s32.totalorder %s11, 0
    %p94 = por %p92, %p93
    %p95 = scmp.ne.s32.totalorder %s87, %s89
    %p96 = scmp.eq.s32.totalorder %s16, 1
    %p97 = por %p95, %p96
    %p98 = scmp.ne.s32.totalorder %s89, %s90
    %p99 = scmp.eq.s32.totalorder %s16, 0
    %p100 = por %p98, %p99
    %p101 = scmp.ne.s32.totalorder %s89, %s90
    %p102 = scmp.eq.s32.totalorder %s17, 1
    %p103 = por %p101, %p102
    %p105 = scmp.ne.s32.totalorder %s90, %s104
    %p106 = scmp.eq.s32.totalorder %s17, 0
    %p107 = por %p105, %p106
    %s109 = sadd.s32 %s108, 1
    %p112 = scmp.eq.s32.totalorder %s11, 1
    %p113 = scmp.ne.s32.totalorder %s108, %s110
    %p114 = scmp.eq.s32.totalorder %s11, 0
    %p115 = por %p113, %p114
    %p116 = scmp.ne.s32.totalorder %s108, %s110
    %p117 = scmp.eq.s32.totalorder %s16, 1
    %p118 = por %p116, %p117
    %p119 = scmp.ne.s32.totalorder %s110, %s111
    %p120 = scmp.eq.s32.totalorder %s16, 0
    %p121 = por %p119, %p120
    %p122 = scmp.ne.s32.totalorder %s110, %s111
    %p123 = scmp.eq.s32.totalorder %s17, 1
    %p124 = por %p122, %p123
    %p126 = scmp.ne.s32.totalorder %s111, %s125
    %p127 = scmp.eq.s32.totalorder %s17, 0
    %p128 = por %p126, %p127
    %s129 = ssub.s32 %s11, %s18
    %p130 = scmp.eq.s32.totalorder %s129, 0
    %s132 = sadd.s32 %s131, 1
    %s133 = scalar_select %p130, %s131, %s132
    %p136 = pneg %p130
    %p137 = scmp.eq.s32.totalorder %s11, 1
    %p138 = por %p136, %p137
    %p139 = scmp.ne.s32.totalorder %s131, %s134
    %p140 = scmp.eq.s32.totalorder %s11, 0
    %p141 = por %p139, %p140
    %p142 = scmp.ne.s32.totalorder %s131, %s134
    %p143 = scmp.eq.s32.totalorder %s16, 1
    %p144 = por %p142, %p143
    %p145 = scmp.ne.s32.totalorder %s134, %s135
    %p146 = scmp.eq.s32.totalorder %s16, 0
    %p147 = por %p145, %p146
    %p148 = scmp.ne.s32.totalorder %s134, %s135
    %p149 = scmp.eq.s32.totalorder %s17, 1
    %p150 = por %p148, %p149
    %p152 = scmp.ne.s32.totalorder %s135, %s151
    %p153 = scmp.eq.s32.totalorder %s17, 0
    %p154 = por %p152, %p153
    %p155 = scmp.le.s32.totalorder 1, %s11
    %p156 = scmp.lt.s32.totalorder %s11, 3
    %p157 = pnand %p155, %p156
    %p158 = pneg %p157
    // Predicated region
    $region9: #{tpu_custom_call.1} parent=5 // pred_check
      _
    $region10: #{tpu_custom_call.1} parent=5 // pred_check_branch
      %160 = sbr.rel (%p157) target = $region12
    $region11: #{tpu_custom_call.1} parent=5 // pred_region
      %s161 = ssub.s32 %s11, 1
      // Predicated region
      $region13: #{tpu_custom_call.1} parent=11 // pred_check
        %p162 = pneg %p58
      $region14: #{tpu_custom_call.1} parent=11 // pred_check_branch
        %164 = sbr.rel (%p162) target = $region16
      $region15: #{tpu_custom_call.1} parent=11 // pred_region
        _
      $region16: #{tpu_custom_call.1} parent=11 // pred_fallthru
        _
      // Predicated region
      $region17: #{tpu_custom_call.1} parent=11 // pred_check
        %p165 = pneg %p79
      $region18: #{tpu_custom_call.1} parent=11 // pred_check_branch
        %167 = sbr.rel (%p165) target = $region20
      $region19: #{tpu_custom_call.1} parent=11 // pred_region
        _
      $region20: #{tpu_custom_call.1} parent=11 // pred_fallthru
        _
      // Predicated region
      $region21: #{tpu_custom_call.1} parent=11 // pred_check
        %p168 = pneg %p100
      $region22: #{tpu_custom_call.1} parent=11 // pred_check_branch
        %170 = sbr.rel (%p168) target = $region24
      $region23: #{tpu_custom_call.1} parent=11 // pred_region
        _
      $region24: #{tpu_custom_call.1} parent=11 // pred_fallthru
        _
      // Predicated region
      $region25: #{tpu_custom_call.1} parent=11 // pred_check
        %p171 = pneg %p121
      $region26: #{tpu_custom_call.1} parent=11 // pred_check_branch
        %173 = sbr.rel (%p171) target = $region28
      $region27: #{tpu_custom_call.1} parent=11 // pred_region
        _
      $region28: #{tpu_custom_call.1} parent=11 // pred_fallthru
        _
    $region12: #{tpu_custom_call.1} parent=5 // pred_fallthru
      _
    %p174 = scmp.lt.s32.totalorder %s11, 2
    // Predicated region
    $region29: #{tpu_custom_call.1} parent=5 // pred_check
      %p175 = pneg %p174
    $region30: #{tpu_custom_call.1} parent=5 // pred_check_branch
      %177 = sbr.rel (%p175) target = $region32
    $region31: #{tpu_custom_call.1} parent=5 // pred_region
      // Predicated region
      $region33: #{tpu_custom_call.1} parent=31 // pred_check
        %p178 = pneg %p31
      $region34: #{tpu_custom_call.1} parent=31 // pred_check_branch
        %180 = sbr.rel (%p178) target = $region36
      $region35: #{tpu_custom_call.1} parent=31 // pred_region
        %s181 = smul.u32 2, %s11
        %p182 = scmp.lt.s32.totalorder %s181, 3
        %s183 = scalar_select %p182, %s181, 3
        %s184 = smul.addr %s183, 16
        %s185 = smul.addr %s184, 8
        %s186 = scalar_lea.vmem %s0, %s185
        %s187 = smul.u32 2, %s11
      $region36: #{tpu_custom_call.1} parent=31 // pred_fallthru
        _
    $region32: #{tpu_custom_call.1} parent=5 // pred_fallthru
      _
    %p188 = scmp.le.s32.totalorder 1, %s11
    %p189 = scmp.lt.s32.totalorder %s11, 3
    %p190 = pnand %p188, %p189
    %p191 = pneg %p190
    // Predicated region
    $region37: #{tpu_custom_call.1} parent=5 // pred_check
      _
    $region38: #{tpu_custom_call.1} parent=5 // pred_check_branch
      %193 = sbr.rel (%p190) target = $region40
    $region39: #{tpu_custom_call.1} parent=5 // pred_region
      %s194 = ssub.s32 %s11, 1
      %s195 = smul.u32 2, %s16
      %p196 = scmp.lt.s32.totalorder %s195, 3
      %s197 = scalar_select %p196, %s195, 3
      %s198 = smul.addr %s197, 16
      %s199 = smul.addr %s198, 8
      %s200 = scalar_lea.vmem %s0, %s199
      %p201 = pneg %p37
      %p202 = pneg %p34
      %p203 = pneg %p58
      %p204 = pneg %p55
      %p205 = pneg %p79
      %p206 = pneg %p76
      %p207 = pneg %p100
      %p208 = pneg %p97
      %p209 = pneg %p121
      %p210 = pneg %p118
      %p211 = pneg %p147
      %p212 = pneg %p144
      %s213 = smul.u32 2, %s16
      %p214 = scmp.lt.s32.totalorder %s213, 3
      %s215 = scalar_select %p214, %s213, 3
      %s216 = smul.addr %s215, 16
      %s217 = smul.addr %s216, 8
      %s218 = scalar_lea.vmem %s5, %s217
      %s219 = smul.u32 2, %s16
      %p220 = scmp.lt.s32.totalorder %s219, 3
      %s221 = scalar_select %p220, %s219, 3
      %s222 = smul.addr %s221, 16
      %s223 = smul.addr %s222, 8
      %s224 = scalar_lea.vmem %s0, %s223
      %s225 = smul.u32 2, %s16
      %s226 = smul.u32 2, %s16
      %p227 = scmp.lt.s32.totalorder %s226, 3
      %s228 = scalar_select %p227, %s226, 3
      %s229 = smul.addr %s228, 16
      %s230 = smul.addr %s229, 8
      %s231 = scalar_lea.vmem %s5, %s230
      %s232 = smul.u32 2, %s16
      %v234 = vld [vmem:[%s224] sm:$0xff]
      %v235 = vld [vmem:[%s224 + $0x8] sm:$0xff]
      %v236 = vld [vmem:[%s224 + $0x10] sm:$0xff]
      %v237 = vld [vmem:[%s224 + $0x18] sm:$0xff]
      %v238 = vld [vmem:[%s224 + $0x20] sm:$0xff]
      %v239 = vld [vmem:[%s224 + $0x28] sm:$0xff]
      %v240 = vld [vmem:[%s224 + $0x30] sm:$0xff]
      %v241 = vld [vmem:[%s224 + $0x38] sm:$0xff]
      %v242 = vld [vmem:[%s224 + $0x40] sm:$0xff]
      %v243 = vld [vmem:[%s224 + $0x48] sm:$0xff]
      %v244 = vld [vmem:[%s224 + $0x50] sm:$0xff]
      %v245 = vld [vmem:[%s224 + $0x58] sm:$0xff]
      %v246 = vld [vmem:[%s224 + $0x60] sm:$0xff]
      %v247 = vld [vmem:[%s224 + $0x68] sm:$0xff]
      %v248 = vld [vmem:[%s224 + $0x70] sm:$0xff]
      %v249 = vld [vmem:[%s224 + $0x78] sm:$0xff]
      %v250 = vld [vmem:[%s224 + $0x80] sm:$0xff]
      %v251 = vld [vmem:[%s224 + $0x88] sm:$0xff]
      %v252 = vld [vmem:[%s224 + $0x90] sm:$0xff]
      %v253 = vld [vmem:[%s224 + $0x98] sm:$0xff]
      %v254 = vld [vmem:[%s224 + $0xa0] sm:$0xff]
      %v255 = vld [vmem:[%s224 + $0xa8] sm:$0xff]
      %v256 = vld [vmem:[%s224 + $0xb0] sm:$0xff]
      %v257 = vld [vmem:[%s224 + $0xb8] sm:$0xff]
      %v258 = vld [vmem:[%s224 + $0xc0] sm:$0xff]
      %v259 = vld [vmem:[%s224 + $0xc8] sm:$0xff]
      %v260 = vld [vmem:[%s224 + $0xd0] sm:$0xff]
      %v261 = vld [vmem:[%s224 + $0xd8] sm:$0xff]
      %v262 = vld [vmem:[%s224 + $0xe0] sm:$0xff]
      %v263 = vld [vmem:[%s224 + $0xe8] sm:$0xff]
      %v264 = vld [vmem:[%s224 + $0xf0] sm:$0xff]
      %v265 = vld [vmem:[%s224 + $0xf8] sm:$0xff]
      %266 = vxpose.xlu0.b32.start [1/16] %v234, 128
      %267 = vxpose.xlu0.b32.cont [2/16] %v235, 128
      %268 = vxpose.xlu0.b32.cont [3/16] %v236, 128
      %269 = vxpose.xlu0.b32.cont [4/16] %v237, 128
      %270 = vxpose.xlu0.b32.cont [5/16] %v238, 128
      %271 = vxpose.xlu0.b32.cont [6/16] %v239, 128
      %272 = vxpose.xlu0.b32.cont [7/16] %v240, 128
      %273 = vxpose.xlu0.b32.cont [8/16] %v241, 128
      %274 = vxpose.xlu0.b32.cont [9/16] %v242, 128
      %275 = vxpose.xlu0.b32.cont [10/16] %v243, 128
      %276 = vxpose.xlu0.b32.cont [11/16] %v244, 128
      %277 = vxpose.xlu0.b32.cont [12/16] %v245, 128
      %278 = vxpose.xlu0.b32.cont [13/16] %v246, 128
      %279 = vxpose.xlu0.b32.cont [14/16] %v247, 128
      %280 = vxpose.xlu0.b32.cont [15/16] %v248, 128
      %281 = vxpose.xlu0.b32.end [16/16] %v249, 128
      %v282 = vpop.trf.xlu0
      %v283 = vpop.trf.xlu0
      %v284 = vpop.trf.xlu0
      %v285 = vpop.trf.xlu0
      %v286 = vpop.trf.xlu0
      %v287 = vpop.trf.xlu0
      %v288 = vpop.trf.xlu0
      %v289 = vpop.trf.xlu0
      %v290 = vpop.trf.xlu0
      %v291 = vpop.trf.xlu0
      %v292 = vpop.trf.xlu0
      %v293 = vpop.trf.xlu0
      %v294 = vpop.trf.xlu0
      %v295 = vpop.trf.xlu0
      %v296 = vpop.trf.xlu0
      %v297 = vpop.trf.xlu0
      %298 = vxpose.xlu0.b32.start [1/16] %v250, 128
      %299 = vxpose.xlu0.b32.cont [2/16] %v251, 128
      %300 = vxpose.xlu0.b32.cont [3/16] %v252, 128
      %301 = vxpose.xlu0.b32.cont [4/16] %v253, 128
      %302 = vxpose.xlu0.b32.cont [5/16] %v254, 128
      %303 = vxpose.xlu0.b32.cont [6/16] %v255, 128
      %304 = vxpose.xlu0.b32.cont [7/16] %v256, 128
      %305 = vxpose.xlu0.b32.cont [8/16] %v257, 128
      %306 = vxpose.xlu0.b32.cont [9/16] %v258, 128
      %307 = vxpose.xlu0.b32.cont [10/16] %v259, 128
      %308 = vxpose.xlu0.b32.cont [11/16] %v260, 128
      %309 = vxpose.xlu0.b32.cont [12/16] %v261, 128
      %310 = vxpose.xlu0.b32.cont [13/16] %v262, 128
      %311 = vxpose.xlu0.b32.cont [14/16] %v263, 128
      %312 = vxpose.xlu0.b32.cont [15/16] %v264, 128
      %313 = vxpose.xlu0.b32.end [16/16] %v265, 128
      %v314 = vpop.trf.xlu0
      %v315 = vpop.trf.xlu0
      %v316 = vpop.trf.xlu0
      %v317 = vpop.trf.xlu0
      %v318 = vpop.trf.xlu0
      %v319 = vpop.trf.xlu0
      %v320 = vpop.trf.xlu0
      %v321 = vpop.trf.xlu0
      %v322 = vpop.trf.xlu0
      %v323 = vpop.trf.xlu0
      %v324 = vpop.trf.xlu0
      %v325 = vpop.trf.xlu0
      %v326 = vpop.trf.xlu0
      %v327 = vpop.trf.xlu0
      %v328 = vpop.trf.xlu0
      %v329 = vpop.trf.xlu0
      %v330 = vpack.c.bf16 %v283, %v282
      %v331 = vpack.c.bf16 %v285, %v284
      %v332 = vpack.c.bf16 %v287, %v286
      %v333 = vpack.c.bf16 %v289, %v288
      %v334 = vpack.c.bf16 %v315, %v314
      %v335 = vpack.c.bf16 %v317, %v316
      %v336 = vpack.c.bf16 %v319, %v318
      %v337 = vpack.c.bf16 %v321, %v320
      %v338 = vld [vmem:[%s1] sm:$0xff]
      %v339 = vld [vmem:[%s1 + $0x8] sm:$0xf]
      %v340 = vld [vmem:[%s1 + $0xc] sm:$0xff]
      %v341 = vld [vmem:[%s1 + $0x14] sm:$0xf]
      %v342 = vld [vmem:[%s1 + $0x18] sm:$0xff]
      %v343 = vld [vmem:[%s1 + $0x20] sm:$0xf]
      %v344 = vld [vmem:[%s1 + $0x24] sm:$0xff]
      %v345 = vld [vmem:[%s1 + $0x2c] sm:$0xf]
      %v346 = vld [vmem:[%s1 + $0x30] sm:$0xff]
      %v347 = vld [vmem:[%s1 + $0x38] sm:$0xf]
      %v348 = vld [vmem:[%s1 + $0x3c] sm:$0xff]
      %v349 = vld [vmem:[%s1 + $0x44] sm:$0xf]
      %v350 = vld [vmem:[%s1 + $0x48] sm:$0xff]
      %v351 = vld [vmem:[%s1 + $0x50] sm:$0xf]
      %v352 = vld [vmem:[%s1 + $0x54] sm:$0xff]
      %v353 = vld [vmem:[%s1 + $0x5c] sm:$0xf]
      %v354 = vld [vmem:[%s1 + $0x60] sm:$0xff]
      %v355 = vld [vmem:[%s1 + $0x68] sm:$0xf]
      %v356 = vld [vmem:[%s1 + $0x6c] sm:$0xff]
      %v357 = vld [vmem:[%s1 + $0x74] sm:$0xf]
      %v358 = vld [vmem:[%s1 + $0x78] sm:$0xff]
      %v359 = vld [vmem:[%s1 + $0x80] sm:$0xf]
      %v360 = vld [vmem:[%s1 + $0x84] sm:$0xff]
      %v361 = vld [vmem:[%s1 + $0x8c] sm:$0xf]
      %v362 = vld [vmem:[%s1 + $0x90] sm:$0xff]
      %v363 = vld [vmem:[%s1 + $0x98] sm:$0xf]
      %v364 = vld [vmem:[%s1 + $0x9c] sm:$0xff]
      %v365 = vld [vmem:[%s1 + $0xa4] sm:$0xf]
      %v366 = vld [vmem:[%s1 + $0xa8] sm:$0xff]
      %v367 = vld [vmem:[%s1 + $0xb0] sm:$0xf]
      %v368 = vld [vmem:[%s1 + $0xb4] sm:$0xff]
      %v369 = vld [vmem:[%s1 + $0xbc] sm:$0xf]
      %v370 = vld [vmem:[%s2] sm:$0x7]
      %v372 = vlaneseq
      %v373 = vshrl.u32 %v372, 7
      %v374 = vsub.s32 0, %v373
      %v375 = vrot.slane %v370, %v374
      %v376 = vlaneseq
      %v377 = vshrl.u32 %v376, 7
      %v378 = vsub.s32 1, %v377
      %v379 = vrot.slane %v370, %v378
      %v380 = vlaneseq
      %v381 = vshrl.u32 %v380, 7
      %v382 = vsub.s32 2, %v381
      %v383 = vrot.slane %v370, %v382
      %v419 = vunpack.c.l.b16 %v338
      %v420 = vunpack.c.h.b16 %v338
      %v421 = vunpack.c.l.b16 %v339
      %v422 = vunpack.c.l.b16 %v340
      %v423 = vunpack.c.h.b16 %v340
      %v424 = vunpack.c.l.b16 %v341
      %v425 = vunpack.c.l.b16 %v342
      %v426 = vunpack.c.h.b16 %v342
      %v427 = vunpack.c.l.b16 %v343
      %v428 = vunpack.c.l.b16 %v344
      %v429 = vunpack.c.h.b16 %v344
      %v430 = vunpack.c.l.b16 %v345
      %v431 = vunpack.c.l.b16 %v346
      %v432 = vunpack.c.h.b16 %v346
      %v433 = vunpack.c.l.b16 %v347
      %v434 = vunpack.c.l.b16 %v348
      %v435 = vunpack.c.h.b16 %v348
      %v436 = vunpack.c.l.b16 %v349
      %v437 = vunpack.c.l.b16 %v350
      %v438 = vunpack.c.h.b16 %v350
      %v439 = vunpack.c.l.b16 %v351
      %v440 = vunpack.c.l.b16 %v352
      %v441 = vunpack.c.h.b16 %v352
      %v442 = vunpack.c.l.b16 %v353
      %v443 = vunpack.c.l.b16 %v354
      %v444 = vunpack.c.h.b16 %v354
      %v445 = vunpack.c.l.b16 %v355
      %v446 = vunpack.c.l.b16 %v356
      %v447 = vunpack.c.h.b16 %v356
      %v448 = vunpack.c.l.b16 %v357
      %v449 = vunpack.c.l.b16 %v358
      %v450 = vunpack.c.h.b16 %v358
      %v451 = vunpack.c.l.b16 %v359
      %v452 = vunpack.c.l.b16 %v360
      %v453 = vunpack.c.h.b16 %v360
      %v454 = vunpack.c.l.b16 %v361
      %v455 = vunpack.c.l.b16 %v362
      %v456 = vunpack.c.h.b16 %v362
      %v457 = vunpack.c.l.b16 %v363
      %v458 = vunpack.c.l.b16 %v364
      %v459 = vunpack.c.h.b16 %v364
      %v460 = vunpack.c.l.b16 %v365
      %v461 = vunpack.c.l.b16 %v366
      %v462 = vunpack.c.h.b16 %v366
      %v463 = vunpack.c.l.b16 %v367
      %v464 = vunpack.c.l.b16 %v368
      %v465 = vunpack.c.h.b16 %v368
      %v466 = vunpack.c.l.b16 %v369
      %v467 = vpack.c.b16 %v422, %v419
      %v468 = vpack.c.b16 %v423, %v420
      %v469 = vpack.c.b16 %v424, %v421
      %v470 = vpack.c.b16 %v428, %v425
      %v471 = vpack.c.b16 %v429, %v426
      %v472 = vpack.c.b16 %v430, %v427
      %v473 = vpack.c.b16 %v434, %v431
      %v474 = vpack.c.b16 %v435, %v432
      %v475 = vpack.c.b16 %v436, %v433
      %v476 = vpack.c.b16 %v440, %v437
      %v477 = vpack.c.b16 %v441, %v438
      %v478 = vpack.c.b16 %v442, %v439
      %v479 = vpack.c.b16 %v446, %v443
      %v480 = vpack.c.b16 %v447, %v444
      %v481 = vpack.c.b16 %v448, %v445
      %v482 = vpack.c.b16 %v452, %v449
      %v483 = vpack.c.b16 %v453, %v450
      %v484 = vpack.c.b16 %v454, %v451
      %v485 = vpack.c.b16 %v458, %v455
      %v486 = vpack.c.b16 %v459, %v456
      %v487 = vpack.c.b16 %v460, %v457
      %v488 = vpack.c.b16 %v464, %v461
      %v489 = vpack.c.b16 %v465, %v462
      %v490 = vpack.c.b16 %v466, %v463
      %515 = vmatprep.subr.bf16.mxu0 %v468
      %516 = vmatpush1.bf16.msra.mxu0 %v467
      %517 = vmatprep.subr.bf16.mxu0 %v471
      %518 = vmatpush1.bf16.msra.mxu0 %v470
      %519 = vmatprep.subr.bf16.mxu0 %v474
      %520 = vmatpush1.bf16.msra.mxu0 %v473
      %521 = vmatprep.subr.bf16.mxu0 %v477
      %522 = vmatpush1.bf16.msra.mxu0 %v476
      %523 = vmatprep.subr.bf16.mxu0 %v480
      %524 = vmatpush1.bf16.msra.mxu0 %v479
      %525 = vmatprep.subr.bf16.mxu0 %v483
      %526 = vmatpush1.bf16.msra.mxu0 %v482
      %527 = vmatprep.subr.bf16.mxu0 %v486
      %528 = vmatpush1.bf16.msra.mxu0 %v485
      %529 = vmatprep.subr.bf16.mxu0 %v489
      %530 = vmatpush1.bf16.msra.mxu0 %v488
      %531 = vmatprep.subr.bf16.mxu0 0
      %532 = vmatpush1.bf16.msra.mxu0 0
      %533 = vmatprep.subr.bf16.mxu0 0
      %534 = vmatpush1.bf16.msra.mxu0 0
      %535 = vmatprep.subr.bf16.mxu0 0
      %536 = vmatpush1.bf16.msra.mxu0 0
      %537 = vmatprep.subr.bf16.mxu0 0
      %538 = vmatpush1.bf16.msra.mxu0 0
      %539 = vmatprep.subr.bf16.mxu0 0
      %540 = vmatpush1.bf16.msra.mxu0 0
      %541 = vmatprep.subr.bf16.mxu0 0
      %542 = vmatpush1.bf16.msra.mxu0 0
      %543 = vmatprep.subr.bf16.mxu0 0
      %544 = vmatpush1.bf16.msra.mxu0 0
      %545 = vmatprep.subr.bf16.mxu0 0
      %546 = vmatpush1.bf16.msra.mxu0 0
      %547 = vmatprep.mubr.bf16.mxu0 0
      %548 = vmatmul.mubr.bf16.gmra.mrb[0].mxu0 %v330
      %v549 = vpop.f32.mrb[0].mxu0
      %v550 = vadd.f32 %v375, %v549
      %v551 = vpop.f32.mrb[0].mxu0
      %v552 = vadd.f32 %v379, %v551
      %v553 = vpop.f32.mrb[0].mxu0
      %v554 = vadd.f32 %v375, %v553
      %v555 = vpop.f32.mrb[0].mxu0
      %v556 = vadd.f32 %v379, %v555
      %557 = vmatprep.mubr.bf16.mxu0 0
      %558 = vmatmul.mubr.bf16.gmra.mrb[0].mxu0 %v331
      %v559 = vpop.f32.mrb[0].mxu0
      %v560 = vadd.f32 %v375, %v559
      %v561 = vpop.f32.mrb[0].mxu0
      %v562 = vadd.f32 %v379, %v561
      %v563 = vpop.f32.mrb[0].mxu0
      %v564 = vadd.f32 %v375, %v563
      %v565 = vpop.f32.mrb[0].mxu0
      %v566 = vadd.f32 %v379, %v565
      %567 = vmatprep.mubr.bf16.mxu0 0
      %568 = vmatmul.mubr.bf16.gmra.mrb[0].mxu0 %v332
      %v569 = vpop.f32.mrb[0].mxu0
      %v570 = vadd.f32 %v375, %v569
      %v571 = vpop.f32.mrb[0].mxu0
      %v572 = vadd.f32 %v379, %v571
      %v573 = vpop.f32.mrb[0].mxu0
      %v574 = vadd.f32 %v375, %v573
      %v575 = vpop.f32.mrb[0].mxu0
      %v576 = vadd.f32 %v379, %v575
      %577 = vmatprep.mubr.bf16.mxu0 0
      %578 = vmatmul.mubr.bf16.gmra.mrb[0].mxu0 %v333
      %v579 = vpop.f32.mrb[0].mxu0
      %v580 = vadd.f32 %v375, %v579
      %v581 = vpop.f32.mrb[0].mxu0
      %v582 = vadd.f32 %v379, %v581
      %v583 = vpop.f32.mrb[0].mxu0
      %v584 = vadd.f32 %v375, %v583
      %v585 = vpop.f32.mrb[0].mxu0
      %v586 = vadd.f32 %v379, %v585
      %587 = vmatprep.mubr.bf16.mxu0 0
      %588 = vmatmul.mubr.bf16.gmra.mrb[0].mxu0 %v334
      %v589 = vpop.f32.mrb[0].mxu0
      %v590 = vadd.f32 %v375, %v589
      %v591 = vpop.f32.mrb[0].mxu0
      %v592 = vadd.f32 %v379, %v591
      %v593 = vpop.f32.mrb[0].mxu0
      %v594 = vadd.f32 %v375, %v593
      %v595 = vpop.f32.mrb[0].mxu0
      %v596 = vadd.f32 %v379, %v595
      %597 = vmatprep.mubr.bf16.mxu0 0
      %598 = vmatmul.mubr.bf16.gmra.mrb[0].mxu0 %v335
      %v599 = vpop.f32.mrb[0].mxu0
      %v600 = vadd.f32 %v375, %v599
      %v601 = vpop.f32.mrb[0].mxu0
      %v602 = vadd.f32 %v379, %v601
      %v603 = vpop.f32.mrb[0].mxu0
      %v604 = vadd.f32 %v375, %v603
      %v605 = vpop.f32.mrb[0].mxu0
      %v606 = vadd.f32 %v379, %v605
      %607 = vmatprep.mubr.bf16.mxu0 0
      %608 = vmatmul.mubr.bf16.gmra.mrb[0].mxu0 %v336
      %v609 = vpop.f32.mrb[0].mxu0
      %v610 = vadd.f32 %v375, %v609
      %v611 = vpop.f32.mrb[0].mxu0
      %v612 = vadd.f32 %v379, %v611
      %v613 = vpop.f32.mrb[0].mxu0
      %v614 = vadd.f32 %v375, %v613
      %v615 = vpop.f32.mrb[0].mxu0
      %v616 = vadd.f32 %v379, %v615
      %617 = vmatprep.mubr.bf16.mxu0 0
      %618 = vmatmul.mubr.bf16.gmra.mrb[0].mxu0 %v337
      %v619 = vpop.f32.mrb[0].mxu0
      %v620 = vadd.f32 %v375, %v619
      %v621 = vpop.f32.mrb[0].mxu0
      %v622 = vadd.f32 %v379, %v621
      %v623 = vpop.f32.mrb[0].mxu0
      %v624 = vadd.f32 %v375, %v623
      %v625 = vpop.f32.mrb[0].mxu0
      %v626 = vadd.f32 %v379, %v625
      %627 = vdwg.mxu0
      %628 = vmatprep.subr.bf16.mxu0 0
      %629 = vmatpush1.bf16.msra.mxu0 %v469
      %630 = vmatprep.subr.bf16.mxu0 0
      %631 = vmatpush1.bf16.msra.mxu0 %v472
      %632 = vmatprep.subr.bf16.mxu0 0
      %633 = vmatpush1.bf16.msra.mxu0 %v475
      %634 = vmatprep.subr.bf16.mxu0 0
      %635 = vmatpush1.bf16.msra.mxu0 %v478
      %636 = vmatprep.subr.bf16.mxu0 0
      %637 = vmatpush1.bf16.msra.mxu0 %v481
      %638 = vmatprep.subr.bf16.mxu0 0
      %639 = vmatpush1.bf16.msra.mxu0 %v484
      %640 = vmatprep.subr.bf16.mxu0 0
      %641 = vmatpush1.bf16.msra.mxu0 %v487
      %642 = vmatprep.subr.bf16.mxu0 0
      %643 = vmatpush1.bf16.msra.mxu0 %v490
      %644 = vmatprep.subr.bf16.mxu0 0
      %645 = vmatpush1.bf16.msra.mxu0 0
      %646 = vmatprep.subr.bf16.mxu0 0
      %647 = vmatpush1.bf16.msra.mxu0 0
      %648 = vmatprep.subr.bf16.mxu0 0
      %649 = vmatpush1.bf16.msra.mxu0 0
      %650 = vmatprep.subr.bf16.mxu0 0
      %651 = vmatpush1.bf16.msra.mxu0 0
      %652 = vmatprep.subr.bf16.mxu0 0
      %653 = vmatpush1.bf16.msra.mxu0 0
      %654 = vmatprep.subr.bf16.mxu0 0
      %655 = vmatpush1.bf16.msra.mxu0 0
      %656 = vmatprep.subr.bf16.mxu0 0
      %657 = vmatpush1.bf16.msra.mxu0 0
      %658 = vmatprep.subr.bf16.mxu0 0
      %659 = vmatpush1.bf16.msra.mxu0 0
      %660 = vmatprep.mubr.bf16.mxu0 0
      %661 = vmatmul.mubr.bf16.gmra.mrb[0].mxu0 %v330
      %v662 = vpop.f32.mrb[0].mxu0
      %v663 = vadd.f32 %v383, %v662
      %v664 = vpop.f32.mrb[0].mxu0
      %v665 = vpop.f32.mrb[0].mxu0
      %v666 = vadd.f32 %v383, %v665
      %v667 = vpop.f32.mrb[0].mxu0
      %668 = vmatprep.mubr.bf16.mxu0 0
      %669 = vmatmul.mubr.bf16.gmra.mrb[0].mxu0 %v331
      %v670 = vpop.f32.mrb[0].mxu0
      %v671 = vadd.f32 %v383, %v670
      %v672 = vpop.f32.mrb[0].mxu0
      %v673 = vpop.f32.mrb[0].mxu0
      %v674 = vadd.f32 %v383, %v673
      %v675 = vpop.f32.mrb[0].mxu0
      %676 = vmatprep.mubr.bf16.mxu0 0
      %677 = vmatmul.mubr.bf16.gmra.mrb[0].mxu0 %v332
      %v678 = vpop.f32.mrb[0].mxu0
      %v679 = vadd.f32 %v383, %v678
      %v680 = vpop.f32.mrb[0].mxu0
      %v681 = vpop.f32.mrb[0].mxu0
      %v682 = vadd.f32 %v383, %v681
      %v683 = vpop.f32.mrb[0].mxu0
      %684 = vmatprep.mubr.bf16.mxu0 0
      %685 = vmatmul.mubr.bf16.gmra.mrb[0].mxu0 %v333
      %v686 = vpop.f32.mrb[0].mxu0
      %v687 = vadd.f32 %v383, %v686
      %v688 = vpop.f32.mrb[0].mxu0
      %v689 = vpop.f32.mrb[0].mxu0
      %v690 = vadd.f32 %v383, %v689
      %v691 = vpop.f32.mrb[0].mxu0
      %692 = vmatprep.mubr.bf16.mxu0 0
      %693 = vmatmul.mubr.bf16.gmra.mrb[0].mxu0 %v334
      %v694 = vpop.f32.mrb[0].mxu0
      %v695 = vadd.f32 %v383, %v694
      %v696 = vpop.f32.mrb[0].mxu0
      %v697 = vpop.f32.mrb[0].mxu0
      %v698 = vadd.f32 %v383, %v697
      %v699 = vpop.f32.mrb[0].mxu0
      %700 = vmatprep.mubr.bf16.mxu0 0
      %701 = vmatmul.mubr.bf16.gmra.mrb[0].mxu0 %v335
      %v702 = vpop.f32.mrb[0].mxu0
      %v703 = vadd.f32 %v383, %v702
      %v704 = vpop.f32.mrb[0].mxu0
      %v705 = vpop.f32.mrb[0].mxu0
      %v706 = vadd.f32 %v383, %v705
      %v707 = vpop.f32.mrb[0].mxu0
      %708 = vmatprep.mubr.bf16.mxu0 0
      %709 = vmatmul.mubr.bf16.gmra.mrb[0].mxu0 %v336
      %v710 = vpop.f32.mrb[0].mxu0
      %v711 = vadd.f32 %v383, %v710
      %v712 = vpop.f32.mrb[0].mxu0
      %v713 = vpop.f32.mrb[0].mxu0
      %v714 = vadd.f32 %v383, %v713
      %v715 = vpop.f32.mrb[0].mxu0
      %716 = vmatprep.mubr.bf16.mxu0 0
      %717 = vmatmul.mubr.bf16.gmra.mrb[0].mxu0 %v337
      %v718 = vpop.f32.mrb[0].mxu0
      %v719 = vadd.f32 %v383, %v718
      %v720 = vpop.f32.mrb[0].mxu0
      %v721 = vpop.f32.mrb[0].mxu0
      %v722 = vadd.f32 %v383, %v721
      %v723 = vpop.f32.mrb[0].mxu0
      %724 = vdwg.mxu0
      %v725 = vpack.c.bf16 %v554, %v550
      %v726 = vpack.c.bf16 %v556, %v552
      %v727 = vpack.c.bf16 %v666, %v663
      %v728 = vpack.c.bf16 %v564, %v560
      %v729 = vpack.c.bf16 %v566, %v562
      %v730 = vpack.c.bf16 %v674, %v671
      %v731 = vpack.c.bf16 %v574, %v570
      %v732 = vpack.c.bf16 %v576, %v572
      %v733 = vpack.c.bf16 %v682, %v679
      %v734 = vpack.c.bf16 %v584, %v580
      %v735 = vpack.c.bf16 %v586, %v582
      %v736 = vpack.c.bf16 %v690, %v687
      %v737 = vpack.c.bf16 %v594, %v590
      %v738 = vpack.c.bf16 %v596, %v592
      %v739 = vpack.c.bf16 %v698, %v695
      %v740 = vpack.c.bf16 %v604, %v600
      %v741 = vpack.c.bf16 %v606, %v602
      %v742 = vpack.c.bf16 %v706, %v703
      %v743 = vpack.c.bf16 %v614, %v610
      %v744 = vpack.c.bf16 %v616, %v612
      %v745 = vpack.c.bf16 %v714, %v711
      %v746 = vpack.c.bf16 %v624, %v620
      %v747 = vpack.c.bf16 %v626, %v622
      %v748 = vpack.c.bf16 %v722, %v719
      %757 = vrot.lane.b32.xlu0 %v725, 96
      %v758 = vpop.permute.xlu0 %757
      %759 = vrot.lane.b32.xlu0 %v728, 96
      %v760 = vpop.permute.xlu0 %759
      %761 = vrot.lane.b32.xlu0 %v731, 96
      %v762 = vpop.permute.xlu0 %761
      %763 = vrot.lane.b32.xlu0 %v734, 96
      %v764 = vpop.permute.xlu0 %763
      %765 = vrot.lane.b32.xlu0 %v737, 96
      %v766 = vpop.permute.xlu0 %765
      %767 = vrot.lane.b32.xlu0 %v740, 96
      %v768 = vpop.permute.xlu0 %767
      %769 = vrot.lane.b32.xlu0 %v743, 96
      %v770 = vpop.permute.xlu0 %769
      %771 = vrot.lane.b32.xlu0 %v746, 96
      %v772 = vpop.permute.xlu0 %771
      %773 = vrot.lane.b32.xlu0 %v725, 64
      %v774 = vpop.permute.xlu0 %773
      %775 = vrot.lane.b32.xlu0 %v728, 64
      %v776 = vpop.permute.xlu0 %775
      %777 = vrot.lane.b32.xlu0 %v731, 64
      %v778 = vpop.permute.xlu0 %777
      %779 = vrot.lane.b32.xlu0 %v734, 64
      %v780 = vpop.permute.xlu0 %779
      %781 = vrot.lane.b32.xlu0 %v737, 64
      %v782 = vpop.permute.xlu0 %781
      %783 = vrot.lane.b32.xlu0 %v740, 64
      %v784 = vpop.permute.xlu0 %783
      %785 = vrot.lane.b32.xlu0 %v743, 64
      %v786 = vpop.permute.xlu0 %785
      %787 = vrot.lane.b32.xlu0 %v746, 64
      %v788 = vpop.permute.xlu0 %787
      %789 = vrot.lane.b32.xlu0 %v725, 32
      %v790 = vpop.permute.xlu0 %789
      %791 = vrot.lane.b32.xlu0 %v728, 32
      %v792 = vpop.permute.xlu0 %791
      %793 = vrot.lane.b32.xlu0 %v731, 32
      %v794 = vpop.permute.xlu0 %793
      %795 = vrot.lane.b32.xlu0 %v734, 32
      %v796 = vpop.permute.xlu0 %795
      %797 = vrot.lane.b32.xlu0 %v737, 32
      %v798 = vpop.permute.xlu0 %797
      %799 = vrot.lane.b32.xlu0 %v740, 32
      %v800 = vpop.permute.xlu0 %799
      %801 = vrot.lane.b32.xlu0 %v743, 32
      %v802 = vpop.permute.xlu0 %801
      %803 = vrot.lane.b32.xlu0 %v746, 32
      %v804 = vpop.permute.xlu0 %803
      %813 = vrot.lane.b32.xlu0 %v726, 96
      %v814 = vpop.permute.xlu0 %813
      %815 = vrot.lane.b32.xlu0 %v729, 96
      %v816 = vpop.permute.xlu0 %815
      %817 = vrot.lane.b32.xlu0 %v732, 96
      %v818 = vpop.permute.xlu0 %817
      %819 = vrot.lane.b32.xlu0 %v735, 96
      %v820 = vpop.permute.xlu0 %819
      %821 = vrot.lane.b32.xlu0 %v738, 96
      %v822 = vpop.permute.xlu0 %821
      %823 = vrot.lane.b32.xlu0 %v741, 96
      %v824 = vpop.permute.xlu0 %823
      %825 = vrot.lane.b32.xlu0 %v744, 96
      %v826 = vpop.permute.xlu0 %825
      %827 = vrot.lane.b32.xlu0 %v747, 96
      %v828 = vpop.permute.xlu0 %827
      %829 = vrot.lane.b32.xlu0 %v726, 64
      %v830 = vpop.permute.xlu0 %829
      %831 = vrot.lane.b32.xlu0 %v729, 64
      %v832 = vpop.permute.xlu0 %831
      %833 = vrot.lane.b32.xlu0 %v732, 64
      %v834 = vpop.permute.xlu0 %833
      %835 = vrot.lane.b32.xlu0 %v735, 64
      %v836 = vpop.permute.xlu0 %835
      %837 = vrot.lane.b32.xlu0 %v738, 64
      %v838 = vpop.permute.xlu0 %837
      %839 = vrot.lane.b32.xlu0 %v741, 64
      %v840 = vpop.permute.xlu0 %839
      %841 = vrot.lane.b32.xlu0 %v744, 64
      %v842 = vpop.permute.xlu0 %841
      %843 = vrot.lane.b32.xlu0 %v747, 64
      %v844 = vpop.permute.xlu0 %843
      %845 = vrot.lane.b32.xlu0 %v726, 32
      %v846 = vpop.permute.xlu0 %845
      %847 = vrot.lane.b32.xlu0 %v729, 32
      %v848 = vpop.permute.xlu0 %847
      %849 = vrot.lane.b32.xlu0 %v732, 32
      %v850 = vpop.permute.xlu0 %849
      %851 = vrot.lane.b32.xlu0 %v735, 32
      %v852 = vpop.permute.xlu0 %851
      %853 = vrot.lane.b32.xlu0 %v738, 32
      %v854 = vpop.permute.xlu0 %853
      %855 = vrot.lane.b32.xlu0 %v741, 32
      %v856 = vpop.permute.xlu0 %855
      %857 = vrot.lane.b32.xlu0 %v744, 32
      %v858 = vpop.permute.xlu0 %857
      %859 = vrot.lane.b32.xlu0 %v747, 32
      %v860 = vpop.permute.xlu0 %859
      %869 = vrot.lane.b32.xlu0 %v727, 96
      %v870 = vpop.permute.xlu0 %869
      %871 = vrot.lane.b32.xlu0 %v730, 96
      %v872 = vpop.permute.xlu0 %871
      %873 = vrot.lane.b32.xlu0 %v733, 96
      %v874 = vpop.permute.xlu0 %873
      %875 = vrot.lane.b32.xlu0 %v736, 96
      %v876 = vpop.permute.xlu0 %875
      %877 = vrot.lane.b32.xlu0 %v739, 96
      %v878 = vpop.permute.xlu0 %877
      %879 = vrot.lane.b32.xlu0 %v742, 96
      %v880 = vpop.permute.xlu0 %879
      %881 = vrot.lane.b32.xlu0 %v745, 96
      %v882 = vpop.permute.xlu0 %881
      %883 = vrot.lane.b32.xlu0 %v748, 96
      %v884 = vpop.permute.xlu0 %883
      %893 = vrot.lane.b32.xlu0 %v727, 64
      %v894 = vpop.permute.xlu0 %893
      %895 = vrot.lane.b32.xlu0 %v730, 64
      %v896 = vpop.permute.xlu0 %895
      %897 = vrot.lane.b32.xlu0 %v733, 64
      %v898 = vpop.permute.xlu0 %897
      %899 = vrot.lane.b32.xlu0 %v736, 64
      %v900 = vpop.permute.xlu0 %899
      %901 = vrot.lane.b32.xlu0 %v739, 64
      %v902 = vpop.permute.xlu0 %901
      %903 = vrot.lane.b32.xlu0 %v742, 64
      %v904 = vpop.permute.xlu0 %903
      %905 = vrot.lane.b32.xlu0 %v745, 64
      %v906 = vpop.permute.xlu0 %905
      %907 = vrot.lane.b32.xlu0 %v748, 64
      %v908 = vpop.permute.xlu0 %907
      %917 = vrot.lane.b32.xlu0 %v727, 32
      %v918 = vpop.permute.xlu0 %917
      %919 = vrot.lane.b32.xlu0 %v730, 32
      %v920 = vpop.permute.xlu0 %919
      %921 = vrot.lane.b32.xlu0 %v733, 32
      %v922 = vpop.permute.xlu0 %921
      %923 = vrot.lane.b32.xlu0 %v736, 32
      %v924 = vpop.permute.xlu0 %923
      %925 = vrot.lane.b32.xlu0 %v739, 32
      %v926 = vpop.permute.xlu0 %925
      %927 = vrot.lane.b32.xlu0 %v742, 32
      %v928 = vpop.permute.xlu0 %927
      %929 = vrot.lane.b32.xlu0 %v745, 32
      %v930 = vpop.permute.xlu0 %929
      %931 = vrot.lane.b32.xlu0 %v748, 32
      %v932 = vpop.permute.xlu0 %931
      %vm941 = vcmask 261120
      %v943 = vsel %vm941, %v725, 0
      %v946 = vsel %vm941, %v728, 0
      %v949 = vsel %vm941, %v731, 0
      %v952 = vsel %vm941, %v734, 0
      %v955 = vsel %vm941, %v726, 0
      %v958 = vsel %vm941, %v729, 0
      %v961 = vsel %vm941, %v732, 0
      %v964 = vsel %vm941, %v735, 0
      %966 = vmatprep.subr.bf16.mxu0 0
      %967 = vmatpush1.bf16.xpose.msra.mxu0 %v955
      %968 = vmatprep.subr.bf16.mxu0 0
      %969 = vmatpush1.bf16.xpose.msra.mxu0 %v958
      %970 = vmatprep.subr.bf16.mxu0 0
      %971 = vmatpush1.bf16.xpose.msra.mxu0 %v961
      %972 = vmatprep.subr.bf16.mxu0 0
      %973 = vmatpush1.bf16.xpose.msra.mxu0 %v964
      %974 = vmatprep.subr.bf16.mxu0 0
      %975 = vmatpush1.bf16.xpose.msra.mxu0 0
      %976 = vmatprep.subr.bf16.mxu0 0
      %977 = vmatpush1.bf16.xpose.msra.mxu0 0
      %978 = vmatprep.subr.bf16.mxu0 0
      %979 = vmatpush1.bf16.xpose.msra.mxu0 0
      %980 = vmatprep.subr.bf16.mxu0 0
      %981 = vmatpush1.bf16.xpose.msra.mxu0 0
      %982 = vmatprep.subr.bf16.mxu0 0
      %983 = vmatpush1.bf16.xpose.msra.mxu0 0
      %984 = vmatprep.subr.bf16.mxu0 0
      %985 = vmatpush1.bf16.xpose.msra.mxu0 0
      %986 = vmatprep.subr.bf16.mxu0 0
      %987 = vmatpush1.bf16.xpose.msra.mxu0 0
      %988 = vmatprep.subr.bf16.mxu0 0
      %989 = vmatpush1.bf16.xpose.msra.mxu0 0
      %990 = vmatprep.subr.bf16.mxu0 0
      %991 = vmatpush1.bf16.xpose.msra.mxu0 0
      %992 = vmatprep.subr.bf16.mxu0 0
      %993 = vmatpush1.bf16.xpose.msra.mxu0 0
      %994 = vmatprep.subr.bf16.mxu0 0
      %995 = vmatpush1.bf16.xpose.msra.mxu0 0
      %996 = vmatprep.subr.bf16.mxu0 0
      %997 = vmatpush1.bf16.xpose.msra.mxu0 0
      %998 = vmatprep.mubr.bf16.mxu0 0
      %999 = vmatmul.mubr.bf16.gmra.mrb[0].mxu0 %v943
      %v1000 = vpop.f32.mrb[0].mxu0
      %v1001 = vadd.f32 0.0, %v1000
      %v1002 = vpop.f32.mrb[0].mxu0
      %v1003 = vpop.f32.mrb[0].mxu0
      %v1004 = vadd.f32 0.0, %v1003
      %v1005 = vpop.f32.mrb[0].mxu0
      %1006 = vmatprep.mubr.bf16.mxu0 0
      %1007 = vmatmul.mubr.bf16.gmra.mrb[0].mxu0 %v946
      %v1008 = vpop.f32.mrb[0].mxu0
      %v1009 = vadd.f32 0.0, %v1008
      %v1010 = vpop.f32.mrb[0].mxu0
      %v1011 = vpop.f32.mrb[0].mxu0
      %v1012 = vadd.f32 0.0, %v1011
      %v1013 = vpop.f32.mrb[0].mxu0
      %1014 = vmatprep.mubr.bf16.mxu0 0
      %1015 = vmatmul.mubr.bf16.gmra.mrb[0].mxu0 %v949
      %v1016 = vpop.f32.mrb[0].mxu0
      %v1017 = vadd.f32 0.0, %v1016
      %v1018 = vpop.f32.mrb[0].mxu0
      %v1019 = vpop.f32.mrb[0].mxu0
      %v1020 = vadd.f32 0.0, %v1019
      %v1021 = vpop.f32.mrb[0].mxu0
      %1022 = vmatprep.mubr.bf16.mxu0 0
      %1023 = vmatmul.mubr.bf16.gmra.mrb[0].mxu0 %v952
      %v1024 = vpop.f32.mrb[0].mxu0
      %v1025 = vadd.f32 0.0, %v1024
      %v1026 = vpop.f32.mrb[0].mxu0
      %v1027 = vpop.f32.mrb[0].mxu0
      %v1028 = vadd.f32 0.0, %v1027
      %v1029 = vpop.f32.mrb[0].mxu0
      %1030 = vdwg.mxu0
      %v1032 = vsel %vm941, %v737, 0
      %v1035 = vsel %vm941, %v740, 0
      %v1038 = vsel %vm941, %v743, 0
      %v1041 = vsel %vm941, %v746, 0
      %v1044 = vsel %vm941, %v738, 0
      %v1047 = vsel %vm941, %v741, 0
      %v1050 = vsel %vm941, %v744, 0
      %v1053 = vsel %vm941, %v747, 0
      %1055 = vmatprep.subr.bf16.mxu0 0
      %1056 = vmatpush1.bf16.xpose.msra.mxu0 %v1044
      %1057 = vmatprep.subr.bf16.mxu0 0
      %1058 = vmatpush1.bf16.xpose.msra.mxu0 %v1047
      %1059 = vmatprep.subr.bf16.mxu0 0
      %1060 = vmatpush1.bf16.xpose.msra.mxu0 %v1050
      %1061 = vmatprep.subr.bf16.mxu0 0
      %1062 = vmatpush1.bf16.xpose.msra.mxu0 %v1053
      %1063 = vmatprep.subr.bf16.mxu0 0
      %1064 = vmatpush1.bf16.xpose.msra.mxu0 0
      %1065 = vmatprep.subr.bf16.mxu0 0
      %1066 = vmatpush1.bf16.xpose.msra.mxu0 0
      %1067 = vmatprep.subr.bf16.mxu0 0
      %1068 = vmatpush1.bf16.xpose.msra.mxu0 0
      %1069 = vmatprep.subr.bf16.mxu0 0
      %1070 = vmatpush1.bf16.xpose.msra.mxu0 0
      %1071 = vmatprep.subr.bf16.mxu0 0
      %1072 = vmatpush1.bf16.xpose.msra.mxu0 0
      %1073 = vmatprep.subr.bf16.mxu0 0
      %1074 = vmatpush1.bf16.xpose.msra.mxu0 0
      %1075 = vmatprep.subr.bf16.mxu0 0
      %1076 = vmatpush1.bf16.xpose.msra.mxu0 0
      %1077 = vmatprep.subr.bf16.mxu0 0
      %1078 = vmatpush1.bf16.xpose.msra.mxu0 0
      %1079 = vmatprep.subr.bf16.mxu0 0
      %1080 = vmatpush1.bf16.xpose.msra.mxu0 0
      %1081 = vmatprep.subr.bf16.mxu0 0
      %1082 = vmatpush1.bf16.xpose.msra.mxu0 0
      %1083 = vmatprep.subr.bf16.mxu0 0
      %1084 = vmatpush1.bf16.xpose.msra.mxu0 0
      %1085 = vmatprep.subr.bf16.mxu0 0
      %1086 = vmatpush1.bf16.xpose.msra.mxu0 0
      %1087 = vmatprep.mubr.bf16.mxu0 0
      %1088 = vmatmul.mubr.bf16.gmra.mrb[0].mxu0 %v1032
      %v1089 = vpop.f32.mrb[0].mxu0
      %v1090 = vadd.f32 0.0, %v1089
      %v1091 = vpop.f32.mrb[0].mxu0
      %v1092 = vpop.f32.mrb[0].mxu0
      %v1093 = vadd.f32 0.0, %v1092
      %v1094 = vpop.f32.mrb[0].mxu0
      %1095 = vmatprep.mubr.bf16.mxu0 0
      %1096 = vmatmul.mubr.bf16.gmra.mrb[0].mxu0 %v1035
      %v1097 = vpop.f32.mrb[0].mxu0
      %v1098 = vadd.f32 0.0, %v1097
      %v1099 = vpop.f32.mrb[0].mxu0
      %v1100 = vpop.f32.mrb[0].mxu0
      %v1101 = vadd.f32 0.0, %v1100
      %v1102 = vpop.f32.mrb[0].mxu0
      %1103 = vmatprep.mubr.bf16.mxu0 0
      %1104 = vmatmul.mubr.bf16.gmra.mrb[0].mxu0 %v1038
      %v1105 = vpop.f32.mrb[0].mxu0
      %v1106 = vadd.f32 0.0, %v1105
      %v1107 = vpop.f32.mrb[0].mxu0
      %v1108 = vpop.f32.mrb[0].mxu0
      %v1109 = vadd.f32 0.0, %v1108
      %v1110 = vpop.f32.mrb[0].mxu0
      %1111 = vmatprep.mubr.bf16.mxu0 0
      %1112 = vmatmul.mubr.bf16.gmra.mrb[0].mxu0 %v1041
      %v1113 = vpop.f32.mrb[0].mxu0
      %v1114 = vadd.f32 0.0, %v1113
      %v1115 = vpop.f32.mrb[0].mxu0
      %v1116 = vpop.f32.mrb[0].mxu0
      %v1117 = vadd.f32 0.0, %v1116
      %v1118 = vpop.f32.mrb[0].mxu0
      %1119 = vdwg.mxu0
      %v1121 = vsel %vm941, %v758, 0
      %v1124 = vsel %vm941, %v760, 0
      %v1127 = vsel %vm941, %v762, 0
      %v1130 = vsel %vm941, %v764, 0
      %v1133 = vsel %vm941, %v814, 0
      %v1136 = vsel %vm941, %v816, 0
      %v1139 = vsel %vm941, %v818, 0
      %v1142 = vsel %vm941, %v820, 0
      %1144 = vmatprep.subr.bf16.mxu0 0
      %1145 = vmatpush1.bf16.xpose.msra.mxu0 %v1133
      %1146 = vmatprep.subr.bf16.mxu0 0
      %1147 = vmatpush1.bf16.xpose.msra.mxu0 %v1136
      %1148 = vmatprep.subr.bf16.mxu0 0
      %1149 = vmatpush1.bf16.xpose.msra.mxu0 %v1139
      %1150 = vmatprep.subr.bf16.mxu0 0
      %1151 = vmatpush1.bf16.xpose.msra.mxu0 %v1142
      %1152 = vmatprep.subr.bf16.mxu0 0
      %1153 = vmatpush1.bf16.xpose.msra.mxu0 0
      %1154 = vmatprep.subr.bf16.mxu0 0
      %1155 = vmatpush1.bf16.xpose.msra.mxu0 0
      %1156 = vmatprep.subr.bf16.mxu0 0
      %1157 = vmatpush1.bf16.xpose.msra.mxu0 0
      %1158 = vmatprep.subr.bf16.mxu0 0
      %1159 = vmatpush1.bf16.xpose.msra.mxu0 0
      %1160 = vmatprep.subr.bf16.mxu0 0
      %1161 = vmatpush1.bf16.xpose.msra.mxu0 0
      %1162 = vmatprep.subr.bf16.mxu0 0
      %1163 = vmatpush1.bf16.xpose.msra.mxu0 0
      %1164 = vmatprep.subr.bf16.mxu0 0
      %1165 = vmatpush1.bf16.xpose.msra.mxu0 0
      %1166 = vmatprep.subr.bf16.mxu0 0
      %1167 = vmatpush1.bf16.xpose.msra.mxu0 0
      %1168 = vmatprep.subr.bf16.mxu0 0
      %1169 = vmatpush1.bf16.xpose.msra.mxu0 0
      %1170 = vmatprep.subr.bf16.mxu0 0
      %1171 = vmatpush1.bf16.xpose.msra.mxu0 0
      %1172 = vmatprep.subr.bf16.mxu0 0
      %1173 = vmatpush1.bf16.xpose.msra.mxu0 0
      %1174 = vmatprep.subr.bf16.mxu0 0
      %1175 = vmatpush1.bf16.xpose.msra.mxu0 0
      %1176 = vmatprep.mubr.bf16.mxu0 0
      %1177 = vmatmul.mubr.bf16.gmra.mrb[0].mxu0 %v1121
      %v1178 = vpop.f32.mrb[0].mxu0
      %v1179 = vadd.f32 0.0, %v1178
      %v1180 = vpop.f32.mrb[0].mxu0
      %v1181 = vpop.f32.mrb[0].mxu0
      %v1182 = vadd.f32 0.0, %v1181
      %v1183 = vpop.f32.mrb[0].mxu0
      %1184 = vmatprep.mubr.bf16.mxu0 0
      %1185 = vmatmul.mubr.bf16.gmra.mrb[0].mxu0 %v1124
      %v1186 = vpop.f32.mrb[0].mxu0
      %v1187 = vadd.f32 0.0, %v1186
      %v1188 = vpop.f32.mrb[0].mxu0
      %v1189 = vpop.f32.mrb[0].mxu0
      %v1190 = vadd.f32 0.0, %v1189
      %v1191 = vpop.f32.mrb[0].mxu0
      %1192 = vmatprep.mubr.bf16.mxu0 0
      %1193 = vmatmul.mubr.bf16.gmra.mrb[0].mxu0 %v1127
      %v1194 = vpop.f32.mrb[0].mxu0
      %v1195 = vadd.f32 0.0, %v1194
      %v1196 = vpop.f32.mrb[0].mxu0
      %v1197 = vpop.f32.mrb[0].mxu0
      %v1198 = vadd.f32 0.0, %v1197
      %v1199 = vpop.f32.mrb[0].mxu0
      %1200 = vmatprep.mubr.bf16.mxu0 0
      %1201 = vmatmul.mubr.bf16.gmra.mrb[0].mxu0 %v1130
      %v1202 = vpop.f32.mrb[0].mxu0
      %v1203 = vadd.f32 0.0, %v1202
      %v1204 = vpop.f32.mrb[0].mxu0
      %v1205 = vpop.f32.mrb[0].mxu0
      %v1206 = vadd.f32 0.0, %v1205
      %v1207 = vpop.f32.mrb[0].mxu0
      %1208 = vdwg.mxu0
      %v1210 = vsel %vm941, %v766, 0
      %v1213 = vsel %vm941, %v768, 0
      %v1216 = vsel %vm941, %v770, 0
      %v1219 = vsel %vm941, %v772, 0
      %v1222 = vsel %vm941, %v822, 0
      %v1225 = vsel %vm941, %v824, 0
      %v1228 = vsel %vm941, %v826, 0
      %v1231 = vsel %vm941, %v828, 0
      %1233 = vmatprep.subr.bf16.mxu0 0
      %1234 = vmatpush1.bf16.xpose.msra.mxu0 %v1222
      %1235 = vmatprep.subr.bf16.mxu0 0
      %1236 = vmatpush1.bf16.xpose.msra.mxu0 %v1225
      %1237 = vmatprep.subr.bf16.mxu0 0
      %1238 = vmatpush1.bf16.xpose.msra.mxu0 %v1228
      %1239 = vmatprep.subr.bf16.mxu0 0
      %1240 = vmatpush1.bf16.xpose.msra.mxu0 %v1231
      %1241 = vmatprep.subr.bf16.mxu0 0
      %1242 = vmatpush1.bf16.xpose.msra.mxu0 0
      %1243 = vmatprep.subr.bf16.mxu0 0
      %1244 = vmatpush1.bf16.xpose.msra.mxu0 0
      %1245 = vmatprep.subr.bf16.mxu0 0
      %1246 = vmatpush1.bf16.xpose.msra.mxu0 0
      %1247 = vmatprep.subr.bf16.mxu0 0
      %1248 = vmatpush1.bf16.xpose.msra.mxu0 0
      %1249 = vmatprep.subr.bf16.mxu0 0
      %1250 = vmatpush1.bf16.xpose.msra.mxu0 0
      %1251 = vmatprep.subr.bf16.mxu0 0
      %1252 = vmatpush1.bf16.xpose.msra.mxu0 0
      %1253 = vmatprep.subr.bf16.mxu0 0
      %1254 = vmatpush1.bf16.xpose.msra.mxu0 0
      %1255 = vmatprep.subr.bf16.mxu0 0
      %1256 = vmatpush1.bf16.xpose.msra.mxu0 0
      %1257 = vmatprep.subr.bf16.mxu0 0
      %1258 = vmatpush1.bf16.xpose.msra.mxu0 0
      %1259 = vmatprep.subr.bf16.mxu0 0
      %1260 = vmatpush1.bf16.xpose.msra.mxu0 0
      %1261 = vmatprep.subr.bf16.mxu0 0
      %1262 = vmatpush1.bf16.xpose.msra.mxu0 0
      %1263 = vmatprep.subr.bf16.mxu0 0
      %1264 = vmatpush1.bf16.xpose.msra.mxu0 0
      %1265 = vmatprep.mubr.bf16.mxu0 0
      %1266 = vmatmul.mubr.bf16.gmra.mrb[0].mxu0 %v1210
      %v1267 = vpop.f32.mrb[0].mxu0
      %v1268 = vadd.f32 0.0, %v1267
      %v1269 = vpop.f32.mrb[0].mxu0
      %v1270 = vpop.f32.mrb[0].mxu0
      %v1271 = vadd.f32 0.0, %v1270
      %v1272 = vpop.f32.mrb[0].mxu0
      %1273 = vmatprep.mubr.bf16.mxu0 0
      %1274 = vmatmul.mubr.bf16.gmra.mrb[0].mxu0 %v1213
      %v1275 = vpop.f32.mrb[0].mxu0
      %v1276 = vadd.f32 0.0, %v1275
      %v1277 = vpop.f32.mrb[0].mxu0
      %v1278 = vpop.f32.mrb[0].mxu0
      %v1279 = vadd.f32 0.0, %v1278
      %v1280 = vpop.f32.mrb[0].mxu0
      %1281 = vmatprep.mubr.bf16.mxu0 0
      %1282 = vmatmul.mubr.bf16.gmra.mrb[0].mxu0 %v1216
      %v1283 = vpop.f32.mrb[0].mxu0
      %v1284 = vadd.f32 0.0, %v1283
      %v1285 = vpop.f32.mrb[0].mxu0
      %v1286 = vpop.f32.mrb[0].mxu0
      %v1287 = vadd.f32 0.0, %v1286
      %v1288 = vpop.f32.mrb[0].mxu0
      %1289 = vmatprep.mubr.bf16.mxu0 0
      %1290 = vmatmul.mubr.bf16.gmra.mrb[0].mxu0 %v1219
      %v1291 = vpop.f32.mrb[0].mxu0
      %v1292 = vadd.f32 0.0, %v1291
      %v1293 = vpop.f32.mrb[0].mxu0
      %v1294 = vpop.f32.mrb[0].mxu0
      %v1295 = vadd.f32 0.0, %v1294
      %v1296 = vpop.f32.mrb[0].mxu0
      %1297 = vdwg.mxu0
      %v1299 = vsel %vm941, %v774, 0
      %v1302 = vsel %vm941, %v776, 0
      %v1305 = vsel %vm941, %v778, 0
      %v1308 = vsel %vm941, %v780, 0
      %v1311 = vsel %vm941, %v830, 0
      %v1314 = vsel %vm941, %v832, 0
      %v1317 = vsel %vm941, %v834, 0
      %v1320 = vsel %vm941, %v836, 0
      %1322 = vmatprep.subr.bf16.mxu0 0
      %1323 = vmatpush1.bf16.xpose.msra.mxu0 %v1311
      %1324 = vmatprep.subr.bf16.mxu0 0
      %1325 = vmatpush1.bf16.xpose.msra.mxu0 %v1314
      %1326 = vmatprep.subr.bf16.mxu0 0
      %1327 = vmatpush1.bf16.xpose.msra.mxu0 %v1317
      %1328 = vmatprep.subr.bf16.mxu0 0
      %1329 = vmatpush1.bf16.xpose.msra.mxu0 %v1320
      %1330 = vmatprep.subr.bf16.mxu0 0
      %1331 = vmatpush1.bf16.xpose.msra.mxu0 0
      %1332 = vmatprep.subr.bf16.mxu0 0
      %1333 = vmatpush1.bf16.xpose.msra.mxu0 0
      %1334 = vmatprep.subr.bf16.mxu0 0
      %1335 = vmatpush1.bf16.xpose.msra.mxu0 0
      %1336 = vmatprep.subr.bf16.mxu0 0
      %1337 = vmatpush1.bf16.xpose.msra.mxu0 0
      %1338 = vmatprep.subr.bf16.mxu0 0
      %1339 = vmatpush1.bf16.xpose.msra.mxu0 0
      %1340 = vmatprep.subr.bf16.mxu0 0
      %1341 = vmatpush1.bf16.xpose.msra.mxu0 0
      %1342 = vmatprep.subr.bf16.mxu0 0
      %1343 = vmatpush1.bf16.xpose.msra.mxu0 0
      %1344 = vmatprep.subr.bf16.mxu0 0
      %1345 = vmatpush1.bf16.xpose.msra.mxu0 0
      %1346 = vmatprep.subr.bf16.mxu0 0
      %1347 = vmatpush1.bf16.xpose.msra.mxu0 0
      %1348 = vmatprep.subr.bf16.mxu0 0
      %1349 = vmatpush1.bf16.xpose.msra.mxu0 0
      %1350 = vmatprep.subr.bf16.mxu0 0
      %1351 = vmatpush1.bf16.xpose.msra.mxu0 0
      %1352 = vmatprep.subr.bf16.mxu0 0
      %1353 = vmatpush1.bf16.xpose.msra.mxu0 0
      %1354 = vmatprep.mubr.bf16.mxu0 0
      %1355 = vmatmul.mubr.bf16.gmra.mrb[0].mxu0 %v1299
      %v1356 = vpop.f32.mrb[0].mxu0
      %v1357 = vadd.f32 0.0, %v1356
      %v1358 = vpop.f32.mrb[0].mxu0
      %v1359 = vpop.f32.mrb[0].mxu0
      %v1360 = vadd.f32 0.0, %v1359
      %v1361 = vpop.f32.mrb[0].mxu0
      %1362 = vmatprep.mubr.bf16.mxu0 0
      %1363 = vmatmul.mubr.bf16.gmra.mrb[0].mxu0 %v1302
      %v1364 = vpop.f32.mrb[0].mxu0
      %v1365 = vadd.f32 0.0, %v1364
      %v1366 = vpop.f32.mrb[0].mxu0
      %v1367 = vpop.f32.mrb[0].mxu0
      %v1368 = vadd.f32 0.0, %v1367
      %v1369 = vpop.f32.mrb[0].mxu0
      %1370 = vmatprep.mubr.bf16.mxu0 0
      %1371 = vmatmul.mubr.bf16.gmra.mrb[0].mxu0 %v1305
      %v1372 = vpop.f32.mrb[0].mxu0
      %v1373 = vadd.f32 0.0, %v1372
      %v1374 = vpop.f32.mrb[0].mxu0
      %v1375 = vpop.f32.mrb[0].mxu0
      %v1376 = vadd.f32 0.0, %v1375
      %v1377 = vpop.f32.mrb[0].mxu0
      %1378 = vmatprep.mubr.bf16.mxu0 0
      %1379 = vmatmul.mubr.bf16.gmra.mrb[0].mxu0 %v1308
      %v1380 = vpop.f32.mrb[0].mxu0
      %v1381 = vadd.f32 0.0, %v1380
      %v1382 = vpop.f32.mrb[0].mxu0
      %v1383 = vpop.f32.mrb[0].mxu0
      %v1384 = vadd.f32 0.0, %v1383
      %v1385 = vpop.f32.mrb[0].mxu0
      %1386 = vdwg.mxu0
      %v1388 = vsel %vm941, %v782, 0
      %v1391 = vsel %vm941, %v784, 0
      %v1394 = vsel %vm941, %v786, 0
      %v1397 = vsel %vm941, %v788, 0
      %v1400 = vsel %vm941, %v838, 0
      %v1403 = vsel %vm941, %v840, 0
      %v1406 = vsel %vm941, %v842, 0
      %v1409 = vsel %vm941, %v844, 0
      %1411 = vmatprep.subr.bf16.mxu0 0
      %1412 = vmatpush1.bf16.xpose.msra.mxu0 %v1400
      %1413 = vmatprep.subr.bf16.mxu0 0
      %1414 = vmatpush1.bf16.xpose.msra.mxu0 %v1403
      %1415 = vmatprep.subr.bf16.mxu0 0
      %1416 = vmatpush1.bf16.xpose.msra.mxu0 %v1406
      %1417 = vmatprep.subr.bf16.mxu0 0
      %1418 = vmatpush1.bf16.xpose.msra.mxu0 %v1409
      %1419 = vmatprep.subr.bf16.mxu0 0
      %1420 = vmatpush1.bf16.xpose.msra.mxu0 0
      %1421 = vmatprep.subr.bf16.mxu0 0
      %1422 = vmatpush1.bf16.xpose.msra.mxu0 0
      %1423 = vmatprep.subr.bf16.mxu0 0
      %1424 = vmatpush1.bf16.xpose.msra.mxu0 0
      %1425 = vmatprep.subr.bf16.mxu0 0
      %1426 = vmatpush1.bf16.xpose.msra.mxu0 0
      %1427 = vmatprep.subr.bf16.mxu0 0
      %1428 = vmatpush1.bf16.xpose.msra.mxu0 0
      %1429 = vmatprep.subr.bf16.mxu0 0
      %1430 = vmatpush1.bf16.xpose.msra.mxu0 0
      %1431 = vmatprep.subr.bf16.mxu0 0
      %1432 = vmatpush1.bf16.xpose.msra.mxu0 0
      %1433 = vmatprep.subr.bf16.mxu0 0
      %1434 = vmatpush1.bf16.xpose.msra.mxu0 0
      %1435 = vmatprep.subr.bf16.mxu0 0
      %1436 = vmatpush1.bf16.xpose.msra.mxu0 0
      %1437 = vmatprep.subr.bf16.mxu0 0
      %1438 = vmatpush1.bf16.xpose.msra.mxu0 0
      %1439 = vmatprep.subr.bf16.mxu0 0
      %1440 = vmatpush1.bf16.xpose.msra.mxu0 0
      %1441 = vmatprep.subr.bf16.mxu0 0
      %1442 = vmatpush1.bf16.xpose.msra.mxu0 0
      %1443 = vmatprep.mubr.bf16.mxu0 0
      %1444 = vmatmul.mubr.bf16.gmra.mrb[0].mxu0 %v1388
      %v1445 = vpop.f32.mrb[0].mxu0
      %v1446 = vadd.f32 0.0, %v1445
      %v1447 = vpop.f32.mrb[0].mxu0
      %v1448 = vpop.f32.mrb[0].mxu0
      %v1449 = vadd.f32 0.0, %v1448
      %v1450 = vpop.f32.mrb[0].mxu0
      %1451 = vmatprep.mubr.bf16.mxu0 0
      %1452 = vmatmul.mubr.bf16.gmra.mrb[0].mxu0 %v1391
      %v1453 = vpop.f32.mrb[0].mxu0
      %v1454 = vadd.f32 0.0, %v1453
      %v1455 = vpop.f32.mrb[0].mxu0
      %v1456 = vpop.f32.mrb[0].mxu0
      %v1457 = vadd.f32 0.0, %v1456
      %v1458 = vpop.f32.mrb[0].mxu0
      %1459 = vmatprep.mubr.bf16.mxu0 0
      %1460 = vmatmul.mubr.bf16.gmra.mrb[0].mxu0 %v1394
      %v1461 = vpop.f32.mrb[0].mxu0
      %v1462 = vadd.f32 0.0, %v1461
      %v1463 = vpop.f32.mrb[0].mxu0
      %v1464 = vpop.f32.mrb[0].mxu0
      %v1465 = vadd.f32 0.0, %v1464
      %v1466 = vpop.f32.mrb[0].mxu0
      %1467 = vmatprep.mubr.bf16.mxu0 0
      %1468 = vmatmul.mubr.bf16.gmra.mrb[0].mxu0 %v1397
      %v1469 = vpop.f32.mrb[0].mxu0
      %v1470 = vadd.f32 0.0, %v1469
      %v1471 = vpop.f32.mrb[0].mxu0
      %v1472 = vpop.f32.mrb[0].mxu0
      %v1473 = vadd.f32 0.0, %v1472
      %v1474 = vpop.f32.mrb[0].mxu0
      %1475 = vdwg.mxu0
      %v1477 = vsel %vm941, %v790, 0
      %v1480 = vsel %vm941, %v792, 0
      %v1483 = vsel %vm941, %v794, 0
      %v1486 = vsel %vm941, %v796, 0
      %v1489 = vsel %vm941, %v846, 0
      %v1492 = vsel %vm941, %v848, 0
      %v1495 = vsel %vm941, %v850, 0
      %v1498 = vsel %vm941, %v852, 0
      %1500 = vmatprep.subr.bf16.mxu0 0
      %1501 = vmatpush1.bf16.xpose.msra.mxu0 %v1489
      %1502 = vmatprep.subr.bf16.mxu0 0
      %1503 = vmatpush1.bf16.xpose.msra.mxu0 %v1492
      %1504 = vmatprep.subr.bf16.mxu0 0
      %1505 = vmatpush1.bf16.xpose.msra.mxu0 %v1495
      %1506 = vmatprep.subr.bf16.mxu0 0
      %1507 = vmatpush1.bf16.xpose.msra.mxu0 %v1498
      %1508 = vmatprep.subr.bf16.mxu0 0
      %1509 = vmatpush1.bf16.xpose.msra.mxu0 0
      %1510 = vmatprep.subr.bf16.mxu0 0
      %1511 = vmatpush1.bf16.xpose.msra.mxu0 0
      %1512 = vmatprep.subr.bf16.mxu0 0
      %1513 = vmatpush1.bf16.xpose.msra.mxu0 0
      %1514 = vmatprep.subr.bf16.mxu0 0
      %1515 = vmatpush1.bf16.xpose.msra.mxu0 0
      %1516 = vmatprep.subr.bf16.mxu0 0
      %1517 = vmatpush1.bf16.xpose.msra.mxu0 0
      %1518 = vmatprep.subr.bf16.mxu0 0
      %1519 = vmatpush1.bf16.xpose.msra.mxu0 0
      %1520 = vmatprep.subr.bf16.mxu0 0
      %1521 = vmatpush1.bf16.xpose.msra.mxu0 0
      %1522 = vmatprep.subr.bf16.mxu0 0
      %1523 = vmatpush1.bf16.xpose.msra.mxu0 0
      %1524 = vmatprep.subr.bf16.mxu0 0
      %1525 = vmatpush1.bf16.xpose.msra.mxu0 0
      %1526 = vmatprep.subr.bf16.mxu0 0
      %1527 = vmatpush1.bf16.xpose.msra.mxu0 0
      %1528 = vmatprep.subr.bf16.mxu0 0
      %1529 = vmatpush1.bf16.xpose.msra.mxu0 0
      %1530 = vmatprep.subr.bf16.mxu0 0
      %1531 = vmatpush1.bf16.xpose.msra.mxu0 0
      %1532 = vmatprep.mubr.bf16.mxu0 0
      %1533 = vmatmul.mubr.bf16.gmra.mrb[0].mxu0 %v1477
      %v1534 = vpop.f32.mrb[0].mxu0
      %v1535 = vadd.f32 0.0, %v1534
      %v1536 = vpop.f32.mrb[0].mxu0
      %v1537 = vpop.f32.mrb[0].mxu0
      %v1538 = vadd.f32 0.0, %v1537
      %v1539 = vpop.f32.mrb[0].mxu0
      %1540 = vmatprep.mubr.bf16.mxu0 0
      %1541 = vmatmul.mubr.bf16.gmra.mrb[0].mxu0 %v1480
      %v1542 = vpop.f32.mrb[0].mxu0
      %v1543 = vadd.f32 0.0, %v1542
      %v1544 = vpop.f32.mrb[0].mxu0
      %v1545 = vpop.f32.mrb[0].mxu0
      %v1546 = vadd.f32 0.0, %v1545
      %v1547 = vpop.f32.mrb[0].mxu0
      %1548 = vmatprep.mubr.bf16.mxu0 0
      %1549 = vmatmul.mubr.bf16.gmra.mrb[0].mxu0 %v1483
      %v1550 = vpop.f32.mrb[0].mxu0
      %v1551 = vadd.f32 0.0, %v1550
      %v1552 = vpop.f32.mrb[0].mxu0
      %v1553 = vpop.f32.mrb[0].mxu0
      %v1554 = vadd.f32 0.0, %v1553
      %v1555 = vpop.f32.mrb[0].mxu0
      %1556 = vmatprep.mubr.bf16.mxu0 0
      %1557 = vmatmul.mubr.bf16.gmra.mrb[0].mxu0 %v1486
      %v1558 = vpop.f32.mrb[0].mxu0
      %v1559 = vadd.f32 0.0, %v1558
      %v1560 = vpop.f32.mrb[0].mxu0
      %v1561 = vpop.f32.mrb[0].mxu0
      %v1562 = vadd.f32 0.0, %v1561
      %v1563 = vpop.f32.mrb[0].mxu0
      %1564 = vdwg.mxu0
      %v1566 = vsel %vm941, %v798, 0
      %v1569 = vsel %vm941, %v800, 0
      %v1572 = vsel %vm941, %v802, 0
      %v1575 = vsel %vm941, %v804, 0
      %v1578 = vsel %vm941, %v854, 0
      %v1581 = vsel %vm941, %v856, 0
      %v1584 = vsel %vm941, %v858, 0
      %v1587 = vsel %vm941, %v860, 0
      %1589 = vmatprep.subr.bf16.mxu0 0
      %1590 = vmatpush1.bf16.xpose.msra.mxu0 %v1578
      %1591 = vmatprep.subr.bf16.mxu0 0
      %1592 = vmatpush1.bf16.xpose.msra.mxu0 %v1581
      %1593 = vmatprep.subr.bf16.mxu0 0
      %1594 = vmatpush1.bf16.xpose.msra.mxu0 %v1584
      %1595 = vmatprep.subr.bf16.mxu0 0
      %1596 = vmatpush1.bf16.xpose.msra.mxu0 %v1587
      %1597 = vmatprep.subr.bf16.mxu0 0
      %1598 = vmatpush1.bf16.xpose.msra.mxu0 0
      %1599 = vmatprep.subr.bf16.mxu0 0
      %1600 = vmatpush1.bf16.xpose.msra.mxu0 0
      %1601 = vmatprep.subr.bf16.mxu0 0
      %1602 = vmatpush1.bf16.xpose.msra.mxu0 0
      %1603 = vmatprep.subr.bf16.mxu0 0
      %1604 = vmatpush1.bf16.xpose.msra.mxu0 0
      %1605 = vmatprep.subr.bf16.mxu0 0
      %1606 = vmatpush1.bf16.xpose.msra.mxu0 0
      %1607 = vmatprep.subr.bf16.mxu0 0
      %1608 = vmatpush1.bf16.xpose.msra.mxu0 0
      %1609 = vmatprep.subr.bf16.mxu0 0
      %1610 = vmatpush1.bf16.xpose.msra.mxu0 0
      %1611 = vmatprep.subr.bf16.mxu0 0
      %1612 = vmatpush1.bf16.xpose.msra.mxu0 0
      %1613 = vmatprep.subr.bf16.mxu0 0
      %1614 = vmatpush1.bf16.xpose.msra.mxu0 0
      %1615 = vmatprep.subr.bf16.mxu0 0
      %1616 = vmatpush1.bf16.xpose.msra.mxu0 0
      %1617 = vmatprep.subr.bf16.mxu0 0
      %1618 = vmatpush1.bf16.xpose.msra.mxu0 0
      %1619 = vmatprep.subr.bf16.mxu0 0
      %1620 = vmatpush1.bf16.xpose.msra.mxu0 0
      %1621 = vmatprep.mubr.bf16.mxu0 0
      %1622 = vmatmul.mubr.bf16.gmra.mrb[0].mxu0 %v1566
      %v1623 = vpop.f32.mrb[0].mxu0
      %v1624 = vadd.f32 0.0, %v1623
      %v1625 = vpop.f32.mrb[0].mxu0
      %v1626 = vpop.f32.mrb[0].mxu0
      %v1627 = vadd.f32 0.0, %v1626
      %v1628 = vpop.f32.mrb[0].mxu0
      %1629 = vmatprep.mubr.bf16.mxu0 0
      %1630 = vmatmul.mubr.bf16.gmra.mrb[0].mxu0 %v1569
      %v1631 = vpop.f32.mrb[0].mxu0
      %v1632 = vadd.f32 0.0, %v1631
      %v1633 = vpop.f32.mrb[0].mxu0
      %v1634 = vpop.f32.mrb[0].mxu0
      %v1635 = vadd.f32 0.0, %v1634
      %v1636 = vpop.f32.mrb[0].mxu0
      %1637 = vmatprep.mubr.bf16.mxu0 0
      %1638 = vmatmul.mubr.bf16.gmra.mrb[0].mxu0 %v1572
      %v1639 = vpop.f32.mrb[0].mxu0
      %v1640 = vadd.f32 0.0, %v1639
      %v1641 = vpop.f32.mrb[0].mxu0
      %v1642 = vpop.f32.mrb[0].mxu0
      %v1643 = vadd.f32 0.0, %v1642
      %v1644 = vpop.f32.mrb[0].mxu0
      %1645 = vmatprep.mubr.bf16.mxu0 0
      %1646 = vmatmul.mubr.bf16.gmra.mrb[0].mxu0 %v1575
      %v1647 = vpop.f32.mrb[0].mxu0
      %v1648 = vadd.f32 0.0, %v1647
      %v1649 = vpop.f32.mrb[0].mxu0
      %v1650 = vpop.f32.mrb[0].mxu0
      %v1651 = vadd.f32 0.0, %v1650
      %v1652 = vpop.f32.mrb[0].mxu0
      %1653 = vdwg.mxu0
      %v1654 = vmul.f32 %v1001, 0.17677669
      %v1655 = vmul.f32 %v1004, 0.17677669
      %v1656 = vmul.f32 %v1009, 0.17677669
      %v1657 = vmul.f32 %v1012, 0.17677669
      %v1658 = vmul.f32 %v1017, 0.17677669
      %v1659 = vmul.f32 %v1020, 0.17677669
      %v1660 = vmul.f32 %v1025, 0.17677669
      %v1661 = vmul.f32 %v1028, 0.17677669
      %v1662 = vmul.f32 %v1090, 0.17677669
      %v1663 = vmul.f32 %v1093, 0.17677669
      %v1664 = vmul.f32 %v1098, 0.17677669
      %v1665 = vmul.f32 %v1101, 0.17677669
      %v1666 = vmul.f32 %v1106, 0.17677669
      %v1667 = vmul.f32 %v1109, 0.17677669
      %v1668 = vmul.f32 %v1114, 0.17677669
      %v1669 = vmul.f32 %v1117, 0.17677669
      %v1670 = vmul.f32 %v1179, 0.17677669
      %v1671 = vmul.f32 %v1182, 0.17677669
      %v1672 = vmul.f32 %v1187, 0.17677669
      %v1673 = vmul.f32 %v1190, 0.17677669
      %v1674 = vmul.f32 %v1195, 0.17677669
      %v1675 = vmul.f32 %v1198, 0.17677669
      %v1676 = vmul.f32 %v1203, 0.17677669
      %v1677 = vmul.f32 %v1206, 0.17677669
      %v1678 = vmul.f32 %v1268, 0.17677669
      %v1679 = vmul.f32 %v1271, 0.17677669
      %v1680 = vmul.f32 %v1276, 0.17677669
      %v1681 = vmul.f32 %v1279, 0.17677669
      %v1682 = vmul.f32 %v1284, 0.17677669
      %v1683 = vmul.f32 %v1287, 0.17677669
      %v1684 = vmul.f32 %v1292, 0.17677669
      %v1685 = vmul.f32 %v1295, 0.17677669
      %v1686 = vmul.f32 %v1357, 0.17677669
      %v1687 = vmul.f32 %v1360, 0.17677669
      %v1688 = vmul.f32 %v1365, 0.17677669
      %v1689 = vmul.f32 %v1368, 0.17677669
      %v1690 = vmul.f32 %v1373, 0.17677669
      %v1691 = vmul.f32 %v1376, 0.17677669
      %v1692 = vmul.f32 %v1381, 0.17677669
      %v1693 = vmul.f32 %v1384, 0.17677669
      %v1694 = vmul.f32 %v1446, 0.17677669
      %v1695 = vmul.f32 %v1449, 0.17677669
      %v1696 = vmul.f32 %v1454, 0.17677669
      %v1697 = vmul.f32 %v1457, 0.17677669
      %v1698 = vmul.f32 %v1462, 0.17677669
      %v1699 = vmul.f32 %v1465, 0.17677669
      %v1700 = vmul.f32 %v1470, 0.17677669
      %v1701 = vmul.f32 %v1473, 0.17677669
      %v1702 = vmul.f32 %v1535, 0.17677669
      %v1703 = vmul.f32 %v1538, 0.17677669
      %v1704 = vmul.f32 %v1543, 0.17677669
      %v1705 = vmul.f32 %v1546, 0.17677669
      %v1706 = vmul.f32 %v1551, 0.17677669
      %v1707 = vmul.f32 %v1554, 0.17677669
      %v1708 = vmul.f32 %v1559, 0.17677669
      %v1709 = vmul.f32 %v1562, 0.17677669
      %v1710 = vmul.f32 %v1624, 0.17677669
      %v1711 = vmul.f32 %v1627, 0.17677669
      %v1712 = vmul.f32 %v1632, 0.17677669
      %v1713 = vmul.f32 %v1635, 0.17677669
      %v1714 = vmul.f32 %v1640, 0.17677669
      %v1715 = vmul.f32 %v1643, 0.17677669
      %v1716 = vmul.f32 %v1648, 0.17677669
      %v1717 = vmul.f32 %v1651, 0.17677669
      %vm1718 = vcmask 523264
      %v1719 = vsel %vm1718, %v1654, -inf
      %1720 = vmax.xlane.f32.xlu0 %v1719
      %v1721 = vpop.xlane.xlu0 %1720
      %v1722 = vsel %vm1718, %v1655, -inf
      %1723 = vmax.xlane.f32.xlu0 %v1722
      %v1724 = vpop.xlane.xlu0 %1723
      %v1725 = vsel %vm1718, %v1656, -inf
      %1726 = vmax.xlane.f32.xlu0 %v1725
      %v1727 = vpop.xlane.xlu0 %1726
      %v1728 = vsel %vm1718, %v1657, -inf
      %1729 = vmax.xlane.f32.xlu0 %v1728
      %v1730 = vpop.xlane.xlu0 %1729
      %v1731 = vsel %vm1718, %v1658, -inf
      %1732 = vmax.xlane.f32.xlu0 %v1731
      %v1733 = vpop.xlane.xlu0 %1732
      %v1734 = vsel %vm1718, %v1659, -inf
      %1735 = vmax.xlane.f32.xlu0 %v1734
      %v1736 = vpop.xlane.xlu0 %1735
      %v1737 = vsel %vm1718, %v1660, -inf
      %1738 = vmax.xlane.f32.xlu0 %v1737
      %v1739 = vpop.xlane.xlu0 %1738
      %v1740 = vsel %vm1718, %v1661, -inf
      %1741 = vmax.xlane.f32.xlu0 %v1740
      %v1742 = vpop.xlane.xlu0 %1741
      %v1743 = vsel %vm1718, %v1662, -inf
      %1744 = vmax.xlane.f32.xlu0 %v1743
      %v1745 = vpop.xlane.xlu0 %1744
      %v1746 = vsel %vm1718, %v1663, -inf
      %1747 = vmax.xlane.f32.xlu0 %v1746
      %v1748 = vpop.xlane.xlu0 %1747
      %v1749 = vsel %vm1718, %v1664, -inf
      %1750 = vmax.xlane.f32.xlu0 %v1749
      %v1751 = vpop.xlane.xlu0 %1750
      %v1752 = vsel %vm1718, %v1665, -inf
      %1753 = vmax.xlane.f32.xlu0 %v1752
      %v1754 = vpop.xlane.xlu0 %1753
      %v1755 = vsel %vm1718, %v1666, -inf
      %1756 = vmax.xlane.f32.xlu0 %v1755
      %v1757 = vpop.xlane.xlu0 %1756
      %v1758 = vsel %vm1718, %v1667, -inf
      %1759 = vmax.xlane.f32.xlu0 %v1758
      %v1760 = vpop.xlane.xlu0 %1759
      %v1761 = vsel %vm1718, %v1668, -inf
      %1762 = vmax.xlane.f32.xlu0 %v1761
      %v1763 = vpop.xlane.xlu0 %1762
      %v1764 = vsel %vm1718, %v1669, -inf
      %1765 = vmax.xlane.f32.xlu0 %v1764
      %v1766 = vpop.xlane.xlu0 %1765
      %v1767 = vsel %vm1718, %v1670, -inf
      %1768 = vmax.xlane.f32.xlu0 %v1767
      %v1769 = vpop.xlane.xlu0 %1768
      %v1770 = vsel %vm1718, %v1671, -inf
      %1771 = vmax.xlane.f32.xlu0 %v1770
      %v1772 = vpop.xlane.xlu0 %1771
      %v1773 = vsel %vm1718, %v1672, -inf
      %1774 = vmax.xlane.f32.xlu0 %v1773
      %v1775 = vpop.xlane.xlu0 %1774
      %v1776 = vsel %vm1718, %v1673, -inf
      %1777 = vmax.xlane.f32.xlu0 %v1776
      %v1778 = vpop.xlane.xlu0 %1777
      %v1779 = vsel %vm1718, %v1674, -inf
      %1780 = vmax.xlane.f32.xlu0 %v1779
      %v1781 = vpop.xlane.xlu0 %1780
      %v1782 = vsel %vm1718, %v1675, -inf
      %1783 = vmax.xlane.f32.xlu0 %v1782
      %v1784 = vpop.xlane.xlu0 %1783
      %v1785 = vsel %vm1718, %v1676, -inf
      %1786 = vmax.xlane.f32.xlu0 %v1785
      %v1787 = vpop.xlane.xlu0 %1786
      %v1788 = vsel %vm1718, %v1677, -inf
      %1789 = vmax.xlane.f32.xlu0 %v1788
      %v1790 = vpop.xlane.xlu0 %1789
      %v1791 = vsel %vm1718, %v1678, -inf
      %1792 = vmax.xlane.f32.xlu0 %v1791
      %v1793 = vpop.xlane.xlu0 %1792
      %v1794 = vsel %vm1718, %v1679, -inf
      %1795 = vmax.xlane.f32.xlu0 %v1794
      %v1796 = vpop.xlane.xlu0 %1795
      %v1797 = vsel %vm1718, %v1680, -inf
      %1798 = vmax.xlane.f32.xlu0 %v1797
      %v1799 = vpop.xlane.xlu0 %1798
      %v1800 = vsel %vm1718, %v1681, -inf
      %1801 = vmax.xlane.f32.xlu0 %v1800
      %v1802 = vpop.xlane.xlu0 %1801
      %v1803 = vsel %vm1718, %v1682, -inf
      %1804 = vmax.xlane.f32.xlu0 %v1803
      %v1805 = vpop.xlane.xlu0 %1804
      %v1806 = vsel %vm1718, %v1683, -inf
      %1807 = vmax.xlane.f32.xlu0 %v1806
      %v1808 = vpop.xlane.xlu0 %1807
      %v1809 = vsel %vm1718, %v1684, -inf
      %1810 = vmax.xlane.f32.xlu0 %v1809
      %v1811 = vpop.xlane.xlu0 %1810
      %v1812 = vsel %vm1718, %v1685, -inf
      %1813 = vmax.xlane.f32.xlu0 %v1812
      %v1814 = vpop.xlane.xlu0 %1813
      %v1815 = vsel %vm1718, %v1686, -inf
      %1816 = vmax.xlane.f32.xlu0 %v1815
      %v1817 = vpop.xlane.xlu0 %1816
      %v1818 = vsel %vm1718, %v1687, -inf
      %1819 = vmax.xlane.f32.xlu0 %v1818
      %v1820 = vpop.xlane.xlu0 %1819
      %v1821 = vsel %vm1718, %v1688, -inf
      %1822 = vmax.xlane.f32.xlu0 %v1821
      %v1823 = vpop.xlane.xlu0 %1822
      %v1824 = vsel %vm1718, %v1689, -inf
      %1825 = vmax.xlane.f32.xlu0 %v1824
      %v1826 = vpop.xlane.xlu0 %1825
      %v1827 = vsel %vm1718, %v1690, -inf
      %1828 = vmax.xlane.f32.xlu0 %v1827
      %v1829 = vpop.xlane.xlu0 %1828
      %v1830 = vsel %vm1718, %v1691, -inf
      %1831 = vmax.xlane.f32.xlu0 %v1830
      %v1832 = vpop.xlane.xlu0 %1831
      %v1833 = vsel %vm1718, %v1692, -inf
      %1834 = vmax.xlane.f32.xlu0 %v1833
      %v1835 = vpop.xlane.xlu0 %1834
      %v1836 = vsel %vm1718, %v1693, -inf
      %1837 = vmax.xlane.f32.xlu0 %v1836
      %v1838 = vpop.xlane.xlu0 %1837
      %v1839 = vsel %vm1718, %v1694, -inf
      %1840 = vmax.xlane.f32.xlu0 %v1839
      %v1841 = vpop.xlane.xlu0 %1840
      %v1842 = vsel %vm1718, %v1695, -inf
      %1843 = vmax.xlane.f32.xlu0 %v1842
      %v1844 = vpop.xlane.xlu0 %1843
      %v1845 = vsel %vm1718, %v1696, -inf
      %1846 = vmax.xlane.f32.xlu0 %v1845
      %v1847 = vpop.xlane.xlu0 %1846
      %v1848 = vsel %vm1718, %v1697, -inf
      %1849 = vmax.xlane.f32.xlu0 %v1848
      %v1850 = vpop.xlane.xlu0 %1849
      %v1851 = vsel %vm1718, %v1698, -inf
      %1852 = vmax.xlane.f32.xlu0 %v1851
      %v1853 = vpop.xlane.xlu0 %1852
      %v1854 = vsel %vm1718, %v1699, -inf
      %1855 = vmax.xlane.f32.xlu0 %v1854
      %v1856 = vpop.xlane.xlu0 %1855
      %v1857 = vsel %vm1718, %v1700, -inf
      %1858 = vmax.xlane.f32.xlu0 %v1857
      %v1859 = vpop.xlane.xlu0 %1858
      %v1860 = vsel %vm1718, %v1701, -inf
      %1861 = vmax.xlane.f32.xlu0 %v1860
      %v1862 = vpop.xlane.xlu0 %1861
      %v1863 = vsel %vm1718, %v1702, -inf
      %1864 = vmax.xlane.f32.xlu0 %v1863
      %v1865 = vpop.xlane.xlu0 %1864
      %v1866 = vsel %vm1718, %v1703, -inf
      %1867 = vmax.xlane.f32.xlu0 %v1866
      %v1868 = vpop.xlane.xlu0 %1867
      %v1869 = vsel %vm1718, %v1704, -inf
      %1870 = vmax.xlane.f32.xlu0 %v1869
      %v1871 = vpop.xlane.xlu0 %1870
      %v1872 = vsel %vm1718, %v1705, -inf
      %1873 = vmax.xlane.f32.xlu0 %v1872
      %v1874 = vpop.xlane.xlu0 %1873
      %v1875 = vsel %vm1718, %v1706, -inf
      %1876 = vmax.xlane.f32.xlu0 %v1875
      %v1877 = vpop.xlane.xlu0 %1876
      %v1878 = vsel %vm1718, %v1707, -inf
      %1879 = vmax.xlane.f32.xlu0 %v1878
      %v1880 = vpop.xlane.xlu0 %1879
      %v1881 = vsel %vm1718, %v1708, -inf
      %1882 = vmax.xlane.f32.xlu0 %v1881
      %v1883 = vpop.xlane.xlu0 %1882
      %v1884 = vsel %vm1718, %v1709, -inf
      %1885 = vmax.xlane.f32.xlu0 %v1884
      %v1886 = vpop.xlane.xlu0 %1885
      %v1887 = vsel %vm1718, %v1710, -inf
      %1888 = vmax.xlane.f32.xlu0 %v1887
      %v1889 = vpop.xlane.xlu0 %1888
      %v1890 = vsel %vm1718, %v1711, -inf
      %1891 = vmax.xlane.f32.xlu0 %v1890
      %v1892 = vpop.xlane.xlu0 %1891
      %v1893 = vsel %vm1718, %v1712, -inf
      %1894 = vmax.xlane.f32.xlu0 %v1893
      %v1895 = vpop.xlane.xlu0 %1894
      %v1896 = vsel %vm1718, %v1713, -inf
      %1897 = vmax.xlane.f32.xlu0 %v1896
      %v1898 = vpop.xlane.xlu0 %1897
      %v1899 = vsel %vm1718, %v1714, -inf
      %1900 = vmax.xlane.f32.xlu0 %v1899
      %v1901 = vpop.xlane.xlu0 %1900
      %v1902 = vsel %vm1718, %v1715, -inf
      %1903 = vmax.xlane.f32.xlu0 %v1902
      %v1904 = vpop.xlane.xlu0 %1903
      %v1905 = vsel %vm1718, %v1716, -inf
      %1906 = vmax.xlane.f32.xlu0 %v1905
      %v1907 = vpop.xlane.xlu0 %1906
      %v1908 = vsel %vm1718, %v1717, -inf
      %1909 = vmax.xlane.f32.xlu0 %v1908
      %v1910 = vpop.xlane.xlu0 %1909
      %v1911 = vsub.f32 %v1654, %v1721
      %v1912 = vsub.f32 %v1655, %v1724
      %v1913 = vsub.f32 %v1656, %v1727
      %v1914 = vsub.f32 %v1657, %v1730
      %v1915 = vsub.f32 %v1658, %v1733
      %v1916 = vsub.f32 %v1659, %v1736
      %v1917 = vsub.f32 %v1660, %v1739
      %v1918 = vsub.f32 %v1661, %v1742
      %v1919 = vsub.f32 %v1662, %v1745
      %v1920 = vsub.f32 %v1663, %v1748
      %v1921 = vsub.f32 %v1664, %v1751
      %v1922 = vsub.f32 %v1665, %v1754
      %v1923 = vsub.f32 %v1666, %v1757
      %v1924 = vsub.f32 %v1667, %v1760
      %v1925 = vsub.f32 %v1668, %v1763
      %v1926 = vsub.f32 %v1669, %v1766
      %v1927 = vsub.f32 %v1670, %v1769
      %v1928 = vsub.f32 %v1671, %v1772
      %v1929 = vsub.f32 %v1672, %v1775
      %v1930 = vsub.f32 %v1673, %v1778
      %v1931 = vsub.f32 %v1674, %v1781
      %v1932 = vsub.f32 %v1675, %v1784
      %v1933 = vsub.f32 %v1676, %v1787
      %v1934 = vsub.f32 %v1677, %v1790
      %v1935 = vsub.f32 %v1678, %v1793
      %v1936 = vsub.f32 %v1679, %v1796
      %v1937 = vsub.f32 %v1680, %v1799
      %v1938 = vsub.f32 %v1681, %v1802
      %v1939 = vsub.f32 %v1682, %v1805
      %v1940 = vsub.f32 %v1683, %v1808
      %v1941 = vsub.f32 %v1684, %v1811
      %v1942 = vsub.f32 %v1685, %v1814
      %v1943 = vsub.f32 %v1686, %v1817
      %v1944 = vsub.f32 %v1687, %v1820
      %v1945 = vsub.f32 %v1688, %v1823
      %v1946 = vsub.f32 %v1689, %v1826
      %v1947 = vsub.f32 %v1690, %v1829
      %v1948 = vsub.f32 %v1691, %v1832
      %v1949 = vsub.f32 %v1692, %v1835
      %v1950 = vsub.f32 %v1693, %v1838
      %v1951 = vsub.f32 %v1694, %v1841
      %v1952 = vsub.f32 %v1695, %v1844
      %v1953 = vsub.f32 %v1696, %v1847
      %v1954 = vsub.f32 %v1697, %v1850
      %v1955 = vsub.f32 %v1698, %v1853
      %v1956 = vsub.f32 %v1699, %v1856
      %v1957 = vsub.f32 %v1700, %v1859
      %v1958 = vsub.f32 %v1701, %v1862
      %v1959 = vsub.f32 %v1702, %v1865
      %v1960 = vsub.f32 %v1703, %v1868
      %v1961 = vsub.f32 %v1704, %v1871
      %v1962 = vsub.f32 %v1705, %v1874
      %v1963 = vsub.f32 %v1706, %v1877
      %v1964 = vsub.f32 %v1707, %v1880
      %v1965 = vsub.f32 %v1708, %v1883
      %v1966 = vsub.f32 %v1709, %v1886
      %v1967 = vsub.f32 %v1710, %v1889
      %v1968 = vsub.f32 %v1711, %v1892
      %v1969 = vsub.f32 %v1712, %v1895
      %v1970 = vsub.f32 %v1713, %v1898
      %v1971 = vsub.f32 %v1714, %v1901
      %v1972 = vsub.f32 %v1715, %v1904
      %v1973 = vsub.f32 %v1716, %v1907
      %v1974 = vsub.f32 %v1717, %v1910
      %v1975 = vmul.f32 %v1911, 1.442695
      %v1976 = vpow.pop %v1975
      %v1977 = vmul.f32 %v1912, 1.442695
      %v1978 = vpow.pop %v1977
      %v1979 = vmul.f32 %v1913, 1.442695
      %v1980 = vpow.pop %v1979
      %v1981 = vmul.f32 %v1914, 1.442695
      %v1982 = vpow.pop %v1981
      %v1983 = vmul.f32 %v1915, 1.442695
      %v1984 = vpow.pop %v1983
      %v1985 = vmul.f32 %v1916, 1.442695
      %v1986 = vpow.pop %v1985
      %v1987 = vmul.f32 %v1917, 1.442695
      %v1988 = vpow.pop %v1987
      %v1989 = vmul.f32 %v1918, 1.442695
      %v1990 = vpow.pop %v1989
      %v1991 = vmul.f32 %v1919, 1.442695
      %v1992 = vpow.pop %v1991
      %v1993 = vmul.f32 %v1920, 1.442695
      %v1994 = vpow.pop %v1993
      %v1995 = vmul.f32 %v1921, 1.442695
      %v1996 = vpow.pop %v1995
      %v1997 = vmul.f32 %v1922, 1.442695
      %v1998 = vpow.pop %v1997
      %v1999 = vmul.f32 %v1923, 1.442695
      %v2000 = vpow.pop %v1999
      %v2001 = vmul.f32 %v1924, 1.442695
      %v2002 = vpow.pop %v2001
      %v2003 = vmul.f32 %v1925, 1.442695
      %v2004 = vpow.pop %v2003
      %v2005 = vmul.f32 %v1926, 1.442695
      %v2006 = vpow.pop %v2005
      %v2007 = vmul.f32 %v1927, 1.442695
      %v2008 = vpow.pop %v2007
      %v2009 = vmul.f32 %v1928, 1.442695
      %v2010 = vpow.pop %v2009
      %v2011 = vmul.f32 %v1929, 1.442695
      %v2012 = vpow.pop %v2011
      %v2013 = vmul.f32 %v1930, 1.442695
      %v2014 = vpow.pop %v2013
      %v2015 = vmul.f32 %v1931, 1.442695
      %v2016 = vpow.pop %v2015
      %v2017 = vmul.f32 %v1932, 1.442695
      %v2018 = vpow.pop %v2017
      %v2019 = vmul.f32 %v1933, 1.442695
      %v2020 = vpow.pop %v2019
      %v2021 = vmul.f32 %v1934, 1.442695
      %v2022 = vpow.pop %v2021
      %v2023 = vmul.f32 %v1935, 1.442695
      %v2024 = vpow.pop %v2023
      %v2025 = vmul.f32 %v1936, 1.442695
      %v2026 = vpow.pop %v2025
      %v2027 = vmul.f32 %v1937, 1.442695
      %v2028 = vpow.pop %v2027
      %v2029 = vmul.f32 %v1938, 1.442695
      %v2030 = vpow.pop %v2029
      %v2031 = vmul.f32 %v1939, 1.442695
      %v2032 = vpow.pop %v2031
      %v2033 = vmul.f32 %v1940, 1.442695
      %v2034 = vpow.pop %v2033
      %v2035 = vmul.f32 %v1941, 1.442695
      %v2036 = vpow.pop %v2035
      %v2037 = vmul.f32 %v1942, 1.442695
      %v2038 = vpow.pop %v2037
      %v2039 = vmul.f32 %v1943, 1.442695
      %v2040 = vpow.pop %v2039
      %v2041 = vmul.f32 %v1944, 1.442695
      %v2042 = vpow.pop %v2041
      %v2043 = vmul.f32 %v1945, 1.442695
      %v2044 = vpow.pop %v2043
      %v2045 = vmul.f32 %v1946, 1.442695
      %v2046 = vpow.pop %v2045
      %v2047 = vmul.f32 %v1947, 1.442695
      %v2048 = vpow.pop %v2047
      %v2049 = vmul.f32 %v1948, 1.442695
      %v2050 = vpow.pop %v2049
      %v2051 = vmul.f32 %v1949, 1.442695
      %v2052 = vpow.pop %v2051
      %v2053 = vmul.f32 %v1950, 1.442695
      %v2054 = vpow.pop %v2053
      %v2055 = vmul.f32 %v1951, 1.442695
      %v2056 = vpow.pop %v2055
      %v2057 = vmul.f32 %v1952, 1.442695
      %v2058 = vpow.pop %v2057
      %v2059 = vmul.f32 %v1953, 1.442695
      %v2060 = vpow.pop %v2059
      %v2061 = vmul.f32 %v1954, 1.442695
      %v2062 = vpow.pop %v2061
      %v2063 = vmul.f32 %v1955, 1.442695
      %v2064 = vpow.pop %v2063
      %v2065 = vmul.f32 %v1956, 1.442695
      %v2066 = vpow.pop %v2065
      %v2067 = vmul.f32 %v1957, 1.442695
      %v2068 = vpow.pop %v2067
      %v2069 = vmul.f32 %v1958, 1.442695
      %v2070 = vpow.pop %v2069
      %v2071 = vmul.f32 %v1959, 1.442695
      %v2072 = vpow.pop %v2071
      %v2073 = vmul.f32 %v1960, 1.442695
      %v2074 = vpow.pop %v2073
      %v2075 = vmul.f32 %v1961, 1.442695
      %v2076 = vpow.pop %v2075
      %v2077 = vmul.f32 %v1962, 1.442695
      %v2078 = vpow.pop %v2077
      %v2079 = vmul.f32 %v1963, 1.442695
      %v2080 = vpow.pop %v2079
      %v2081 = vmul.f32 %v1964, 1.442695
      %v2082 = vpow.pop %v2081
      %v2083 = vmul.f32 %v1965, 1.442695
      %v2084 = vpow.pop %v2083
      %v2085 = vmul.f32 %v1966, 1.442695
      %v2086 = vpow.pop %v2085
      %v2087 = vmul.f32 %v1967, 1.442695
      %v2088 = vpow.pop %v2087
      %v2089 = vmul.f32 %v1968, 1.442695
      %v2090 = vpow.pop %v2089
      %v2091 = vmul.f32 %v1969, 1.442695
      %v2092 = vpow.pop %v2091
      %v2093 = vmul.f32 %v1970, 1.442695
      %v2094 = vpow.pop %v2093
      %v2095 = vmul.f32 %v1971, 1.442695
      %v2096 = vpow.pop %v2095
      %v2097 = vmul.f32 %v1972, 1.442695
      %v2098 = vpow.pop %v2097
      %v2099 = vmul.f32 %v1973, 1.442695
      %v2100 = vpow.pop %v2099
      %v2101 = vmul.f32 %v1974, 1.442695
      %v2102 = vpow.pop %v2101
      %v2103 = vsel %vm1718, %v1976, 0.0
      %2104 = vadd.xlane.f32.xlu0 %v2103
      %v2105 = vpop.xlane.xlu0 %2104
      %v2106 = vsel %vm1718, %v1978, 0.0
      %2107 = vadd.xlane.f32.xlu0 %v2106
      %v2108 = vpop.xlane.xlu0 %2107
      %v2109 = vsel %vm1718, %v1980, 0.0
      %2110 = vadd.xlane.f32.xlu0 %v2109
      %v2111 = vpop.xlane.xlu0 %2110
      %v2112 = vsel %vm1718, %v1982, 0.0
      %2113 = vadd.xlane.f32.xlu0 %v2112
      %v2114 = vpop.xlane.xlu0 %2113
      %v2115 = vsel %vm1718, %v1984, 0.0
      %2116 = vadd.xlane.f32.xlu0 %v2115
      %v2117 = vpop.xlane.xlu0 %2116
      %v2118 = vsel %vm1718, %v1986, 0.0
      %2119 = vadd.xlane.f32.xlu0 %v2118
      %v2120 = vpop.xlane.xlu0 %2119
      %v2121 = vsel %vm1718, %v1988, 0.0
      %2122 = vadd.xlane.f32.xlu0 %v2121
      %v2123 = vpop.xlane.xlu0 %2122
      %v2124 = vsel %vm1718, %v1990, 0.0
      %2125 = vadd.xlane.f32.xlu0 %v2124
      %v2126 = vpop.xlane.xlu0 %2125
      %v2127 = vsel %vm1718, %v1992, 0.0
      %2128 = vadd.xlane.f32.xlu0 %v2127
      %v2129 = vpop.xlane.xlu0 %2128
      %v2130 = vsel %vm1718, %v1994, 0.0
      %2131 = vadd.xlane.f32.xlu0 %v2130
      %v2132 = vpop.xlane.xlu0 %2131
      %v2133 = vsel %vm1718, %v1996, 0.0
      %2134 = vadd.xlane.f32.xlu0 %v2133
      %v2135 = vpop.xlane.xlu0 %2134
      %v2136 = vsel %vm1718, %v1998, 0.0
      %2137 = vadd.xlane.f32.xlu0 %v2136
      %v2138 = vpop.xlane.xlu0 %2137
      %v2139 = vsel %vm1718, %v2000, 0.0
      %2140 = vadd.xlane.f32.xlu0 %v2139
      %v2141 = vpop.xlane.xlu0 %2140
      %v2142 = vsel %vm1718, %v2002, 0.0
      %2143 = vadd.xlane.f32.xlu0 %v2142
      %v2144 = vpop.xlane.xlu0 %2143
      %v2145 = vsel %vm1718, %v2004, 0.0
      %2146 = vadd.xlane.f32.xlu0 %v2145
      %v2147 = vpop.xlane.xlu0 %2146
      %v2148 = vsel %vm1718, %v2006, 0.0
      %2149 = vadd.xlane.f32.xlu0 %v2148
      %v2150 = vpop.xlane.xlu0 %2149
      %v2151 = vsel %vm1718, %v2008, 0.0
      %2152 = vadd.xlane.f32.xlu0 %v2151
      %v2153 = vpop.xlane.xlu0 %2152
      %v2154 = vsel %vm1718, %v2010, 0.0
      %2155 = vadd.xlane.f32.xlu0 %v2154
      %v2156 = vpop.xlane.xlu0 %2155
      %v2157 = vsel %vm1718, %v2012, 0.0
      %2158 = vadd.xlane.f32.xlu0 %v2157
      %v2159 = vpop.xlane.xlu0 %2158
      %v2160 = vsel %vm1718, %v2014, 0.0
      %2161 = vadd.xlane.f32.xlu0 %v2160
      %v2162 = vpop.xlane.xlu0 %2161
      %v2163 = vsel %vm1718, %v2016, 0.0
      %2164 = vadd.xlane.f32.xlu0 %v2163
      %v2165 = vpop.xlane.xlu0 %2164
      %v2166 = vsel %vm1718, %v2018, 0.0
      %2167 = vadd.xlane.f32.xlu0 %v2166
      %v2168 = vpop.xlane.xlu0 %2167
      %v2169 = vsel %vm1718, %v2020, 0.0
      %2170 = vadd.xlane.f32.xlu0 %v2169
      %v2171 = vpop.xlane.xlu0 %2170
      %v2172 = vsel %vm1718, %v2022, 0.0
      %2173 = vadd.xlane.f32.xlu0 %v2172
      %v2174 = vpop.xlane.xlu0 %2173
      %v2175 = vsel %vm1718, %v2024, 0.0
      %2176 = vadd.xlane.f32.xlu0 %v2175
      %v2177 = vpop.xlane.xlu0 %2176
      %v2178 = vsel %vm1718, %v2026, 0.0
      %2179 = vadd.xlane.f32.xlu0 %v2178
      %v2180 = vpop.xlane.xlu0 %2179
      %v2181 = vsel %vm1718, %v2028, 0.0
      %2182 = vadd.xlane.f32.xlu0 %v2181
      %v2183 = vpop.xlane.xlu0 %2182
      %v2184 = vsel %vm1718, %v2030, 0.0
      %2185 = vadd.xlane.f32.xlu0 %v2184
      %v2186 = vpop.xlane.xlu0 %2185
      %v2187 = vsel %vm1718, %v2032, 0.0
      %2188 = vadd.xlane.f32.xlu0 %v2187
      %v2189 = vpop.xlane.xlu0 %2188
      %v2190 = vsel %vm1718, %v2034, 0.0
      %2191 = vadd.xlane.f32.xlu0 %v2190
      %v2192 = vpop.xlane.xlu0 %2191
      %v2193 = vsel %vm1718, %v2036, 0.0
      %2194 = vadd.xlane.f32.xlu0 %v2193
      %v2195 = vpop.xlane.xlu0 %2194
      %v2196 = vsel %vm1718, %v2038, 0.0
      %2197 = vadd.xlane.f32.xlu0 %v2196
      %v2198 = vpop.xlane.xlu0 %2197
      %v2199 = vsel %vm1718, %v2040, 0.0
      %2200 = vadd.xlane.f32.xlu0 %v2199
      %v2201 = vpop.xlane.xlu0 %2200
      %v2202 = vsel %vm1718, %v2042, 0.0
      %2203 = vadd.xlane.f32.xlu0 %v2202
      %v2204 = vpop.xlane.xlu0 %2203
      %v2205 = vsel %vm1718, %v2044, 0.0
      %2206 = vadd.xlane.f32.xlu0 %v2205
      %v2207 = vpop.xlane.xlu0 %2206
      %v2208 = vsel %vm1718, %v2046, 0.0
      %2209 = vadd.xlane.f32.xlu0 %v2208
      %v2210 = vpop.xlane.xlu0 %2209
      %v2211 = vsel %vm1718, %v2048, 0.0
      %2212 = vadd.xlane.f32.xlu0 %v2211
      %v2213 = vpop.xlane.xlu0 %2212
      %v2214 = vsel %vm1718, %v2050, 0.0
      %2215 = vadd.xlane.f32.xlu0 %v2214
      %v2216 = vpop.xlane.xlu0 %2215
      %v2217 = vsel %vm1718, %v2052, 0.0
      %2218 = vadd.xlane.f32.xlu0 %v2217
      %v2219 = vpop.xlane.xlu0 %2218
      %v2220 = vsel %vm1718, %v2054, 0.0
      %2221 = vadd.xlane.f32.xlu0 %v2220
      %v2222 = vpop.xlane.xlu0 %2221
      %v2223 = vsel %vm1718, %v2056, 0.0
      %2224 = vadd.xlane.f32.xlu0 %v2223
      %v2225 = vpop.xlane.xlu0 %2224
      %v2226 = vsel %vm1718, %v2058, 0.0
      %2227 = vadd.xlane.f32.xlu0 %v2226
      %v2228 = vpop.xlane.xlu0 %2227
      %v2229 = vsel %vm1718, %v2060, 0.0
      %2230 = vadd.xlane.f32.xlu0 %v2229
      %v2231 = vpop.xlane.xlu0 %2230
      %v2232 = vsel %vm1718, %v2062, 0.0
      %2233 = vadd.xlane.f32.xlu0 %v2232
      %v2234 = vpop.xlane.xlu0 %2233
      %v2235 = vsel %vm1718, %v2064, 0.0
      %2236 = vadd.xlane.f32.xlu0 %v2235
      %v2237 = vpop.xlane.xlu0 %2236
      %v2238 = vsel %vm1718, %v2066, 0.0
      %2239 = vadd.xlane.f32.xlu0 %v2238
      %v2240 = vpop.xlane.xlu0 %2239
      %v2241 = vsel %vm1718, %v2068, 0.0
      %2242 = vadd.xlane.f32.xlu0 %v2241
      %v2243 = vpop.xlane.xlu0 %2242
      %v2244 = vsel %vm1718, %v2070, 0.0
      %2245 = vadd.xlane.f32.xlu0 %v2244
      %v2246 = vpop.xlane.xlu0 %2245
      %v2247 = vsel %vm1718, %v2072, 0.0
      %2248 = vadd.xlane.f32.xlu0 %v2247
      %v2249 = vpop.xlane.xlu0 %2248
      %v2250 = vsel %vm1718, %v2074, 0.0
      %2251 = vadd.xlane.f32.xlu0 %v2250
      %v2252 = vpop.xlane.xlu0 %2251
      %v2253 = vsel %vm1718, %v2076, 0.0
      %2254 = vadd.xlane.f32.xlu0 %v2253
      %v2255 = vpop.xlane.xlu0 %2254
      %v2256 = vsel %vm1718, %v2078, 0.0
      %2257 = vadd.xlane.f32.xlu0 %v2256
      %v2258 = vpop.xlane.xlu0 %2257
      %v2259 = vsel %vm1718, %v2080, 0.0
      %2260 = vadd.xlane.f32.xlu0 %v2259
      %v2261 = vpop.xlane.xlu0 %2260
      %v2262 = vsel %vm1718, %v2082, 0.0
      %2263 = vadd.xlane.f32.xlu0 %v2262
      %v2264 = vpop.xlane.xlu0 %2263
      %v2265 = vsel %vm1718, %v2084, 0.0
      %2266 = vadd.xlane.f32.xlu0 %v2265
      %v2267 = vpop.xlane.xlu0 %2266
      %v2268 = vsel %vm1718, %v2086, 0.0
      %2269 = vadd.xlane.f32.xlu0 %v2268
      %v2270 = vpop.xlane.xlu0 %2269
      %v2271 = vsel %vm1718, %v2088, 0.0
      %2272 = vadd.xlane.f32.xlu0 %v2271
      %v2273 = vpop.xlane.xlu0 %2272
      %v2274 = vsel %vm1718, %v2090, 0.0
      %2275 = vadd.xlane.f32.xlu0 %v2274
      %v2276 = vpop.xlane.xlu0 %2275
      %v2277 = vsel %vm1718, %v2092, 0.0
      %2278 = vadd.xlane.f32.xlu0 %v2277
      %v2279 = vpop.xlane.xlu0 %2278
      %v2280 = vsel %vm1718, %v2094, 0.0
      %2281 = vadd.xlane.f32.xlu0 %v2280
      %v2282 = vpop.xlane.xlu0 %2281
      %v2283 = vsel %vm1718, %v2096, 0.0
      %2284 = vadd.xlane.f32.xlu0 %v2283
      %v2285 = vpop.xlane.xlu0 %2284
      %v2286 = vsel %vm1718, %v2098, 0.0
      %2287 = vadd.xlane.f32.xlu0 %v2286
      %v2288 = vpop.xlane.xlu0 %2287
      %v2289 = vsel %vm1718, %v2100, 0.0
      %2290 = vadd.xlane.f32.xlu0 %v2289
      %v2291 = vpop.xlane.xlu0 %2290
      %v2292 = vsel %vm1718, %v2102, 0.0
      %2293 = vadd.xlane.f32.xlu0 %v2292
      %v2294 = vpop.xlane.xlu0 %2293
      %v2295 = vrcp.pop %v2105
      %v2296 = vrcp.pop %v2108
      %v2297 = vrcp.pop %v2111
      %v2298 = vrcp.pop %v2114
      %v2299 = vrcp.pop %v2117
      %v2300 = vrcp.pop %v2120
      %v2301 = vrcp.pop %v2123
      %v2302 = vrcp.pop %v2126
      %v2303 = vrcp.pop %v2129
      %v2304 = vrcp.pop %v2132
      %v2305 = vrcp.pop %v2135
      %v2306 = vrcp.pop %v2138
      %v2307 = vrcp.pop %v2141
      %v2308 = vrcp.pop %v2144
      %v2309 = vrcp.pop %v2147
      %v2310 = vrcp.pop %v2150
      %v2311 = vrcp.pop %v2153
      %v2312 = vrcp.pop %v2156
      %v2313 = vrcp.pop %v2159
      %v2314 = vrcp.pop %v2162
      %v2315 = vrcp.pop %v2165
      %v2316 = vrcp.pop %v2168
      %v2317 = vrcp.pop %v2171
      %v2318 = vrcp.pop %v2174
      %v2319 = vrcp.pop %v2177
      %v2320 = vrcp.pop %v2180
      %v2321 = vrcp.pop %v2183
      %v2322 = vrcp.pop %v2186
      %v2323 = vrcp.pop %v2189
      %v2324 = vrcp.pop %v2192
      %v2325 = vrcp.pop %v2195
      %v2326 = vrcp.pop %v2198
      %v2327 = vrcp.pop %v2201
      %v2328 = vrcp.pop %v2204
      %v2329 = vrcp.pop %v2207
      %v2330 = vrcp.pop %v2210
      %v2331 = vrcp.pop %v2213
      %v2332 = vrcp.pop %v2216
      %v2333 = vrcp.pop %v2219
      %v2334 = vrcp.pop %v2222
      %v2335 = vrcp.pop %v2225
      %v2336 = vrcp.pop %v2228
      %v2337 = vrcp.pop %v2231
      %v2338 = vrcp.pop %v2234
      %v2339 = vrcp.pop %v2237
      %v2340 = vrcp.pop %v2240
      %v2341 = vrcp.pop %v2243
      %v2342 = vrcp.pop %v2246
      %v2343 = vrcp.pop %v2249
      %v2344 = vrcp.pop %v2252
      %v2345 = vrcp.pop %v2255
      %v2346 = vrcp.pop %v2258
      %v2347 = vrcp.pop %v2261
      %v2348 = vrcp.pop %v2264
      %v2349 = vrcp.pop %v2267
      %v2350 = vrcp.pop %v2270
      %v2351 = vrcp.pop %v2273
      %v2352 = vrcp.pop %v2276
      %v2353 = vrcp.pop %v2279
      %v2354 = vrcp.pop %v2282
      %v2355 = vrcp.pop %v2285
      %v2356 = vrcp.pop %v2288
      %v2357 = vrcp.pop %v2291
      %v2358 = vrcp.pop %v2294
      %v2359 = vmul.f32 %v1976, %v2295
      %v2360 = vmul.f32 %v1978, %v2296
      %v2361 = vmul.f32 %v1980, %v2297
      %v2362 = vmul.f32 %v1982, %v2298
      %v2363 = vmul.f32 %v1984, %v2299
      %v2364 = vmul.f32 %v1986, %v2300
      %v2365 = vmul.f32 %v1988, %v2301
      %v2366 = vmul.f32 %v1990, %v2302
      %v2367 = vmul.f32 %v1992, %v2303
      %v2368 = vmul.f32 %v1994, %v2304
      %v2369 = vmul.f32 %v1996, %v2305
      %v2370 = vmul.f32 %v1998, %v2306
      %v2371 = vmul.f32 %v2000, %v2307
      %v2372 = vmul.f32 %v2002, %v2308
      %v2373 = vmul.f32 %v2004, %v2309
      %v2374 = vmul.f32 %v2006, %v2310
      %v2375 = vmul.f32 %v2008, %v2311
      %v2376 = vmul.f32 %v2010, %v2312
      %v2377 = vmul.f32 %v2012, %v2313
      %v2378 = vmul.f32 %v2014, %v2314
      %v2379 = vmul.f32 %v2016, %v2315
      %v2380 = vmul.f32 %v2018, %v2316
      %v2381 = vmul.f32 %v2020, %v2317
      %v2382 = vmul.f32 %v2022, %v2318
      %v2383 = vmul.f32 %v2024, %v2319
      %v2384 = vmul.f32 %v2026, %v2320
      %v2385 = vmul.f32 %v2028, %v2321
      %v2386 = vmul.f32 %v2030, %v2322
      %v2387 = vmul.f32 %v2032, %v2323
      %v2388 = vmul.f32 %v2034, %v2324
      %v2389 = vmul.f32 %v2036, %v2325
      %v2390 = vmul.f32 %v2038, %v2326
      %v2391 = vmul.f32 %v2040, %v2327
      %v2392 = vmul.f32 %v2042, %v2328
      %v2393 = vmul.f32 %v2044, %v2329
      %v2394 = vmul.f32 %v2046, %v2330
      %v2395 = vmul.f32 %v2048, %v2331
      %v2396 = vmul.f32 %v2050, %v2332
      %v2397 = vmul.f32 %v2052, %v2333
      %v2398 = vmul.f32 %v2054, %v2334
      %v2399 = vmul.f32 %v2056, %v2335
      %v2400 = vmul.f32 %v2058, %v2336
      %v2401 = vmul.f32 %v2060, %v2337
      %v2402 = vmul.f32 %v2062, %v2338
      %v2403 = vmul.f32 %v2064, %v2339
      %v2404 = vmul.f32 %v2066, %v2340
      %v2405 = vmul.f32 %v2068, %v2341
      %v2406 = vmul.f32 %v2070, %v2342
      %v2407 = vmul.f32 %v2072, %v2343
      %v2408 = vmul.f32 %v2074, %v2344
      %v2409 = vmul.f32 %v2076, %v2345
      %v2410 = vmul.f32 %v2078, %v2346
      %v2411 = vmul.f32 %v2080, %v2347
      %v2412 = vmul.f32 %v2082, %v2348
      %v2413 = vmul.f32 %v2084, %v2349
      %v2414 = vmul.f32 %v2086, %v2350
      %v2415 = vmul.f32 %v2088, %v2351
      %v2416 = vmul.f32 %v2090, %v2352
      %v2417 = vmul.f32 %v2092, %v2353
      %v2418 = vmul.f32 %v2094, %v2354
      %v2419 = vmul.f32 %v2096, %v2355
      %v2420 = vmul.f32 %v2098, %v2356
      %v2421 = vmul.f32 %v2100, %v2357
      %v2422 = vmul.f32 %v2102, %v2358
      %v2423 = vpack.c.bf16 %v2360, %v2359
      %v2424 = vpack.c.bf16 %v2362, %v2361
      %v2425 = vpack.c.bf16 %v2364, %v2363
      %v2426 = vpack.c.bf16 %v2366, %v2365
      %v2427 = vpack.c.bf16 %v2368, %v2367
      %v2428 = vpack.c.bf16 %v2370, %v2369
      %v2429 = vpack.c.bf16 %v2372, %v2371
      %v2430 = vpack.c.bf16 %v2374, %v2373
      %v2431 = vpack.c.bf16 %v2376, %v2375
      %v2432 = vpack.c.bf16 %v2378, %v2377
      %v2433 = vpack.c.bf16 %v2380, %v2379
      %v2434 = vpack.c.bf16 %v2382, %v2381
      %v2435 = vpack.c.bf16 %v2384, %v2383
      %v2436 = vpack.c.bf16 %v2386, %v2385
      %v2437 = vpack.c.bf16 %v2388, %v2387
      %v2438 = vpack.c.bf16 %v2390, %v2389
      %v2439 = vpack.c.bf16 %v2392, %v2391
      %v2440 = vpack.c.bf16 %v2394, %v2393
      %v2441 = vpack.c.bf16 %v2396, %v2395
      %v2442 = vpack.c.bf16 %v2398, %v2397
      %v2443 = vpack.c.bf16 %v2400, %v2399
      %v2444 = vpack.c.bf16 %v2402, %v2401
      %v2445 = vpack.c.bf16 %v2404, %v2403
      %v2446 = vpack.c.bf16 %v2406, %v2405
      %v2447 = vpack.c.bf16 %v2408, %v2407
      %v2448 = vpack.c.bf16 %v2410, %v2409
      %v2449 = vpack.c.bf16 %v2412, %v2411
      %v2450 = vpack.c.bf16 %v2414, %v2413
      %v2451 = vpack.c.bf16 %v2416, %v2415
      %v2452 = vpack.c.bf16 %v2418, %v2417
      %v2453 = vpack.c.bf16 %v2420, %v2419
      %v2454 = vpack.c.bf16 %v2422, %v2421
      %v2456 = vsel %vm1718, %v2423, 0
      %v2459 = vsel %vm1718, %v2424, 0
      %v2462 = vsel %vm1718, %v2425, 0
      %v2465 = vsel %vm1718, %v2426, 0
      %2467 = vmatprep.subr.bf16.mxu0 0
      %2468 = vmatpush1.bf16.msra.mxu0 %v727
      %2469 = vmatprep.subr.bf16.mxu0 0
      %2470 = vmatpush1.bf16.msra.mxu0 %v730
      %2471 = vmatprep.subr.bf16.mxu0 0
      %2472 = vmatpush1.bf16.msra.mxu0 %v733
      %2473 = vmatprep.subr.bf16.mxu0 0
      %2474 = vmatpush1.bf16.msra.mxu0 %v736
      %2475 = vmatprep.subr.bf16.mxu0 0
      %2476 = vmatpush1.bf16.msra.mxu0 0
      %2477 = vmatprep.subr.bf16.mxu0 0
      %2478 = vmatpush1.bf16.msra.mxu0 0
      %2479 = vmatprep.subr.bf16.mxu0 0
      %2480 = vmatpush1.bf16.msra.mxu0 0
      %2481 = vmatprep.subr.bf16.mxu0 0
      %2482 = vmatpush1.bf16.msra.mxu0 0
      %2483 = vmatprep.subr.bf16.mxu0 0
      %2484 = vmatpush1.bf16.msra.mxu0 0
      %2485 = vmatprep.subr.bf16.mxu0 0
      %2486 = vmatpush1.bf16.msra.mxu0 0
      %2487 = vmatprep.subr.bf16.mxu0 0
      %2488 = vmatpush1.bf16.msra.mxu0 0
      %2489 = vmatprep.subr.bf16.mxu0 0
      %2490 = vmatpush1.bf16.msra.mxu0 0
      %2491 = vmatprep.subr.bf16.mxu0 0
      %2492 = vmatpush1.bf16.msra.mxu0 0
      %2493 = vmatprep.subr.bf16.mxu0 0
      %2494 = vmatpush1.bf16.msra.mxu0 0
      %2495 = vmatprep.subr.bf16.mxu0 0
      %2496 = vmatpush1.bf16.msra.mxu0 0
      %2497 = vmatprep.subr.bf16.mxu0 0
      %2498 = vmatpush1.bf16.msra.mxu0 0
      %2499 = vmatprep.mubr.bf16.mxu0 0
      %2500 = vmatmul.mubr.bf16.gmra.mrb[0].mxu0 %v2456
      %v2501 = vpop.f32.mrb[0].mxu0
      %v2502 = vadd.f32 0.0, %v2501
      %v2503 = vpop.f32.mrb[0].mxu0
      %v2504 = vpop.f32.mrb[0].mxu0
      %v2505 = vadd.f32 0.0, %v2504
      %v2506 = vpop.f32.mrb[0].mxu0
      %2507 = vmatprep.mubr.bf16.mxu0 0
      %2508 = vmatmul.mubr.bf16.gmra.mrb[0].mxu0 %v2459
      %v2509 = vpop.f32.mrb[0].mxu0
      %v2510 = vadd.f32 0.0, %v2509
      %v2511 = vpop.f32.mrb[0].mxu0
      %v2512 = vpop.f32.mrb[0].mxu0
      %v2513 = vadd.f32 0.0, %v2512
      %v2514 = vpop.f32.mrb[0].mxu0
      %2515 = vmatprep.mubr.bf16.mxu0 0
      %2516 = vmatmul.mubr.bf16.gmra.mrb[0].mxu0 %v2462
      %v2517 = vpop.f32.mrb[0].mxu0
      %v2518 = vadd.f32 0.0, %v2517
      %v2519 = vpop.f32.mrb[0].mxu0
      %v2520 = vpop.f32.mrb[0].mxu0
      %v2521 = vadd.f32 0.0, %v2520
      %v2522 = vpop.f32.mrb[0].mxu0
      %2523 = vmatprep.mubr.bf16.mxu0 0
      %2524 = vmatmul.mubr.bf16.gmra.mrb[0].mxu0 %v2465
      %v2525 = vpop.f32.mrb[0].mxu0
      %v2526 = vadd.f32 0.0, %v2525
      %v2527 = vpop.f32.mrb[0].mxu0
      %v2528 = vpop.f32.mrb[0].mxu0
      %v2529 = vadd.f32 0.0, %v2528
      %v2530 = vpop.f32.mrb[0].mxu0
      %2531 = vdwg.mxu0
      %v2533 = vsel %vm1718, %v2427, 0
      %v2536 = vsel %vm1718, %v2428, 0
      %v2539 = vsel %vm1718, %v2429, 0
      %v2542 = vsel %vm1718, %v2430, 0
      %2544 = vmatprep.subr.bf16.mxu0 0
      %2545 = vmatpush1.bf16.msra.mxu0 %v739
      %2546 = vmatprep.subr.bf16.mxu0 0
      %2547 = vmatpush1.bf16.msra.mxu0 %v742
      %2548 = vmatprep.subr.bf16.mxu0 0
      %2549 = vmatpush1.bf16.msra.mxu0 %v745
      %2550 = vmatprep.subr.bf16.mxu0 0
      %2551 = vmatpush1.bf16.msra.mxu0 %v748
      %2552 = vmatprep.subr.bf16.mxu0 0
      %2553 = vmatpush1.bf16.msra.mxu0 0
      %2554 = vmatprep.subr.bf16.mxu0 0
      %2555 = vmatpush1.bf16.msra.mxu0 0
      %2556 = vmatprep.subr.bf16.mxu0 0
      %2557 = vmatpush1.bf16.msra.mxu0 0
      %2558 = vmatprep.subr.bf16.mxu0 0
      %2559 = vmatpush1.bf16.msra.mxu0 0
      %2560 = vmatprep.subr.bf16.mxu0 0
      %2561 = vmatpush1.bf16.msra.mxu0 0
      %2562 = vmatprep.subr.bf16.mxu0 0
      %2563 = vmatpush1.bf16.msra.mxu0 0
      %2564 = vmatprep.subr.bf16.mxu0 0
      %2565 = vmatpush1.bf16.msra.mxu0 0
      %2566 = vmatprep.subr.bf16.mxu0 0
      %2567 = vmatpush1.bf16.msra.mxu0 0
      %2568 = vmatprep.subr.bf16.mxu0 0
      %2569 = vmatpush1.bf16.msra.mxu0 0
      %2570 = vmatprep.subr.bf16.mxu0 0
      %2571 = vmatpush1.bf16.msra.mxu0 0
      %2572 = vmatprep.subr.bf16.mxu0 0
      %2573 = vmatpush1.bf16.msra.mxu0 0
      %2574 = vmatprep.subr.bf16.mxu0 0
      %2575 = vmatpush1.bf16.msra.mxu0 0
      %2576 = vmatprep.mubr.bf16.mxu0 0
      %2577 = vmatmul.mubr.bf16.gmra.mrb[0].mxu0 %v2533
      %v2578 = vpop.f32.mrb[0].mxu0
      %v2579 = vadd.f32 0.0, %v2578
      %v2580 = vpop.f32.mrb[0].mxu0
      %v2581 = vpop.f32.mrb[0].mxu0
      %v2582 = vadd.f32 0.0, %v2581
      %v2583 = vpop.f32.mrb[0].mxu0
      %2584 = vmatprep.mubr.bf16.mxu0 0
      %2585 = vmatmul.mubr.bf16.gmra.mrb[0].mxu0 %v2536
      %v2586 = vpop.f32.mrb[0].mxu0
      %v2587 = vadd.f32 0.0, %v2586
      %v2588 = vpop.f32.mrb[0].mxu0
      %v2589 = vpop.f32.mrb[0].mxu0
      %v2590 = vadd.f32 0.0, %v2589
      %v2591 = vpop.f32.mrb[0].mxu0
      %2592 = vmatprep.mubr.bf16.mxu0 0
      %2593 = vmatmul.mubr.bf16.gmra.mrb[0].mxu0 %v2539
      %v2594 = vpop.f32.mrb[0].mxu0
      %v2595 = vadd.f32 0.0, %v2594
      %v2596 = vpop.f32.mrb[0].mxu0
      %v2597 = vpop.f32.mrb[0].mxu0
      %v2598 = vadd.f32 0.0, %v2597
      %v2599 = vpop.f32.mrb[0].mxu0
      %2600 = vmatprep.mubr.bf16.mxu0 0
      %2601 = vmatmul.mubr.bf16.gmra.mrb[0].mxu0 %v2542
      %v2602 = vpop.f32.mrb[0].mxu0
      %v2603 = vadd.f32 0.0, %v2602
      %v2604 = vpop.f32.mrb[0].mxu0
      %v2605 = vpop.f32.mrb[0].mxu0
      %v2606 = vadd.f32 0.0, %v2605
      %v2607 = vpop.f32.mrb[0].mxu0
      %2608 = vdwg.mxu0
      %v2610 = vsel %vm1718, %v2431, 0
      %v2613 = vsel %vm1718, %v2432, 0
      %v2616 = vsel %vm1718, %v2433, 0
      %v2619 = vsel %vm1718, %v2434, 0
      %2621 = vmatprep.subr.bf16.mxu0 0
      %2622 = vmatpush1.bf16.msra.mxu0 %v870
      %2623 = vmatprep.subr.bf16.mxu0 0
      %2624 = vmatpush1.bf16.msra.mxu0 %v872
      %2625 = vmatprep.subr.bf16.mxu0 0
      %2626 = vmatpush1.bf16.msra.mxu0 %v874
      %2627 = vmatprep.subr.bf16.mxu0 0
      %2628 = vmatpush1.bf16.msra.mxu0 %v876
      %2629 = vmatprep.subr.bf16.mxu0 0
      %2630 = vmatpush1.bf16.msra.mxu0 0
      %2631 = vmatprep.subr.bf16.mxu0 0
      %2632 = vmatpush1.bf16.msra.mxu0 0
      %2633 = vmatprep.subr.bf16.mxu0 0
      %2634 = vmatpush1.bf16.msra.mxu0 0
      %2635 = vmatprep.subr.bf16.mxu0 0
      %2636 = vmatpush1.bf16.msra.mxu0 0
      %2637 = vmatprep.subr.bf16.mxu0 0
      %2638 = vmatpush1.bf16.msra.mxu0 0
      %2639 = vmatprep.subr.bf16.mxu0 0
      %2640 = vmatpush1.bf16.msra.mxu0 0
      %2641 = vmatprep.subr.bf16.mxu0 0
      %2642 = vmatpush1.bf16.msra.mxu0 0
      %2643 = vmatprep.subr.bf16.mxu0 0
      %2644 = vmatpush1.bf16.msra.mxu0 0
      %2645 = vmatprep.subr.bf16.mxu0 0
      %2646 = vmatpush1.bf16.msra.mxu0 0
      %2647 = vmatprep.subr.bf16.mxu0 0
      %2648 = vmatpush1.bf16.msra.mxu0 0
      %2649 = vmatprep.subr.bf16.mxu0 0
      %2650 = vmatpush1.bf16.msra.mxu0 0
      %2651 = vmatprep.subr.bf16.mxu0 0
      %2652 = vmatpush1.bf16.msra.mxu0 0
      %2653 = vmatprep.mubr.bf16.mxu0 0
      %2654 = vmatmul.mubr.bf16.gmra.mrb[0].mxu0 %v2610
      %v2655 = vpop.f32.mrb[0].mxu0
      %v2656 = vadd.f32 0.0, %v2655
      %v2657 = vpop.f32.mrb[0].mxu0
      %v2658 = vpop.f32.mrb[0].mxu0
      %v2659 = vadd.f32 0.0, %v2658
      %v2660 = vpop.f32.mrb[0].mxu0
      %2661 = vmatprep.mubr.bf16.mxu0 0
      %2662 = vmatmul.mubr.bf16.gmra.mrb[0].mxu0 %v2613
      %v2663 = vpop.f32.mrb[0].mxu0
      %v2664 = vadd.f32 0.0, %v2663
      %v2665 = vpop.f32.mrb[0].mxu0
      %v2666 = vpop.f32.mrb[0].mxu0
      %v2667 = vadd.f32 0.0, %v2666
      %v2668 = vpop.f32.mrb[0].mxu0
      %2669 = vmatprep.mubr.bf16.mxu0 0
      %2670 = vmatmul.mubr.bf16.gmra.mrb[0].mxu0 %v2616
      %v2671 = vpop.f32.mrb[0].mxu0
      %v2672 = vadd.f32 0.0, %v2671
      %v2673 = vpop.f32.mrb[0].mxu0
      %v2674 = vpop.f32.mrb[0].mxu0
      %v2675 = vadd.f32 0.0, %v2674
      %v2676 = vpop.f32.mrb[0].mxu0
      %2677 = vmatprep.mubr.bf16.mxu0 0
      %2678 = vmatmul.mubr.bf16.gmra.mrb[0].mxu0 %v2619
      %v2679 = vpop.f32.mrb[0].mxu0
      %v2680 = vadd.f32 0.0, %v2679
      %v2681 = vpop.f32.mrb[0].mxu0
      %v2682 = vpop.f32.mrb[0].mxu0
      %v2683 = vadd.f32 0.0, %v2682
      %v2684 = vpop.f32.mrb[0].mxu0
      %2685 = vdwg.mxu0
      %v2687 = vsel %vm1718, %v2435, 0
      %v2690 = vsel %vm1718, %v2436, 0
      %v2693 = vsel %vm1718, %v2437, 0
      %v2696 = vsel %vm1718, %v2438, 0
      %2698 = vmatprep.subr.bf16.mxu0 0
      %2699 = vmatpush1.bf16.msra.mxu0 %v878
      %2700 = vmatprep.subr.bf16.mxu0 0
      %2701 = vmatpush1.bf16.msra.mxu0 %v880
      %2702 = vmatprep.subr.bf16.mxu0 0
      %2703 = vmatpush1.bf16.msra.mxu0 %v882
      %2704 = vmatprep.subr.bf16.mxu0 0
      %2705 = vmatpush1.bf16.msra.mxu0 %v884
      %2706 = vmatprep.subr.bf16.mxu0 0
      %2707 = vmatpush1.bf16.msra.mxu0 0
      %2708 = vmatprep.subr.bf16.mxu0 0
      %2709 = vmatpush1.bf16.msra.mxu0 0
      %2710 = vmatprep.subr.bf16.mxu0 0
      %2711 = vmatpush1.bf16.msra.mxu0 0
      %2712 = vmatprep.subr.bf16.mxu0 0
      %2713 = vmatpush1.bf16.msra.mxu0 0
      %2714 = vmatprep.subr.bf16.mxu0 0
      %2715 = vmatpush1.bf16.msra.mxu0 0
      %2716 = vmatprep.subr.bf16.mxu0 0
      %2717 = vmatpush1.bf16.msra.mxu0 0
      %2718 = vmatprep.subr.bf16.mxu0 0
      %2719 = vmatpush1.bf16.msra.mxu0 0
      %2720 = vmatprep.subr.bf16.mxu0 0
      %2721 = vmatpush1.bf16.msra.mxu0 0
      %2722 = vmatprep.subr.bf16.mxu0 0
      %2723 = vmatpush1.bf16.msra.mxu0 0
      %2724 = vmatprep.subr.bf16.mxu0 0
      %2725 = vmatpush1.bf16.msra.mxu0 0
      %2726 = vmatprep.subr.bf16.mxu0 0
      %2727 = vmatpush1.bf16.msra.mxu0 0
      %2728 = vmatprep.subr.bf16.mxu0 0
      %2729 = vmatpush1.bf16.msra.mxu0 0
      %2730 = vmatprep.mubr.bf16.mxu0 0
      %2731 = vmatmul.mubr.bf16.gmra.mrb[0].mxu0 %v2687
      %v2732 = vpop.f32.mrb[0].mxu0
      %v2733 = vadd.f32 0.0, %v2732
      %v2734 = vpop.f32.mrb[0].mxu0
      %v2735 = vpop.f32.mrb[0].mxu0
      %v2736 = vadd.f32 0.0, %v2735
      %v2737 = vpop.f32.mrb[0].mxu0
      %2738 = vmatprep.mubr.bf16.mxu0 0
      %2739 = vmatmul.mubr.bf16.gmra.mrb[0].mxu0 %v2690
      %v2740 = vpop.f32.mrb[0].mxu0
      %v2741 = vadd.f32 0.0, %v2740
      %v2742 = vpop.f32.mrb[0].mxu0
      %v2743 = vpop.f32.mrb[0].mxu0
      %v2744 = vadd.f32 0.0, %v2743
      %v2745 = vpop.f32.mrb[0].mxu0
      %2746 = vmatprep.mubr.bf16.mxu0 0
      %2747 = vmatmul.mubr.bf16.gmra.mrb[0].mxu0 %v2693
      %v2748 = vpop.f32.mrb[0].mxu0
      %v2749 = vadd.f32 0.0, %v2748
      %v2750 = vpop.f32.mrb[0].mxu0
      %v2751 = vpop.f32.mrb[0].mxu0
      %v2752 = vadd.f32 0.0, %v2751
      %v2753 = vpop.f32.mrb[0].mxu0
      %2754 = vmatprep.mubr.bf16.mxu0 0
      %2755 = vmatmul.mubr.bf16.gmra.mrb[0].mxu0 %v2696
      %v2756 = vpop.f32.mrb[0].mxu0
      %v2757 = vadd.f32 0.0, %v2756
      %v2758 = vpop.f32.mrb[0].mxu0
      %v2759 = vpop.f32.mrb[0].mxu0
      %v2760 = vadd.f32 0.0, %v2759
      %v2761 = vpop.f32.mrb[0].mxu0
      %2762 = vdwg.mxu0
      %v2764 = vsel %vm1718, %v2439, 0
      %v2767 = vsel %vm1718, %v2440, 0
      %v2770 = vsel %vm1718, %v2441, 0
      %v2773 = vsel %vm1718, %v2442, 0
      %2775 = vmatprep.subr.bf16.mxu0 0
      %2776 = vmatpush1.bf16.msra.mxu0 %v894
      %2777 = vmatprep.subr.bf16.mxu0 0
      %2778 = vmatpush1.bf16.msra.mxu0 %v896
      %2779 = vmatprep.subr.bf16.mxu0 0
      %2780 = vmatpush1.bf16.msra.mxu0 %v898
      %2781 = vmatprep.subr.bf16.mxu0 0
      %2782 = vmatpush1.bf16.msra.mxu0 %v900
      %2783 = vmatprep.subr.bf16.mxu0 0
      %2784 = vmatpush1.bf16.msra.mxu0 0
      %2785 = vmatprep.subr.bf16.mxu0 0
      %2786 = vmatpush1.bf16.msra.mxu0 0
      %2787 = vmatprep.subr.bf16.mxu0 0
      %2788 = vmatpush1.bf16.msra.mxu0 0
      %2789 = vmatprep.subr.bf16.mxu0 0
      %2790 = vmatpush1.bf16.msra.mxu0 0
      %2791 = vmatprep.subr.bf16.mxu0 0
      %2792 = vmatpush1.bf16.msra.mxu0 0
      %2793 = vmatprep.subr.bf16.mxu0 0
      %2794 = vmatpush1.bf16.msra.mxu0 0
      %2795 = vmatprep.subr.bf16.mxu0 0
      %2796 = vmatpush1.bf16.msra.mxu0 0
      %2797 = vmatprep.subr.bf16.mxu0 0
      %2798 = vmatpush1.bf16.msra.mxu0 0
      %2799 = vmatprep.subr.bf16.mxu0 0
      %2800 = vmatpush1.bf16.msra.mxu0 0
      %2801 = vmatprep.subr.bf16.mxu0 0
      %2802 = vmatpush1.bf16.msra.mxu0 0
      %2803 = vmatprep.subr.bf16.mxu0 0
      %2804 = vmatpush1.bf16.msra.mxu0 0
      %2805 = vmatprep.subr.bf16.mxu0 0
      %2806 = vmatpush1.bf16.msra.mxu0 0
      %2807 = vmatprep.mubr.bf16.mxu0 0
      %2808 = vmatmul.mubr.bf16.gmra.mrb[0].mxu0 %v2764
      %v2809 = vpop.f32.mrb[0].mxu0
      %v2810 = vadd.f32 0.0, %v2809
      %v2811 = vpop.f32.mrb[0].mxu0
      %v2812 = vpop.f32.mrb[0].mxu0
      %v2813 = vadd.f32 0.0, %v2812
      %v2814 = vpop.f32.mrb[0].mxu0
      %2815 = vmatprep.mubr.bf16.mxu0 0
      %2816 = vmatmul.mubr.bf16.gmra.mrb[0].mxu0 %v2767
      %v2817 = vpop.f32.mrb[0].mxu0
      %v2818 = vadd.f32 0.0, %v2817
      %v2819 = vpop.f32.mrb[0].mxu0
      %v2820 = vpop.f32.mrb[0].mxu0
      %v2821 = vadd.f32 0.0, %v2820
      %v2822 = vpop.f32.mrb[0].mxu0
      %2823 = vmatprep.mubr.bf16.mxu0 0
      %2824 = vmatmul.mubr.bf16.gmra.mrb[0].mxu0 %v2770
      %v2825 = vpop.f32.mrb[0].mxu0
      %v2826 = vadd.f32 0.0, %v2825
      %v2827 = vpop.f32.mrb[0].mxu0
      %v2828 = vpop.f32.mrb[0].mxu0
      %v2829 = vadd.f32 0.0, %v2828
      %v2830 = vpop.f32.mrb[0].mxu0
      %2831 = vmatprep.mubr.bf16.mxu0 0
      %2832 = vmatmul.mubr.bf16.gmra.mrb[0].mxu0 %v2773
      %v2833 = vpop.f32.mrb[0].mxu0
      %v2834 = vadd.f32 0.0, %v2833
      %v2835 = vpop.f32.mrb[0].mxu0
      %v2836 = vpop.f32.mrb[0].mxu0
      %v2837 = vadd.f32 0.0, %v2836
      %v2838 = vpop.f32.mrb[0].mxu0
      %2839 = vdwg.mxu0
      %v2841 = vsel %vm1718, %v2443, 0
      %v2844 = vsel %vm1718, %v2444, 0
      %v2847 = vsel %vm1718, %v2445, 0
      %v2850 = vsel %vm1718, %v2446, 0
      %2852 = vmatprep.subr.bf16.mxu0 0
      %2853 = vmatpush1.bf16.msra.mxu0 %v902
      %2854 = vmatprep.subr.bf16.mxu0 0
      %2855 = vmatpush1.bf16.msra.mxu0 %v904
      %2856 = vmatprep.subr.bf16.mxu0 0
      %2857 = vmatpush1.bf16.msra.mxu0 %v906
      %2858 = vmatprep.subr.bf16.mxu0 0
      %2859 = vmatpush1.bf16.msra.mxu0 %v908
      %2860 = vmatprep.subr.bf16.mxu0 0
      %2861 = vmatpush1.bf16.msra.mxu0 0
      %2862 = vmatprep.subr.bf16.mxu0 0
      %2863 = vmatpush1.bf16.msra.mxu0 0
      %2864 = vmatprep.subr.bf16.mxu0 0
      %2865 = vmatpush1.bf16.msra.mxu0 0
      %2866 = vmatprep.subr.bf16.mxu0 0
      %2867 = vmatpush1.bf16.msra.mxu0 0
      %2868 = vmatprep.subr.bf16.mxu0 0
      %2869 = vmatpush1.bf16.msra.mxu0 0
      %2870 = vmatprep.subr.bf16.mxu0 0
      %2871 = vmatpush1.bf16.msra.mxu0 0
      %2872 = vmatprep.subr.bf16.mxu0 0
      %2873 = vmatpush1.bf16.msra.mxu0 0
      %2874 = vmatprep.subr.bf16.mxu0 0
      %2875 = vmatpush1.bf16.msra.mxu0 0
      %2876 = vmatprep.subr.bf16.mxu0 0
      %2877 = vmatpush1.bf16.msra.mxu0 0
      %2878 = vmatprep.subr.bf16.mxu0 0
      %2879 = vmatpush1.bf16.msra.mxu0 0
      %2880 = vmatprep.subr.bf16.mxu0 0
      %2881 = vmatpush1.bf16.msra.mxu0 0
      %2882 = vmatprep.subr.bf16.mxu0 0
      %2883 = vmatpush1.bf16.msra.mxu0 0
      %2884 = vmatprep.mubr.bf16.mxu0 0
      %2885 = vmatmul.mubr.bf16.gmra.mrb[0].mxu0 %v2841
      %v2886 = vpop.f32.mrb[0].mxu0
      %v2887 = vadd.f32 0.0, %v2886
      %v2888 = vpop.f32.mrb[0].mxu0
      %v2889 = vpop.f32.mrb[0].mxu0
      %v2890 = vadd.f32 0.0, %v2889
      %v2891 = vpop.f32.mrb[0].mxu0
      %2892 = vmatprep.mubr.bf16.mxu0 0
      %2893 = vmatmul.mubr.bf16.gmra.mrb[0].mxu0 %v2844
      %v2894 = vpop.f32.mrb[0].mxu0
      %v2895 = vadd.f32 0.0, %v2894
      %v2896 = vpop.f32.mrb[0].mxu0
      %v2897 = vpop.f32.mrb[0].mxu0
      %v2898 = vadd.f32 0.0, %v2897
      %v2899 = vpop.f32.mrb[0].mxu0
      %2900 = vmatprep.mubr.bf16.mxu0 0
      %2901 = vmatmul.mubr.bf16.gmra.mrb[0].mxu0 %v2847
      %v2902 = vpop.f32.mrb[0].mxu0
      %v2903 = vadd.f32 0.0, %v2902
      %v2904 = vpop.f32.mrb[0].mxu0
      %v2905 = vpop.f32.mrb[0].mxu0
      %v2906 = vadd.f32 0.0, %v2905
      %v2907 = vpop.f32.mrb[0].mxu0
      %2908 = vmatprep.mubr.bf16.mxu0 0
      %2909 = vmatmul.mubr.bf16.gmra.mrb[0].mxu0 %v2850
      %v2910 = vpop.f32.mrb[0].mxu0
      %v2911 = vadd.f32 0.0, %v2910
      %v2912 = vpop.f32.mrb[0].mxu0
      %v2913 = vpop.f32.mrb[0].mxu0
      %v2914 = vadd.f32 0.0, %v2913
      %v2915 = vpop.f32.mrb[0].mxu0
      %2916 = vdwg.mxu0
      %v2918 = vsel %vm1718, %v2447, 0
      %v2921 = vsel %vm1718, %v2448, 0
      %v2924 = vsel %vm1718, %v2449, 0
      %v2927 = vsel %vm1718, %v2450, 0
      %2929 = vmatprep.subr.bf16.mxu0 0
      %2930 = vmatpush1.bf16.msra.mxu0 %v918
      %2931 = vmatprep.subr.bf16.mxu0 0
      %2932 = vmatpush1.bf16.msra.mxu0 %v920
      %2933 = vmatprep.subr.bf16.mxu0 0
      %2934 = vmatpush1.bf16.msra.mxu0 %v922
      %2935 = vmatprep.subr.bf16.mxu0 0
      %2936 = vmatpush1.bf16.msra.mxu0 %v924
      %2937 = vmatprep.subr.bf16.mxu0 0
      %2938 = vmatpush1.bf16.msra.mxu0 0
      %2939 = vmatprep.subr.bf16.mxu0 0
      %2940 = vmatpush1.bf16.msra.mxu0 0
      %2941 = vmatprep.subr.bf16.mxu0 0
      %2942 = vmatpush1.bf16.msra.mxu0 0
      %2943 = vmatprep.subr.bf16.mxu0 0
      %2944 = vmatpush1.bf16.msra.mxu0 0
      %2945 = vmatprep.subr.bf16.mxu0 0
      %2946 = vmatpush1.bf16.msra.mxu0 0
      %2947 = vmatprep.subr.bf16.mxu0 0
      %2948 = vmatpush1.bf16.msra.mxu0 0
      %2949 = vmatprep.subr.bf16.mxu0 0
      %2950 = vmatpush1.bf16.msra.mxu0 0
      %2951 = vmatprep.subr.bf16.mxu0 0
      %2952 = vmatpush1.bf16.msra.mxu0 0
      %2953 = vmatprep.subr.bf16.mxu0 0
      %2954 = vmatpush1.bf16.msra.mxu0 0
      %2955 = vmatprep.subr.bf16.mxu0 0
      %2956 = vmatpush1.bf16.msra.mxu0 0
      %2957 = vmatprep.subr.bf16.mxu0 0
      %2958 = vmatpush1.bf16.msra.mxu0 0
      %2959 = vmatprep.subr.bf16.mxu0 0
      %2960 = vmatpush1.bf16.msra.mxu0 0
      %2961 = vmatprep.mubr.bf16.mxu0 0
      %2962 = vmatmul.mubr.bf16.gmra.mrb[0].mxu0 %v2918
      %v2963 = vpop.f32.mrb[0].mxu0
      %v2964 = vadd.f32 0.0, %v2963
      %v2965 = vpop.f32.mrb[0].mxu0
      %v2966 = vpop.f32.mrb[0].mxu0
      %v2967 = vadd.f32 0.0, %v2966
      %v2968 = vpop.f32.mrb[0].mxu0
      %2969 = vmatprep.mubr.bf16.mxu0 0
      %2970 = vmatmul.mubr.bf16.gmra.mrb[0].mxu0 %v2921
      %v2971 = vpop.f32.mrb[0].mxu0
      %v2972 = vadd.f32 0.0, %v2971
      %v2973 = vpop.f32.mrb[0].mxu0
      %v2974 = vpop.f32.mrb[0].mxu0
      %v2975 = vadd.f32 0.0, %v2974
      %v2976 = vpop.f32.mrb[0].mxu0
      %2977 = vmatprep.mubr.bf16.mxu0 0
      %2978 = vmatmul.mubr.bf16.gmra.mrb[0].mxu0 %v2924
      %v2979 = vpop.f32.mrb[0].mxu0
      %v2980 = vadd.f32 0.0, %v2979
      %v2981 = vpop.f32.mrb[0].mxu0
      %v2982 = vpop.f32.mrb[0].mxu0
      %v2983 = vadd.f32 0.0, %v2982
      %v2984 = vpop.f32.mrb[0].mxu0
      %2985 = vmatprep.mubr.bf16.mxu0 0
      %2986 = vmatmul.mubr.bf16.gmra.mrb[0].mxu0 %v2927
      %v2987 = vpop.f32.mrb[0].mxu0
      %v2988 = vadd.f32 0.0, %v2987
      %v2989 = vpop.f32.mrb[0].mxu0
      %v2990 = vpop.f32.mrb[0].mxu0
      %v2991 = vadd.f32 0.0, %v2990
      %v2992 = vpop.f32.mrb[0].mxu0
      %2993 = vdwg.mxu0
      %v2995 = vsel %vm1718, %v2451, 0
      %v2998 = vsel %vm1718, %v2452, 0
      %v3001 = vsel %vm1718, %v2453, 0
      %v3004 = vsel %vm1718, %v2454, 0
      %3006 = vmatprep.subr.bf16.mxu0 0
      %3007 = vmatpush1.bf16.msra.mxu0 %v926
      %3008 = vmatprep.subr.bf16.mxu0 0
      %3009 = vmatpush1.bf16.msra.mxu0 %v928
      %3010 = vmatprep.subr.bf16.mxu0 0
      %3011 = vmatpush1.bf16.msra.mxu0 %v930
      %3012 = vmatprep.subr.bf16.mxu0 0
      %3013 = vmatpush1.bf16.msra.mxu0 %v932
      %3014 = vmatprep.subr.bf16.mxu0 0
      %3015 = vmatpush1.bf16.msra.mxu0 0
      %3016 = vmatprep.subr.bf16.mxu0 0
      %3017 = vmatpush1.bf16.msra.mxu0 0
      %3018 = vmatprep.subr.bf16.mxu0 0
      %3019 = vmatpush1.bf16.msra.mxu0 0
      %3020 = vmatprep.subr.bf16.mxu0 0
      %3021 = vmatpush1.bf16.msra.mxu0 0
      %3022 = vmatprep.subr.bf16.mxu0 0
      %3023 = vmatpush1.bf16.msra.mxu0 0
      %3024 = vmatprep.subr.bf16.mxu0 0
      %3025 = vmatpush1.bf16.msra.mxu0 0
      %3026 = vmatprep.subr.bf16.mxu0 0
      %3027 = vmatpush1.bf16.msra.mxu0 0
      %3028 = vmatprep.subr.bf16.mxu0 0
      %3029 = vmatpush1.bf16.msra.mxu0 0
      %3030 = vmatprep.subr.bf16.mxu0 0
      %3031 = vmatpush1.bf16.msra.mxu0 0
      %3032 = vmatprep.subr.bf16.mxu0 0
      %3033 = vmatpush1.bf16.msra.mxu0 0
      %3034 = vmatprep.subr.bf16.mxu0 0
      %3035 = vmatpush1.bf16.msra.mxu0 0
      %3036 = vmatprep.subr.bf16.mxu0 0
      %3037 = vmatpush1.bf16.msra.mxu0 0
      %3038 = vmatprep.mubr.bf16.mxu0 0
      %3039 = vmatmul.mubr.bf16.gmra.mrb[0].mxu0 %v2995
      %v3040 = vpop.f32.mrb[0].mxu0
      %v3041 = vadd.f32 0.0, %v3040
      %v3042 = vpop.f32.mrb[0].mxu0
      %v3043 = vpop.f32.mrb[0].mxu0
      %v3044 = vadd.f32 0.0, %v3043
      %v3045 = vpop.f32.mrb[0].mxu0
      %3046 = vmatprep.mubr.bf16.mxu0 0
      %3047 = vmatmul.mubr.bf16.gmra.mrb[0].mxu0 %v2998
      %v3048 = vpop.f32.mrb[0].mxu0
      %v3049 = vadd.f32 0.0, %v3048
      %v3050 = vpop.f32.mrb[0].mxu0
      %v3051 = vpop.f32.mrb[0].mxu0
      %v3052 = vadd.f32 0.0, %v3051
      %v3053 = vpop.f32.mrb[0].mxu0
      %3054 = vmatprep.mubr.bf16.mxu0 0
      %3055 = vmatmul.mubr.bf16.gmra.mrb[0].mxu0 %v3001
      %v3056 = vpop.f32.mrb[0].mxu0
      %v3057 = vadd.f32 0.0, %v3056
      %v3058 = vpop.f32.mrb[0].mxu0
      %v3059 = vpop.f32.mrb[0].mxu0
      %v3060 = vadd.f32 0.0, %v3059
      %v3061 = vpop.f32.mrb[0].mxu0
      %3062 = vmatprep.mubr.bf16.mxu0 0
      %3063 = vmatmul.mubr.bf16.gmra.mrb[0].mxu0 %v3004
      %v3064 = vpop.f32.mrb[0].mxu0
      %v3065 = vadd.f32 0.0, %v3064
      %v3066 = vpop.f32.mrb[0].mxu0
      %v3067 = vpop.f32.mrb[0].mxu0
      %v3068 = vadd.f32 0.0, %v3067
      %v3069 = vpop.f32.mrb[0].mxu0
      %3070 = vdwg.mxu0
      %3087 = vrot.lane.b32.xlu0 %v2656, 32
      %v3088 = vpop.permute.xlu0 %3087
      %3089 = vrot.lane.b32.xlu0 %v2659, 32
      %v3090 = vpop.permute.xlu0 %3089
      %3091 = vrot.lane.b32.xlu0 %v2664, 32
      %v3092 = vpop.permute.xlu0 %3091
      %3093 = vrot.lane.b32.xlu0 %v2667, 32
      %v3094 = vpop.permute.xlu0 %3093
      %3095 = vrot.lane.b32.xlu0 %v2672, 32
      %v3096 = vpop.permute.xlu0 %3095
      %3097 = vrot.lane.b32.xlu0 %v2675, 32
      %v3098 = vpop.permute.xlu0 %3097
      %3099 = vrot.lane.b32.xlu0 %v2680, 32
      %v3100 = vpop.permute.xlu0 %3099
      %3101 = vrot.lane.b32.xlu0 %v2683, 32
      %v3102 = vpop.permute.xlu0 %3101
      %3103 = vrot.lane.b32.xlu0 %v2733, 32
      %v3104 = vpop.permute.xlu0 %3103
      %3105 = vrot.lane.b32.xlu0 %v2736, 32
      %v3106 = vpop.permute.xlu0 %3105
      %3107 = vrot.lane.b32.xlu0 %v2741, 32
      %v3108 = vpop.permute.xlu0 %3107
      %3109 = vrot.lane.b32.xlu0 %v2744, 32
      %v3110 = vpop.permute.xlu0 %3109
      %3111 = vrot.lane.b32.xlu0 %v2749, 32
      %v3112 = vpop.permute.xlu0 %3111
      %3113 = vrot.lane.b32.xlu0 %v2752, 32
      %v3114 = vpop.permute.xlu0 %3113
      %3115 = vrot.lane.b32.xlu0 %v2757, 32
      %v3116 = vpop.permute.xlu0 %3115
      %3117 = vrot.lane.b32.xlu0 %v2760, 32
      %v3118 = vpop.permute.xlu0 %3117
      %3151 = vrot.lane.b32.xlu0 %v2810, 64
      %v3152 = vpop.permute.xlu0 %3151
      %3153 = vrot.lane.b32.xlu0 %v2813, 64
      %v3154 = vpop.permute.xlu0 %3153
      %3155 = vrot.lane.b32.xlu0 %v2818, 64
      %v3156 = vpop.permute.xlu0 %3155
      %3157 = vrot.lane.b32.xlu0 %v2821, 64
      %v3158 = vpop.permute.xlu0 %3157
      %3159 = vrot.lane.b32.xlu0 %v2826, 64
      %v3160 = vpop.permute.xlu0 %3159
      %3161 = vrot.lane.b32.xlu0 %v2829, 64
      %v3162 = vpop.permute.xlu0 %3161
      %3163 = vrot.lane.b32.xlu0 %v2834, 64
      %v3164 = vpop.permute.xlu0 %3163
      %3165 = vrot.lane.b32.xlu0 %v2837, 64
      %v3166 = vpop.permute.xlu0 %3165
      %3167 = vrot.lane.b32.xlu0 %v2887, 64
      %v3168 = vpop.permute.xlu0 %3167
      %3169 = vrot.lane.b32.xlu0 %v2890, 64
      %v3170 = vpop.permute.xlu0 %3169
      %3171 = vrot.lane.b32.xlu0 %v2895, 64
      %v3172 = vpop.permute.xlu0 %3171
      %3173 = vrot.lane.b32.xlu0 %v2898, 64
      %v3174 = vpop.permute.xlu0 %3173
      %3175 = vrot.lane.b32.xlu0 %v2903, 64
      %v3176 = vpop.permute.xlu0 %3175
      %3177 = vrot.lane.b32.xlu0 %v2906, 64
      %v3178 = vpop.permute.xlu0 %3177
      %3179 = vrot.lane.b32.xlu0 %v2911, 64
      %v3180 = vpop.permute.xlu0 %3179
      %3181 = vrot.lane.b32.xlu0 %v2914, 64
      %v3182 = vpop.permute.xlu0 %3181
      %3215 = vrot.lane.b32.xlu0 %v2964, 96
      %v3216 = vpop.permute.xlu0 %3215
      %3217 = vrot.lane.b32.xlu0 %v2967, 96
      %v3218 = vpop.permute.xlu0 %3217
      %3219 = vrot.lane.b32.xlu0 %v2972, 96
      %v3220 = vpop.permute.xlu0 %3219
      %3221 = vrot.lane.b32.xlu0 %v2975, 96
      %v3222 = vpop.permute.xlu0 %3221
      %3223 = vrot.lane.b32.xlu0 %v2980, 96
      %v3224 = vpop.permute.xlu0 %3223
      %3225 = vrot.lane.b32.xlu0 %v2983, 96
      %v3226 = vpop.permute.xlu0 %3225
      %3227 = vrot.lane.b32.xlu0 %v2988, 96
      %v3228 = vpop.permute.xlu0 %3227
      %3229 = vrot.lane.b32.xlu0 %v2991, 96
      %v3230 = vpop.permute.xlu0 %3229
      %3231 = vrot.lane.b32.xlu0 %v3041, 96
      %v3232 = vpop.permute.xlu0 %3231
      %3233 = vrot.lane.b32.xlu0 %v3044, 96
      %v3234 = vpop.permute.xlu0 %3233
      %3235 = vrot.lane.b32.xlu0 %v3049, 96
      %v3236 = vpop.permute.xlu0 %3235
      %3237 = vrot.lane.b32.xlu0 %v3052, 96
      %v3238 = vpop.permute.xlu0 %3237
      %3239 = vrot.lane.b32.xlu0 %v3057, 96
      %v3240 = vpop.permute.xlu0 %3239
      %3241 = vrot.lane.b32.xlu0 %v3060, 96
      %v3242 = vpop.permute.xlu0 %3241
      %3243 = vrot.lane.b32.xlu0 %v3065, 96
      %v3244 = vpop.permute.xlu0 %3243
      %3245 = vrot.lane.b32.xlu0 %v3068, 96
      %v3246 = vpop.permute.xlu0 %3245
      %v3263 = vsel %vm941, %v2502, %v3088
      %v3264 = vsel %vm941, %v2505, %v3090
      %v3265 = vsel %vm941, %v2510, %v3092
      %v3266 = vsel %vm941, %v2513, %v3094
      %v3267 = vsel %vm941, %v2518, %v3096
      %v3268 = vsel %vm941, %v2521, %v3098
      %v3269 = vsel %vm941, %v2526, %v3100
      %v3270 = vsel %vm941, %v2529, %v3102
      %v3271 = vsel %vm941, %v2579, %v3104
      %v3272 = vsel %vm941, %v2582, %v3106
      %v3273 = vsel %vm941, %v2587, %v3108
      %v3274 = vsel %vm941, %v2590, %v3110
      %v3275 = vsel %vm941, %v2595, %v3112
      %v3276 = vsel %vm941, %v2598, %v3114
      %v3277 = vsel %vm941, %v2603, %v3116
      %v3278 = vsel %vm941, %v2606, %v3118
      %v3279 = vsel %vm1718, %v3263, %v3152
      %v3280 = vsel %vm1718, %v3264, %v3154
      %v3281 = vsel %vm1718, %v3265, %v3156
      %v3282 = vsel %vm1718, %v3266, %v3158
      %v3283 = vsel %vm1718, %v3267, %v3160
      %v3284 = vsel %vm1718, %v3268, %v3162
      %v3285 = vsel %vm1718, %v3269, %v3164
      %v3286 = vsel %vm1718, %v3270, %v3166
      %v3287 = vsel %vm1718, %v3271, %v3168
      %v3288 = vsel %vm1718, %v3272, %v3170
      %v3289 = vsel %vm1718, %v3273, %v3172
      %v3290 = vsel %vm1718, %v3274, %v3174
      %v3291 = vsel %vm1718, %v3275, %v3176
      %v3292 = vsel %vm1718, %v3276, %v3178
      %v3293 = vsel %vm1718, %v3277, %v3180
      %v3294 = vsel %vm1718, %v3278, %v3182
      %vm3295 = vcmask 785408
      %v3296 = vsel %vm3295, %v3279, %v3216
      %v3297 = vsel %vm3295, %v3280, %v3218
      %v3298 = vsel %vm3295, %v3281, %v3220
      %v3299 = vsel %vm3295, %v3282, %v3222
      %v3300 = vsel %vm3295, %v3283, %v3224
      %v3301 = vsel %vm3295, %v3284, %v3226
      %v3302 = vsel %vm3295, %v3285, %v3228
      %v3303 = vsel %vm3295, %v3286, %v3230
      %v3304 = vsel %vm3295, %v3287, %v3232
      %v3305 = vsel %vm3295, %v3288, %v3234
      %v3306 = vsel %vm3295, %v3289, %v3236
      %v3307 = vsel %vm3295, %v3290, %v3238
      %v3308 = vsel %vm3295, %v3291, %v3240
      %v3309 = vsel %vm3295, %v3292, %v3242
      %v3310 = vsel %vm3295, %v3293, %v3244
      %v3311 = vsel %vm3295, %v3294, %v3246
      %v3312 = vpack.c.bf16 %v3297, %v3296
      %v3313 = vpack.c.bf16 %v3299, %v3298
      %v3314 = vpack.c.bf16 %v3301, %v3300
      %v3315 = vpack.c.bf16 %v3303, %v3302
      %v3316 = vpack.c.bf16 %v3305, %v3304
      %v3317 = vpack.c.bf16 %v3307, %v3306
      %v3318 = vpack.c.bf16 %v3309, %v3308
      %v3319 = vpack.c.bf16 %v3311, %v3310
      %v3320 = vld [vmem:[%s3] sm:$0xf]
      %v3321 = vld [vmem:[%s3 + $0x4] sm:$0xf]
      %v3322 = vld [vmem:[%s3 + $0x8] sm:$0xf]
      %v3323 = vld [vmem:[%s3 + $0xc] sm:$0xf]
      %v3324 = vld [vmem:[%s3 + $0x10] sm:$0xf]
      %v3325 = vld [vmem:[%s3 + $0x14] sm:$0xf]
      %v3326 = vld [vmem:[%s3 + $0x18] sm:$0xf]
      %v3327 = vld [vmem:[%s3 + $0x1c] sm:$0xf]
      %v3328 = vld [vmem:[%s3 + $0x20] sm:$0xf]
      %v3329 = vld [vmem:[%s3 + $0x24] sm:$0xf]
      %v3330 = vld [vmem:[%s3 + $0x28] sm:$0xf]
      %v3331 = vld [vmem:[%s3 + $0x2c] sm:$0xf]
      %v3332 = vld [vmem:[%s3 + $0x30] sm:$0xf]
      %v3333 = vld [vmem:[%s3 + $0x34] sm:$0xf]
      %v3334 = vld [vmem:[%s3 + $0x38] sm:$0xf]
      %v3335 = vld [vmem:[%s3 + $0x3c] sm:$0xf]
      %v3336 = vld [vmem:[%s4] sm:$0x1]
      %v3338 = vlaneseq
      %v3339 = vshrl.u32 %v3338, 7
      %v3340 = vsub.s32 0, %v3339
      %v3341 = vrot.slane %v3336, %v3340
      %v3359 = vunpack.c.l.b16 %v3320
      %v3360 = vunpack.c.l.b16 %v3321
      %v3361 = vunpack.c.l.b16 %v3322
      %v3362 = vunpack.c.l.b16 %v3323
      %v3363 = vunpack.c.l.b16 %v3324
      %v3364 = vunpack.c.l.b16 %v3325
      %v3365 = vunpack.c.l.b16 %v3326
      %v3366 = vunpack.c.l.b16 %v3327
      %v3367 = vunpack.c.l.b16 %v3328
      %v3368 = vunpack.c.l.b16 %v3329
      %v3369 = vunpack.c.l.b16 %v3330
      %v3370 = vunpack.c.l.b16 %v3331
      %v3371 = vunpack.c.l.b16 %v3332
      %v3372 = vunpack.c.l.b16 %v3333
      %v3373 = vunpack.c.l.b16 %v3334
      %v3374 = vunpack.c.l.b16 %v3335
      %v3375 = vpack.c.b16 %v3360, %v3359
      %v3376 = vpack.c.b16 %v3362, %v3361
      %v3377 = vpack.c.b16 %v3364, %v3363
      %v3378 = vpack.c.b16 %v3366, %v3365
      %v3379 = vpack.c.b16 %v3368, %v3367
      %v3380 = vpack.c.b16 %v3370, %v3369
      %v3381 = vpack.c.b16 %v3372, %v3371
      %v3382 = vpack.c.b16 %v3374, %v3373
      %3391 = vmatprep.subr.bf16.mxu0 0
      %3392 = vmatpush1.bf16.msra.mxu0 %v3375
      %3393 = vmatprep.subr.bf16.mxu0 0
      %3394 = vmatpush1.bf16.msra.mxu0 %v3376
      %3395 = vmatprep.subr.bf16.mxu0 0
      %3396 = vmatpush1.bf16.msra.mxu0 %v3377
      %3397 = vmatprep.subr.bf16.mxu0 0
      %3398 = vmatpush1.bf16.msra.mxu0 %v3378
      %3399 = vmatprep.subr.bf16.mxu0 0
      %3400 = vmatpush1.bf16.msra.mxu0 %v3379
      %3401 = vmatprep.subr.bf16.mxu0 0
      %3402 = vmatpush1.bf16.msra.mxu0 %v3380
      %3403 = vmatprep.subr.bf16.mxu0 0
      %3404 = vmatpush1.bf16.msra.mxu0 %v3381
      %3405 = vmatprep.subr.bf16.mxu0 0
      %3406 = vmatpush1.bf16.msra.mxu0 %v3382
      %3407 = vmatprep.subr.bf16.mxu0 0
      %3408 = vmatpush1.bf16.msra.mxu0 0
      %3409 = vmatprep.subr.bf16.mxu0 0
      %3410 = vmatpush1.bf16.msra.mxu0 0
      %3411 = vmatprep.subr.bf16.mxu0 0
      %3412 = vmatpush1.bf16.msra.mxu0 0
      %3413 = vmatprep.subr.bf16.mxu0 0
      %3414 = vmatpush1.bf16.msra.mxu0 0
      %3415 = vmatprep.subr.bf16.mxu0 0
      %3416 = vmatpush1.bf16.msra.mxu0 0
      %3417 = vmatprep.subr.bf16.mxu0 0
      %3418 = vmatpush1.bf16.msra.mxu0 0
      %3419 = vmatprep.subr.bf16.mxu0 0
      %3420 = vmatpush1.bf16.msra.mxu0 0
      %3421 = vmatprep.subr.bf16.mxu0 0
      %3422 = vmatpush1.bf16.msra.mxu0 0
      %3423 = vmatprep.mubr.bf16.mxu0 0
      %3424 = vmatmul.mubr.bf16.gmra.mrb[0].mxu0 %v3312
      %v3425 = vpop.f32.mrb[0].mxu0
      %v3426 = vadd.f32 %v3341, %v3425
      %v3427 = vpop.f32.mrb[0].mxu0
      %v3428 = vpop.f32.mrb[0].mxu0
      %v3429 = vadd.f32 %v3341, %v3428
      %v3430 = vpop.f32.mrb[0].mxu0
      %3431 = vmatprep.mubr.bf16.mxu0 0
      %3432 = vmatmul.mubr.bf16.gmra.mrb[0].mxu0 %v3313
      %v3433 = vpop.f32.mrb[0].mxu0
      %v3434 = vadd.f32 %v3341, %v3433
      %v3435 = vpop.f32.mrb[0].mxu0
      %v3436 = vpop.f32.mrb[0].mxu0
      %v3437 = vadd.f32 %v3341, %v3436
      %v3438 = vpop.f32.mrb[0].mxu0
      %3439 = vmatprep.mubr.bf16.mxu0 0
      %3440 = vmatmul.mubr.bf16.gmra.mrb[0].mxu0 %v3314
      %v3441 = vpop.f32.mrb[0].mxu0
      %v3442 = vadd.f32 %v3341, %v3441
      %v3443 = vpop.f32.mrb[0].mxu0
      %v3444 = vpop.f32.mrb[0].mxu0
      %v3445 = vadd.f32 %v3341, %v3444
      %v3446 = vpop.f32.mrb[0].mxu0
      %3447 = vmatprep.mubr.bf16.mxu0 0
      %3448 = vmatmul.mubr.bf16.gmra.mrb[0].mxu0 %v3315
      %v3449 = vpop.f32.mrb[0].mxu0
      %v3450 = vadd.f32 %v3341, %v3449
      %v3451 = vpop.f32.mrb[0].mxu0
      %v3452 = vpop.f32.mrb[0].mxu0
      %v3453 = vadd.f32 %v3341, %v3452
      %v3454 = vpop.f32.mrb[0].mxu0
      %3455 = vmatprep.mubr.bf16.mxu0 0
      %3456 = vmatmul.mubr.bf16.gmra.mrb[0].mxu0 %v3316
      %v3457 = vpop.f32.mrb[0].mxu0
      %v3458 = vadd.f32 %v3341, %v3457
      %v3459 = vpop.f32.mrb[0].mxu0
      %v3460 = vpop.f32.mrb[0].mxu0
      %v3461 = vadd.f32 %v3341, %v3460
      %v3462 = vpop.f32.mrb[0].mxu0
      %3463 = vmatprep.mubr.bf16.mxu0 0
      %3464 = vmatmul.mubr.bf16.gmra.mrb[0].mxu0 %v3317
      %v3465 = vpop.f32.mrb[0].mxu0
      %v3466 = vadd.f32 %v3341, %v3465
      %v3467 = vpop.f32.mrb[0].mxu0
      %v3468 = vpop.f32.mrb[0].mxu0
      %v3469 = vadd.f32 %v3341, %v3468
      %v3470 = vpop.f32.mrb[0].mxu0
      %3471 = vmatprep.mubr.bf16.mxu0 0
      %3472 = vmatmul.mubr.bf16.gmra.mrb[0].mxu0 %v3318
      %v3473 = vpop.f32.mrb[0].mxu0
      %v3474 = vadd.f32 %v3341, %v3473
      %v3475 = vpop.f32.mrb[0].mxu0
      %v3476 = vpop.f32.mrb[0].mxu0
      %v3477 = vadd.f32 %v3341, %v3476
      %v3478 = vpop.f32.mrb[0].mxu0
      %3479 = vmatprep.mubr.bf16.mxu0 0
      %3480 = vmatmul.mubr.bf16.gmra.mrb[0].mxu0 %v3319
      %v3481 = vpop.f32.mrb[0].mxu0
      %v3482 = vadd.f32 %v3341, %v3481
      %v3483 = vpop.f32.mrb[0].mxu0
      %v3484 = vpop.f32.mrb[0].mxu0
      %v3485 = vadd.f32 %v3341, %v3484
      %v3486 = vpop.f32.mrb[0].mxu0
      %3487 = vdwg.mxu0
      %3488 = vxpose.xlu0.b32.start [1/16] %v3426, 128
      %3489 = vxpose.xlu0.b32.cont [2/16] %v3429, 128
      %3490 = vxpose.xlu0.b32.cont [3/16] %v3434, 128
      %3491 = vxpose.xlu0.b32.cont [4/16] %v3437, 128
      %3492 = vxpose.xlu0.b32.cont [5/16] %v3442, 128
      %3493 = vxpose.xlu0.b32.cont [6/16] %v3445, 128
      %3494 = vxpose.xlu0.b32.cont [7/16] %v3450, 128
      %3495 = vxpose.xlu0.b32.cont [8/16] %v3453, 128
      %3496 = vxpose.xlu0.b32.cont [9/16] 0.0, 128
      %3497 = vxpose.xlu0.b32.cont [10/16] 0.0, 128
      %3498 = vxpose.xlu0.b32.cont [11/16] 0.0, 128
      %3499 = vxpose.xlu0.b32.cont [12/16] 0.0, 128
      %3500 = vxpose.xlu0.b32.cont [13/16] 0.0, 128
      %3501 = vxpose.xlu0.b32.cont [14/16] 0.0, 128
      %3502 = vxpose.xlu0.b32.cont [15/16] 0.0, 128
      %3503 = vxpose.xlu0.b32.end [16/16] 0.0, 128
      %v3504 = vpop.trf.xlu0
      %v3505 = vpop.trf.xlu0
      %v3506 = vpop.trf.xlu0
      %v3507 = vpop.trf.xlu0
      %v3508 = vpop.trf.xlu0
      %v3509 = vpop.trf.xlu0
      %v3510 = vpop.trf.xlu0
      %v3511 = vpop.trf.xlu0
      %v3512 = vpop.trf.xlu0
      %v3513 = vpop.trf.xlu0
      %v3514 = vpop.trf.xlu0
      %v3515 = vpop.trf.xlu0
      %v3516 = vpop.trf.xlu0
      %v3517 = vpop.trf.xlu0
      %v3518 = vpop.trf.xlu0
      %v3519 = vpop.trf.xlu0
      %3520 = vxpose.xlu0.b32.start [1/16] %v3458, 128
      %3521 = vxpose.xlu0.b32.cont [2/16] %v3461, 128
      %3522 = vxpose.xlu0.b32.cont [3/16] %v3466, 128
      %3523 = vxpose.xlu0.b32.cont [4/16] %v3469, 128
      %3524 = vxpose.xlu0.b32.cont [5/16] %v3474, 128
      %3525 = vxpose.xlu0.b32.cont [6/16] %v3477, 128
      %3526 = vxpose.xlu0.b32.cont [7/16] %v3482, 128
      %3527 = vxpose.xlu0.b32.cont [8/16] %v3485, 128
      %3528 = vxpose.xlu0.b32.cont [9/16] 0.0, 128
      %3529 = vxpose.xlu0.b32.cont [10/16] 0.0, 128
      %3530 = vxpose.xlu0.b32.cont [11/16] 0.0, 128
      %3531 = vxpose.xlu0.b32.cont [12/16] 0.0, 128
      %3532 = vxpose.xlu0.b32.cont [13/16] 0.0, 128
      %3533 = vxpose.xlu0.b32.cont [14/16] 0.0, 128
      %3534 = vxpose.xlu0.b32.cont [15/16] 0.0, 128
      %3535 = vxpose.xlu0.b32.end [16/16] 0.0, 128
      %v3536 = vpop.trf.xlu0
      %v3537 = vpop.trf.xlu0
      %v3538 = vpop.trf.xlu0
      %v3539 = vpop.trf.xlu0
      %v3540 = vpop.trf.xlu0
      %v3541 = vpop.trf.xlu0
      %v3542 = vpop.trf.xlu0
      %v3543 = vpop.trf.xlu0
      %v3544 = vpop.trf.xlu0
      %v3545 = vpop.trf.xlu0
      %v3546 = vpop.trf.xlu0
      %v3547 = vpop.trf.xlu0
      %v3548 = vpop.trf.xlu0
      %v3549 = vpop.trf.xlu0
      %v3550 = vpop.trf.xlu0
      %v3551 = vpop.trf.xlu0
      %3552 = vst.msk [vmem:[%s231] sm:$0xff] %vm1718, %v3504
      %3553 = vst.msk [vmem:[%s231 + $0x8] sm:$0xff] %vm1718, %v3505
      %3554 = vst.msk [vmem:[%s231 + $0x10] sm:$0xff] %vm1718, %v3506
      %3555 = vst.msk [vmem:[%s231 + $0x18] sm:$0xff] %vm1718, %v3507
      %3556 = vst.msk [vmem:[%s231 + $0x20] sm:$0xff] %vm1718, %v3508
      %3557 = vst.msk [vmem:[%s231 + $0x28] sm:$0xff] %vm1718, %v3509
      %3558 = vst.msk [vmem:[%s231 + $0x30] sm:$0xff] %vm1718, %v3510
      %3559 = vst.msk [vmem:[%s231 + $0x38] sm:$0xff] %vm1718, %v3511
      %3560 = vst.msk [vmem:[%s231 + $0x40] sm:$0xff] %vm1718, %v3512
      %3561 = vst.msk [vmem:[%s231 + $0x48] sm:$0xff] %vm1718, %v3513
      %3562 = vst.msk [vmem:[%s231 + $0x50] sm:$0xff] %vm1718, %v3514
      %3563 = vst.msk [vmem:[%s231 + $0x58] sm:$0xff] %vm1718, %v3515
      %3564 = vst.msk [vmem:[%s231 + $0x60] sm:$0xff] %vm1718, %v3516
      %3565 = vst.msk [vmem:[%s231 + $0x68] sm:$0xff] %vm1718, %v3517
      %3566 = vst.msk [vmem:[%s231 + $0x70] sm:$0xff] %vm1718, %v3518
      %3567 = vst.msk [vmem:[%s231 + $0x78] sm:$0xff] %vm1718, %v3519
      %3568 = vst.msk [vmem:[%s231 + $0x80] sm:$0xff] %vm1718, %v3536
      %3569 = vst.msk [vmem:[%s231 + $0x88] sm:$0xff] %vm1718, %v3537
      %3570 = vst.msk [vmem:[%s231 + $0x90] sm:$0xff] %vm1718, %v3538
      %3571 = vst.msk [vmem:[%s231 + $0x98] sm:$0xff] %vm1718, %v3539
      %3572 = vst.msk [vmem:[%s231 + $0xa0] sm:$0xff] %vm1718, %v3540
      %3573 = vst.msk [vmem:[%s231 + $0xa8] sm:$0xff] %vm1718, %v3541
      %3574 = vst.msk [vmem:[%s231 + $0xb0] sm:$0xff] %vm1718, %v3542
      %3575 = vst.msk [vmem:[%s231 + $0xb8] sm:$0xff] %vm1718, %v3543
      %3576 = vst.msk [vmem:[%s231 + $0xc0] sm:$0xff] %vm1718, %v3544
      %3577 = vst.msk [vmem:[%s231 + $0xc8] sm:$0xff] %vm1718, %v3545
      %3578 = vst.msk [vmem:[%s231 + $0xd0] sm:$0xff] %vm1718, %v3546
      %3579 = vst.msk [vmem:[%s231 + $0xd8] sm:$0xff] %vm1718, %v3547
      %3580 = vst.msk [vmem:[%s231 + $0xe0] sm:$0xff] %vm1718, %v3548
      %3581 = vst.msk [vmem:[%s231 + $0xe8] sm:$0xff] %vm1718, %v3549
      %3582 = vst.msk [vmem:[%s231 + $0xf0] sm:$0xff] %vm1718, %v3550
      %3583 = vst.msk [vmem:[%s231 + $0xf8] sm:$0xff] %vm1718, %v3551
      %s3584 = smul.u32 2, %s16
      %p3585 = scmp.lt.s32.totalorder %s3584, 3
      %s3586 = scalar_select %p3585, %s3584, 3
      %s3587 = smul.addr %s3586, 16
      %s3588 = smul.addr %s3587, 8
      %s3589 = scalar_lea.vmem %s5, %s3588
      // Predicated region
      $region41: #{tpu_custom_call.1} parent=39 // pred_check
        %p3590 = pneg %p144
      $region42: #{tpu_custom_call.1} parent=39 // pred_check_branch
        %3592 = sbr.rel (%p3590) target = $region44
      $region43: #{tpu_custom_call.1} parent=39 // pred_region
        %s3593 = smul.u32 2, %s16
      $region44: #{tpu_custom_call.1} parent=39 // pred_fallthru
        _
    $region40: #{tpu_custom_call.1} parent=5 // pred_fallthru
      _
    %p3594 = scmp.le.s32.totalorder 2, %s11
    // Predicated region
    $region45: #{tpu_custom_call.1} parent=5 // pred_check
      %p3595 = pneg %p3594
    $region46: #{tpu_custom_call.1} parent=5 // pred_check_branch
      %3597 = sbr.rel (%p3595) target = $region48
    $region47: #{tpu_custom_call.1} parent=5 // pred_region
      %s3598 = ssub.s32 %s11, 2
      // Predicated region
      $region49: #{tpu_custom_call.1} parent=47 // pred_check
        %p3599 = pneg %p150
      $region50: #{tpu_custom_call.1} parent=47 // pred_check_branch
        %3601 = sbr.rel (%p3599) target = $region52
      $region51: #{tpu_custom_call.1} parent=47 // pred_region
        %s3602 = smul.u32 2, %s17
        %p3603 = scmp.lt.s32.totalorder %s3602, 3
        %s3604 = scalar_select %p3603, %s3602, 3
        %s3605 = smul.addr %s3604, 16
        %s3606 = smul.addr %s3605, 8
        %s3607 = scalar_lea.vmem %s5, %s3606
      $region52: #{tpu_custom_call.1} parent=47 // pred_fallthru
        _
    $region48: #{tpu_custom_call.1} parent=5 // pred_fallthru
      _
  $region6: #{tpu_custom_call.1} parent=0 // loop_footer
    %s15 = sadd.s32 1, %s11
  $region7: #{tpu_custom_call.1} parent=0 // loop_footer_branch
    %10 = sbr.rel target = $region3
  $region8: #{tpu_custom_call.1} parent=0 // loop_exit
    _

</llo_original>
